<compile_context>
chip_gen: v5e
topology: v5e:2x2
jax: 0.10.0
libtpu: 0.0.40
codegen_flags: <defaults>
</compile_context>

<pallas_src>
import functools
import math

import jax
import jax.numpy as jnp
from jax import lax
from jax.experimental import pallas as pl
from jax.experimental.pallas import tpu as pltpu

_BN_EPS = 1e-5


# ---------------------------------------------------------------------------
# Pallas kernels
# ---------------------------------------------------------------------------
def _bn_relu_kernel(x_ref, scale_ref, bias_ref, o_ref):
    # x_ref: (1, C, HW); scale/bias: (C, 1) broadcast over lanes.
    o_ref[0] = jnp.maximum(x_ref[0] * scale_ref[...] + bias_ref[...],
                           0.0).astype(o_ref.dtype)


def _bn_relu_se_kernel(x_ref, scale_ref, bias_ref, w1t_ref, w2_ref, o_ref, *,
                       inv_hw):
    """Fused BN-affine + ReLU + global-avg-pool + SE MLP + channel scale.

    One grid step per batch element; the whole (C, HW) activation stays in
    VMEM/vregs, so y hits HBM exactly once (already scaled).  The excitation
    MLP runs on VPU/XLU only (broadcast multiplies + sublane/lane reductions),
    keeping the MXU out of this tiny, memory-bound path.
    """
    y = jnp.maximum(x_ref[0] * scale_ref[...] + bias_ref[...], 0.0)   # (C, HW)
    pooled = jnp.sum(y.astype(jnp.float32), axis=-1,
                     keepdims=True) * inv_hw                          # (C, 1)
    # h[j] = relu(sum_c W1[j, c] * pooled[c])   (W1 carried transposed: (C, cr))
    h = jnp.maximum(
        jnp.sum(w1t_ref[...] * pooled, axis=0, keepdims=True), 0.0)   # (1, cr)
    # s[c] = sigmoid(sum_j W2[c, j] * h[j])
    s = jax.nn.sigmoid(
        jnp.sum(w2_ref[...] * h, axis=-1, keepdims=True))             # (C, 1)
    o_ref[0] = (y * s.astype(y.dtype)).astype(o_ref.dtype)


def _pointwise_conv_kernel(x_ref, w_ref, b_ref, o_ref, *, cout, cin):
    """1x1 conv (+bias) as Cin broadcast-FMA VPU ops per output channel.

    w_ref (Cout, Cin) and b_ref (Cout,) live in SMEM; each w_ref[o, i] is a
    scalar multiplied against a (1, HW) row — no MXU involved.
    """
    x = x_ref[0].astype(jnp.float32)                                  # (Cin, HW)
    hw = x.shape[-1]
    rows = []
    for o in range(cout):
        acc = jnp.zeros((1, hw), jnp.float32)
        for i in range(cin):
            acc = acc + w_ref[o, i] * x[i:i + 1, :]
        rows.append(acc + b_ref[o])
    o_ref[0] = jnp.concatenate(rows, axis=0).astype(o_ref.dtype)


# ---------------------------------------------------------------------------
# Pallas wrappers (grid=(B,), full-HW blocks, no padding / slicing)
# ---------------------------------------------------------------------------
def bn_relu_pallas(x, scale, bias):
    B, C, H, W = x.shape
    hw = H * W
    xf = x.reshape(B, C, hw)                  # merges trailing dims (no copy)
    s2 = scale.astype(x.dtype).reshape(C, 1)
    b2 = bias.astype(x.dtype).reshape(C, 1)
    out = pl.pallas_call(
        _bn_relu_kernel,
        out_shape=jax.ShapeDtypeStruct((B, C, hw), x.dtype),
        grid_spec=pltpu.PrefetchScalarGridSpec(
            num_scalar_prefetch=0,
            grid=(B,),
            in_specs=[
                pl.BlockSpec((1, C, hw), lambda b: (b, 0, 0)),
                pl.BlockSpec((C, 1), lambda b: (0, 0)),
                pl.BlockSpec((C, 1), lambda b: (0, 0)),
            ],
            out_specs=pl.BlockSpec((1, C, hw), lambda b: (b, 0, 0)),
        ),
        compiler_params=pltpu.CompilerParams(
            dimension_semantics=("parallel",)),
    )(xf, s2, b2)
    return out.reshape(B, C, H, W)


def bn_relu_se_pallas(x, scale, bias, w1, w2):
    """Fused BN2 + ReLU + Squeeze-Excite (pool, MLP, sigmoid, channel scale)."""
    B, C, H, W = x.shape
    hw = H * W
    xf = x.reshape(B, C, hw)
    cr = w1.shape[0]
    s2 = scale.astype(x.dtype).reshape(C, 1)
    b2 = bias.astype(x.dtype).reshape(C, 1)
    w1t = jnp.transpose(w1).astype(jnp.float32)          # (C, cr)
    w2f = w2.astype(jnp.float32)                         # (C, cr)
    kernel = functools.partial(_bn_relu_se_kernel, inv_hw=1.0 / hw)
    out = pl.pallas_call(
        kernel,
        out_shape=jax.ShapeDtypeStruct((B, C, hw), x.dtype),
        grid_spec=pltpu.PrefetchScalarGridSpec(
            num_scalar_prefetch=0,
            grid=(B,),
            in_specs=[
                pl.BlockSpec((1, C, hw), lambda b: (b, 0, 0)),
                pl.BlockSpec((C, 1), lambda b: (0, 0)),
                pl.BlockSpec((C, 1), lambda b: (0, 0)),
                pl.BlockSpec((C, cr), lambda b: (0, 0)),
                pl.BlockSpec((C, cr), lambda b: (0, 0)),
            ],
            out_specs=pl.BlockSpec((1, C, hw), lambda b: (b, 0, 0)),
        ),
        compiler_params=pltpu.CompilerParams(
            dimension_semantics=("parallel",)),
    )(xf, s2, b2, w1t, w2f)
    return out.reshape(B, C, H, W)


def pointwise_conv_pallas(x, w, b):
    """1x1 conv with bias: w (Cout, Cin), b (Cout,)."""
    B, Cin, H, W = x.shape
    Cout = w.shape[0]
    hw = H * W
    xf = x.reshape(B, Cin, hw)
    kernel = functools.partial(_pointwise_conv_kernel, cout=Cout, cin=Cin)
    out = pl.pallas_call(
        kernel,
        out_shape=jax.ShapeDtypeStruct((B, Cout, hw), x.dtype),
        grid_spec=pltpu.PrefetchScalarGridSpec(
            num_scalar_prefetch=0,
            grid=(B,),
            in_specs=[
                pl.BlockSpec((1, Cin, hw), lambda bi: (bi, 0, 0)),
                pl.BlockSpec(memory_space=pltpu.MemorySpace.SMEM),
                pl.BlockSpec(memory_space=pltpu.MemorySpace.SMEM),
            ],
            out_specs=pl.BlockSpec((1, Cout, hw), lambda bi: (bi, 0, 0)),
        ),
        compiler_params=pltpu.CompilerParams(
            dimension_semantics=("parallel",)),
    )(xf, w.astype(jnp.float32), b.astype(jnp.float32))
    return out.reshape(B, Cout, H, W)


# ---------------------------------------------------------------------------
# XLA building blocks (conv / pool / upsample / concat)
# ---------------------------------------------------------------------------
_CONV_DN = ('NCHW', 'OIHW', 'NCHW')


def conv3x3(x, w, b):
    y = lax.conv_general_dilated(x, w, (1, 1), ((1, 1), (1, 1)),
                                 dimension_numbers=_CONV_DN)
    return y + b[None, :, None, None]


def maxpool2x2(x):
    return lax.reduce_window(x, -jnp.inf, lax.max,
                             (1, 1, 2, 2), (1, 1, 2, 2), 'VALID')


def upsample2x_bilinear_align_corners(x):
    B, C, H, W = x.shape

    def axis_coords(n_in, n_out):
        if n_in == 1:
            lo = jnp.zeros((n_out,), jnp.int32)
            return lo, lo, jnp.zeros((n_out,), jnp.float32)
        pos = jnp.arange(n_out, dtype=jnp.float32) * ((n_in - 1) / (n_out - 1))
        lo = jnp.clip(jnp.floor(pos).astype(jnp.int32), 0, n_in - 2)
        return lo, lo + 1, pos - lo.astype(jnp.float32)

    h_lo, h_hi, h_f = axis_coords(H, 2 * H)
    w_lo, w_hi, w_f = axis_coords(W, 2 * W)
    rows = (x[:, :, h_lo, :] * (1.0 - h_f)[None, None, :, None]
            + x[:, :, h_hi, :] * h_f[None, None, :, None])
    out = (rows[:, :, :, w_lo] * (1.0 - w_f)[None, None, None, :]
           + rows[:, :, :, w_hi] * w_f[None, None, None, :])
    return out.astype(x.dtype)


# ---------------------------------------------------------------------------
# VGGBlock (conv-bn-relu x2 + Squeeze-Excite)
# ---------------------------------------------------------------------------
def vgg_block_pallas(x, p):
    y = conv3x3(x, p['conv1_w'], p['conv1_b'])
    y = bn_relu_pallas(y, p['bn1_scale'], p['bn1_bias'])
    y = conv3x3(y, p['conv2_w'], p['conv2_b'])
    # Single fused kernel: BN2 + ReLU + avg-pool + SE MLP + channel scale.
    return bn_relu_se_pallas(y, p['bn2_scale'], p['bn2_bias'],
                             p['se_w1'], p['se_w2'])


def vgg_block_ref(x, p):
    y = conv3x3(x, p['conv1_w'], p['conv1_b'])
    y = jnp.maximum(y * p['bn1_scale'][None, :, None, None]
                    + p['bn1_bias'][None, :, None, None], 0.0)
    y = conv3x3(y, p['conv2_w'], p['conv2_b'])
    y = jnp.maximum(y * p['bn2_scale'][None, :, None, None]
                    + p['bn2_bias'][None, :, None, None], 0.0)
    pooled = jnp.mean(y, axis=(2, 3))
    h = jnp.maximum(pooled @ p['se_w1'].T, 0.0)
    s = jax.nn.sigmoid(h @ p['se_w2'].T)
    return y * s[:, :, None, None]


def final_pallas(x, w, b):
    return pointwise_conv_pallas(x, w, b)


def final_ref(x, w, b):
    return jnp.einsum('bchw,oc->bohw', x, w) + b[None, :, None, None]


# ---------------------------------------------------------------------------
# NestedUNet forward (deep_supervision=False)
# ---------------------------------------------------------------------------
def nested_unet(x, params, vgg_fn, final_fn):
    up = upsample2x_bilinear_align_corners
    cat = lambda xs: jnp.concatenate(xs, axis=1)
    p = params

    x0_0 = vgg_fn(x, p['conv0_0'])
    x1_0 = vgg_fn(maxpool2x2(x0_0), p['conv1_0'])
    x0_1 = vgg_fn(cat([x0_0, up(x1_0)]), p['conv0_1'])

    x2_0 = vgg_fn(maxpool2x2(x1_0), p['conv2_0'])
    x1_1 = vgg_fn(cat([x1_0, up(x2_0)]), p['conv1_1'])
    x0_2 = vgg_fn(cat([x0_0, x0_1, up(x1_1)]), p['conv0_2'])

    x3_0 = vgg_fn(maxpool2x2(x2_0), p['conv3_0'])
    x2_1 = vgg_fn(cat([x2_0, up(x3_0)]), p['conv2_1'])
    x1_2 = vgg_fn(cat([x1_0, x1_1, up(x2_1)]), p['conv1_2'])
    x0_3 = vgg_fn(cat([x0_0, x0_1, x0_2, up(x1_2)]), p['conv0_3'])

    x4_0 = vgg_fn(maxpool2x2(x3_0), p['conv4_0'])
    x3_1 = vgg_fn(cat([x3_0, up(x4_0)]), p['conv3_1'])
    x2_2 = vgg_fn(cat([x2_0, x2_1, up(x3_1)]), p['conv2_2'])
    x1_3 = vgg_fn(cat([x1_0, x1_1, x1_2, up(x2_2)]), p['conv1_3'])
    x0_4 = vgg_fn(cat([x0_0, x0_1, x0_2, x0_3, up(x1_3)]), p['conv0_4'])

    return final_fn(x0_4, p['final_w'], p['final_b'])


# ---------------------------------------------------------------------------
# Parameter construction (deterministic)
# ---------------------------------------------------------------------------
def _init_vgg(key, cin, cmid, cout, reduction=8):
    ks = jax.random.split(key, 14)
    cr = max(cout // reduction, 1)

    def bn(k4, c):
        kg, kb, km, kv = k4
        gamma = 1.0 + 0.1 * jax.random.normal(kg, (c,), jnp.float32)
        beta = 0.1 * jax.random.normal(kb, (c,), jnp.float32)
        mean = 0.1 * jax.random.normal(km, (c,), jnp.float32)
        var = jax.random.uniform(kv, (c,), jnp.float32, minval=0.5, maxval=1.5)
        scale = gamma * lax.rsqrt(var + _BN_EPS)
        return scale, beta - mean * scale

    bn1_scale, bn1_bias = bn(ks[2:6], cmid)
    bn2_scale, bn2_bias = bn(ks[8:12], cout)
    return dict(
        conv1_w=jax.random.normal(ks[0], (cmid, cin, 3, 3), jnp.float32)
        / math.sqrt(cin * 9.0),
        conv1_b=0.05 * jax.random.normal(ks[1], (cmid,), jnp.float32),
        bn1_scale=bn1_scale, bn1_bias=bn1_bias,
        conv2_w=jax.random.normal(ks[6], (cout, cmid, 3, 3), jnp.float32)
        / math.sqrt(cmid * 9.0),
        conv2_b=0.05 * jax.random.normal(ks[7], (cout,), jnp.float32),
        bn2_scale=bn2_scale, bn2_bias=bn2_bias,
        se_w1=jax.random.normal(ks[12], (cr, cout), jnp.float32) / math.sqrt(cout),
        se_w2=jax.random.normal(ks[13], (cout, cr), jnp.float32) / math.sqrt(cr),
    )


def init_params(key, in_ch, num_classes, nb):
    specs = {
        'conv0_0': (in_ch, nb[0], nb[0]),
        'conv1_0': (nb[0], nb[1], nb[1]),
        'conv2_0': (nb[1], nb[2], nb[2]),
        'conv3_0': (nb[2], nb[3], nb[3]),
        'conv4_0': (nb[3], nb[4], nb[4]),
        'conv0_1': (nb[0] + nb[1], nb[0], nb[0]),
        'conv1_1': (nb[1] + nb[2], nb[1], nb[1]),
        'conv2_1': (nb[2] + nb[3], nb[2], nb[2]),
        'conv3_1': (nb[3] + nb[4], nb[3], nb[3]),
        'conv0_2': (nb[0] * 2 + nb[1], nb[0], nb[0]),
        'conv1_2': (nb[1] * 2 + nb[2], nb[1], nb[1]),
        'conv2_2': (nb[2] * 2 + nb[3], nb[2], nb[2]),
        'conv0_3': (nb[0] * 3 + nb[1], nb[0], nb[0]),
        'conv1_3': (nb[1] * 3 + nb[2], nb[1], nb[1]),
        'conv0_4': (nb[0] * 4 + nb[1], nb[0], nb[0]),
    }
    keys = jax.random.split(key, len(specs) + 2)
    params = {}
    for k, (name, spec) in zip(keys[:len(specs)], sorted(specs.items())):
        params[name] = _init_vgg(k, *spec)
    params['final_w'] = (jax.random.normal(keys[-2], (num_classes, nb[0]),
                                           jnp.float32) / math.sqrt(nb[0]))
    params['final_b'] = 0.05 * jax.random.normal(keys[-1], (num_classes,),
                                                 jnp.float32)
    return params


# ---------------------------------------------------------------------------
if __name__ == "__main__":
    B, in_ch, H, W = 2, 3, 16, 16
    num_classes = 2
    nb_filter = [8, 16, 32, 32, 32]   # small, multiples of the SE reduction (8)

    root = jax.random.PRNGKey(0)
    kx, kp = jax.random.split(root)
    x = jax.random.normal(kx, (B, in_ch, H, W), jnp.float32)
    params = init_params(kp, in_ch, num_classes, nb_filter)

    fwd_pallas = jax.jit(functools.partial(nested_unet, vgg_fn=vgg_block_pallas,
                                           final_fn=final_pallas))
    fwd_ref = jax.jit(functools.partial(nested_unet, vgg_fn=vgg_block_ref,
                                        final_fn=final_ref))

    out = jax.block_until_ready(fwd_pallas(x, params))
    ref = jax.block_until_ready(fwd_ref(x, params))

    assert out.shape == (B, num_classes, H, W)
    assert bool(jnp.all(jnp.isfinite(out)))
    max_diff = float(jnp.max(jnp.abs(out - ref)))
    assert jnp.allclose(out, ref, atol=1e-3, rtol=1e-3), f"mismatch {max_diff}"

    print("KERNEL_OK")
</pallas_src>

<mosaic_0001>
module attributes {stable_mosaic.version = 11 : i64} {
  func.func @_bn_relu_kernel(%arg0: i32, %arg1: memref<1x8x256xf32, #tpu.memory_space<vmem>>, %arg2: memref<8x1xf32, #tpu.memory_space<vmem>>, %arg3: memref<8x1xf32, #tpu.memory_space<vmem>>, %arg4: memref<1x8x256xf32, #tpu.memory_space<vmem>>) attributes {dimension_semantics = [#tpu.dimension_semantics<parallel>], iteration_bounds = array<i64: 2>, scalar_prefetch = 0 : i64, scratch_operands = 0 : i64, tpu.core_type = #tpu.core_type<tc>, window_params = [{transform_indices = @transform_0, window_bounds = array<i64: 1, 8, 256>}, {pipeline_mode = #tpu.pipeline_mode<synchronous>, transform_indices = @transform_1, window_bounds = array<i64: 8, 1>}, {pipeline_mode = #tpu.pipeline_mode<synchronous>, transform_indices = @transform_2, window_bounds = array<i64: 8, 1>}, {transform_indices = @transform_3, window_bounds = array<i64: 1, 8, 256>}]} {
    %c0 = arith.constant 0 : index
    %c0_0 = arith.constant 0 : index
    %c0_1 = arith.constant 0 : index
    %0 = vector.load %arg1[%c0, %c0_0, %c0_1] : memref<1x8x256xf32, #tpu.memory_space<vmem>>, vector<1x8x256xf32>
    %1 = vector.shape_cast %0 : vector<1x8x256xf32> to vector<8x256xf32>
    %c0_2 = arith.constant 0 : index
    %c0_3 = arith.constant 0 : index
    %2 = vector.load %arg2[%c0_2, %c0_3] : memref<8x1xf32, #tpu.memory_space<vmem>>, vector<8x1xf32>
    %3 = vector.broadcast %2 : vector<8x1xf32> to vector<8x256xf32>
    %4 = arith.mulf %1, %3 : vector<8x256xf32>
    %c0_4 = arith.constant 0 : index
    %c0_5 = arith.constant 0 : index
    %5 = vector.load %arg3[%c0_4, %c0_5] : memref<8x1xf32, #tpu.memory_space<vmem>>, vector<8x1xf32>
    %6 = vector.broadcast %5 : vector<8x1xf32> to vector<8x256xf32>
    %7 = arith.addf %4, %6 : vector<8x256xf32>
    %cst = arith.constant 0.000000e+00 : f32
    %8 = vector.broadcast %cst : f32 to vector<8x256xf32>
    %9 = arith.maximumf %7, %8 : vector<8x256xf32>
    %c0_6 = arith.constant 0 : index
    %c0_7 = arith.constant 0 : index
    %c0_8 = arith.constant 0 : index
    %10 = vector.load %arg4[%c0_6, %c0_7, %c0_8] : memref<1x8x256xf32, #tpu.memory_space<vmem>>, vector<1x8x256xf32>
    %11 = vector.shape_cast %10 : vector<1x8x256xf32> to vector<8x256xf32>
    %12 = vector.shape_cast %9 : vector<8x256xf32> to vector<1x8x256xf32>
    tpu.vector_store %arg4[%c0_6, %c0_7, %c0_8], %12 {strides = array<i32>} : memref<1x8x256xf32, #tpu.memory_space<vmem>>, vector<1x8x256xf32>,
    return
  }
  func.func @transform_0(%arg0: i32) -> (i32, i32, i32) {
    %c0_i32 = arith.constant 0 : i32
    %c0_i32_0 = arith.constant 0 : i32
    %c0_i32_1 = arith.constant 0 : i32
    return %arg0, %c0_i32, %c0_i32_0 : i32, i32, i32
  }
  func.func @transform_1(%arg0: i32) -> (i32, i32) {
    %c0_i32 = arith.constant 0 : i32
    %c0_i32_0 = arith.constant 0 : i32
    %c0_i32_1 = arith.constant 0 : i32
    return %c0_i32, %c0_i32_0 : i32, i32
  }
  func.func @transform_2(%arg0: i32) -> (i32, i32) {
    %c0_i32 = arith.constant 0 : i32
    %c0_i32_0 = arith.constant 0 : i32
    %c0_i32_1 = arith.constant 0 : i32
    return %c0_i32, %c0_i32_0 : i32, i32
  }
  func.func @transform_3(%arg0: i32) -> (i32, i32, i32) {
    %c0_i32 = arith.constant 0 : i32
    %c0_i32_0 = arith.constant 0 : i32
    %c0_i32_1 = arith.constant 0 : i32
    return %arg0, %c0_i32, %c0_i32_0 : i32, i32, i32
  }
}

module attributes {stable_mosaic.version = 11 : i64} {
  func.func @_bn_relu_se_kernel(%arg0: i32, %arg1: memref<1x8x256xf32, #tpu.memory_space<vmem>>, %arg2: memref<8x1xf32, #tpu.memory_space<vmem>>, %arg3: memref<8x1xf32, #tpu.memory_space<vmem>>, %arg4: memref<8x1xf32, #tpu.memory_space<vmem>>, %arg5: memref<8x1xf32, #tpu.memory_space<vmem>>, %arg6: memref<1x8x256xf32, #tpu.memory_space<vmem>>) attributes {dimension_semantics = [#tpu.dimension_semantics<parallel>], iteration_bounds = array<i64: 2>, scalar_prefetch = 0 : i64, scratch_operands = 0 : i64, tpu.core_type = #tpu.core_type<tc>, window_params = [{transform_indices = @transform_0, window_bounds = array<i64: 1, 8, 256>}, {pipeline_mode = #tpu.pipeline_mode<synchronous>, transform_indices = @transform_1, window_bounds = array<i64: 8, 1>}, {pipeline_mode = #tpu.pipeline_mode<synchronous>, transform_indices = @transform_2, window_bounds = array<i64: 8, 1>}, {pipeline_mode = #tpu.pipeline_mode<synchronous>, transform_indices = @transform_3, window_bounds = array<i64: 8, 1>}, {pipeline_mode = #tpu.pipeline_mode<synchronous>, transform_indices = @transform_4, window_bounds = array<i64: 8, 1>}, {transform_indices = @transform_5, window_bounds = array<i64: 1, 8, 256>}]} {
    %c0 = arith.constant 0 : index
    %c0_0 = arith.constant 0 : index
    %c0_1 = arith.constant 0 : index
    %0 = vector.load %arg1[%c0, %c0_0, %c0_1] : memref<1x8x256xf32, #tpu.memory_space<vmem>>, vector<1x8x256xf32>
    %1 = vector.shape_cast %0 : vector<1x8x256xf32> to vector<8x256xf32>
    %c0_2 = arith.constant 0 : index
    %c0_3 = arith.constant 0 : index
    %2 = vector.load %arg2[%c0_2, %c0_3] : memref<8x1xf32, #tpu.memory_space<vmem>>, vector<8x1xf32>
    %3 = vector.broadcast %2 : vector<8x1xf32> to vector<8x256xf32>
    %4 = arith.mulf %1, %3 : vector<8x256xf32>
    %c0_4 = arith.constant 0 : index
    %c0_5 = arith.constant 0 : index
    %5 = vector.load %arg3[%c0_4, %c0_5] : memref<8x1xf32, #tpu.memory_space<vmem>>, vector<8x1xf32>
    %6 = vector.broadcast %5 : vector<8x1xf32> to vector<8x256xf32>
    %7 = arith.addf %4, %6 : vector<8x256xf32>
    %cst = arith.constant 0.000000e+00 : f32
    %8 = vector.broadcast %cst : f32 to vector<8x256xf32>
    %9 = arith.maximumf %7, %8 : vector<8x256xf32>
    %cst_6 = arith.constant dense<0.000000e+00> : vector<8xf32>
    %10 = vector.multi_reduction <add>, %9, %cst_6 [1] : vector<8x256xf32> to vector<8xf32>
    %11 = vector.shape_cast %10 : vector<8xf32> to vector<8x1xf32>
    %cst_7 = arith.constant 3.906250e-03 : f32
    %12 = vector.broadcast %cst_7 : f32 to vector<8x1xf32>
    %13 = arith.mulf %11, %12 : vector<8x1xf32>
    %c0_8 = arith.constant 0 : index
    %c0_9 = arith.constant 0 : index
    %14 = vector.load %arg4[%c0_8, %c0_9] : memref<8x1xf32, #tpu.memory_space<vmem>>, vector<8x1xf32>
    %15 = arith.mulf %14, %13 : vector<8x1xf32>
    %cst_10 = arith.constant dense<0.000000e+00> : vector<1xf32>
    %16 = vector.multi_reduction <add>, %15, %cst_10 [0] : vector<8x1xf32> to vector<1xf32>
    %17 = vector.shape_cast %16 : vector<1xf32> to vector<1x1xf32>
    %cst_11 = arith.constant 0.000000e+00 : f32
    %18 = vector.broadcast %cst_11 : f32 to vector<1x1xf32>
    %19 = arith.maximumf %17, %18 : vector<1x1xf32>
    %c0_12 = arith.constant 0 : index
    %c0_13 = arith.constant 0 : index
    %20 = vector.load %arg5[%c0_12, %c0_13] : memref<8x1xf32, #tpu.memory_space<vmem>>, vector<8x1xf32>
    %21 = vector.broadcast %19 : vector<1x1xf32> to vector<8x1xf32>
    %22 = arith.mulf %20, %21 : vector<8x1xf32>
    %cst_14 = arith.constant dense<0.000000e+00> : vector<8xf32>
    %23 = vector.multi_reduction <add>, %22, %cst_14 [1] : vector<8x1xf32> to vector<8xf32>
    %24 = vector.shape_cast %23 : vector<8xf32> to vector<8x1xf32>
    %25 = arith.negf %24 : vector<8x1xf32>
    %26 = math.exp %25 : vector<8x1xf32>
    %cst_15 = arith.constant 1.000000e+00 : f32
    %27 = vector.broadcast %cst_15 : f32 to vector<8x1xf32>
    %28 = arith.addf %27, %26 : vector<8x1xf32>
    %29 = arith.divf %27, %28 : vector<8x1xf32>
    %30 = vector.broadcast %29 : vector<8x1xf32> to vector<8x256xf32>
    %31 = arith.mulf %9, %30 : vector<8x256xf32>
    %c0_16 = arith.constant 0 : index
    %c0_17 = arith.constant 0 : index
    %c0_18 = arith.constant 0 : index
    %32 = vector.load %arg6[%c0_16, %c0_17, %c0_18] : memref<1x8x256xf32, #tpu.memory_space<vmem>>, vector<1x8x256xf32>
    %33 = vector.shape_cast %32 : vector<1x8x256xf32> to vector<8x256xf32>
    %34 = vector.shape_cast %31 : vector<8x256xf32> to vector<1x8x256xf32>
    tpu.vector_store %arg6[%c0_16, %c0_17, %c0_18], %34 {strides = array<i32>} : memref<1x8x256xf32, #tpu.memory_space<vmem>>, vector<1x8x256xf32>,
    return
  }
  func.func @transform_0(%arg0: i32) -> (i32, i32, i32) {
    %c0_i32 = arith.constant 0 : i32
    %c0_i32_0 = arith.constant 0 : i32
    %c0_i32_1 = arith.constant 0 : i32
    return %arg0, %c0_i32, %c0_i32_0 : i32, i32, i32
  }
  func.func @transform_1(%arg0: i32) -> (i32, i32) {
    %c0_i32 = arith.constant 0 : i32
    %c0_i32_0 = arith.constant 0 : i32
    %c0_i32_1 = arith.constant 0 : i32
    return %c0_i32, %c0_i32_0 : i32, i32
  }
  func.func @transform_2(%arg0: i32) -> (i32, i32) {
    %c0_i32 = arith.constant 0 : i32
    %c0_i32_0 = arith.constant 0 : i32
    %c0_i32_1 = arith.constant 0 : i32
    return %c0_i32, %c0_i32_0 : i32, i32
  }
  func.func @transform_3(%arg0: i32) -> (i32, i32) {
    %c0_i32 = arith.constant 0 : i32
    %c0_i32_0 = arith.constant 0 : i32
    %c0_i32_1 = arith.constant 0 : i32
    return %c0_i32, %c0_i32_0 : i32, i32
  }
  func.func @transform_4(%arg0: i32) -> (i32, i32) {
    %c0_i32 = arith.constant 0 : i32
    %c0_i32_0 = arith.constant 0 : i32
    %c0_i32_1 = arith.constant 0 : i32
    return %c0_i32, %c0_i32_0 : i32, i32
  }
  func.func @transform_5(%arg0: i32) -> (i32, i32, i32) {
    %c0_i32 = arith.constant 0 : i32
    %c0_i32_0 = arith.constant 0 : i32
    %c0_i32_1 = arith.constant 0 : i32
    return %arg0, %c0_i32, %c0_i32_0 : i32, i32, i32
  }
}

module attributes {stable_mosaic.version = 11 : i64} {
  func.func @_bn_relu_kernel(%arg0: i32, %arg1: memref<1x16x64xf32, #tpu.memory_space<vmem>>, %arg2: memref<16x1xf32, #tpu.memory_space<vmem>>, %arg3: memref<16x1xf32, #tpu.memory_space<vmem>>, %arg4: memref<1x16x64xf32, #tpu.memory_space<vmem>>) attributes {dimension_semantics = [#tpu.dimension_semantics<parallel>], iteration_bounds = array<i64: 2>, scalar_prefetch = 0 : i64, scratch_operands = 0 : i64, tpu.core_type = #tpu.core_type<tc>, window_params = [{transform_indices = @transform_0, window_bounds = array<i64: 1, 16, 64>}, {pipeline_mode = #tpu.pipeline_mode<synchronous>, transform_indices = @transform_1, window_bounds = array<i64: 16, 1>}, {pipeline_mode = #tpu.pipeline_mode<synchronous>, transform_indices = @transform_2, window_bounds = array<i64: 16, 1>}, {transform_indices = @transform_3, window_bounds = array<i64: 1, 16, 64>}]} {
    %c0 = arith.constant 0 : index
    %c0_0 = arith.constant 0 : index
    %c0_1 = arith.constant 0 : index
    %0 = vector.load %arg1[%c0, %c0_0, %c0_1] : memref<1x16x64xf32, #tpu.memory_space<vmem>>, vector<1x16x64xf32>
    %1 = vector.shape_cast %0 : vector<1x16x64xf32> to vector<16x64xf32>
    %c0_2 = arith.constant 0 : index
    %c0_3 = arith.constant 0 : index
    %2 = vector.load %arg2[%c0_2, %c0_3] : memref<16x1xf32, #tpu.memory_space<vmem>>, vector<16x1xf32>
    %3 = vector.broadcast %2 : vector<16x1xf32> to vector<16x64xf32>
    %4 = arith.mulf %1, %3 : vector<16x64xf32>
    %c0_4 = arith.constant 0 : index
    %c0_5 = arith.constant 0 : index
    %5 = vector.load %arg3[%c0_4, %c0_5] : memref<16x1xf32, #tpu.memory_space<vmem>>, vector<16x1xf32>
    %6 = vector.broadcast %5 : vector<16x1xf32> to vector<16x64xf32>
    %7 = arith.addf %4, %6 : vector<16x64xf32>
    %cst = arith.constant 0.000000e+00 : f32
    %8 = vector.broadcast %cst : f32 to vector<16x64xf32>
    %9 = arith.maximumf %7, %8 : vector<16x64xf32>
    %c0_6 = arith.constant 0 : index
    %c0_7 = arith.constant 0 : index
    %c0_8 = arith.constant 0 : index
    %10 = vector.load %arg4[%c0_6, %c0_7, %c0_8] : memref<1x16x64xf32, #tpu.memory_space<vmem>>, vector<1x16x64xf32>
    %11 = vector.shape_cast %10 : vector<1x16x64xf32> to vector<16x64xf32>
    %12 = vector.shape_cast %9 : vector<16x64xf32> to vector<1x16x64xf32>
    tpu.vector_store %arg4[%c0_6, %c0_7, %c0_8], %12 {strides = array<i32>} : memref<1x16x64xf32, #tpu.memory_space<vmem>>, vector<1x16x64xf32>,
    return
  }
  func.func @transform_0(%arg0: i32) -> (i32, i32, i32) {
    %c0_i32 = arith.constant 0 : i32
    %c0_i32_0 = arith.constant 0 : i32
    %c0_i32_1 = arith.constant 0 : i32
    return %arg0, %c0_i32, %c0_i32_0 : i32, i32, i32
  }
  func.func @transform_1(%arg0: i32) -> (i32, i32) {
    %c0_i32 = arith.constant 0 : i32
    %c0_i32_0 = arith.constant 0 : i32
    %c0_i32_1 = arith.constant 0 : i32
    return %c0_i32, %c0_i32_0 : i32, i32
  }
  func.func @transform_2(%arg0: i32) -> (i32, i32) {
    %c0_i32 = arith.constant 0 : i32
    %c0_i32_0 = arith.constant 0 : i32
    %c0_i32_1 = arith.constant 0 : i32
    return %c0_i32, %c0_i32_0 : i32, i32
  }
  func.func @transform_3(%arg0: i32) -> (i32, i32, i32) {
    %c0_i32 = arith.constant 0 : i32
    %c0_i32_0 = arith.constant 0 : i32
    %c0_i32_1 = arith.constant 0 : i32
    return %arg0, %c0_i32, %c0_i32_0 : i32, i32, i32
  }
}

module attributes {stable_mosaic.version = 11 : i64} {
  func.func @_bn_relu_se_kernel(%arg0: i32, %arg1: memref<1x16x64xf32, #tpu.memory_space<vmem>>, %arg2: memref<16x1xf32, #tpu.memory_space<vmem>>, %arg3: memref<16x1xf32, #tpu.memory_space<vmem>>, %arg4: memref<16x2xf32, #tpu.memory_space<vmem>>, %arg5: memref<16x2xf32, #tpu.memory_space<vmem>>, %arg6: memref<1x16x64xf32, #tpu.memory_space<vmem>>) attributes {dimension_semantics = [#tpu.dimension_semantics<parallel>], iteration_bounds = array<i64: 2>, scalar_prefetch = 0 : i64, scratch_operands = 0 : i64, tpu.core_type = #tpu.core_type<tc>, window_params = [{transform_indices = @transform_0, window_bounds = array<i64: 1, 16, 64>}, {pipeline_mode = #tpu.pipeline_mode<synchronous>, transform_indices = @transform_1, window_bounds = array<i64: 16, 1>}, {pipeline_mode = #tpu.pipeline_mode<synchronous>, transform_indices = @transform_2, window_bounds = array<i64: 16, 1>}, {pipeline_mode = #tpu.pipeline_mode<synchronous>, transform_indices = @transform_3, window_bounds = array<i64: 16, 2>}, {pipeline_mode = #tpu.pipeline_mode<synchronous>, transform_indices = @transform_4, window_bounds = array<i64: 16, 2>}, {transform_indices = @transform_5, window_bounds = array<i64: 1, 16, 64>}]} {
    %c0 = arith.constant 0 : index
    %c0_0 = arith.constant 0 : index
    %c0_1 = arith.constant 0 : index
    %0 = vector.load %arg1[%c0, %c0_0, %c0_1] : memref<1x16x64xf32, #tpu.memory_space<vmem>>, vector<1x16x64xf32>
    %1 = vector.shape_cast %0 : vector<1x16x64xf32> to vector<16x64xf32>
    %c0_2 = arith.constant 0 : index
    %c0_3 = arith.constant 0 : index
    %2 = vector.load %arg2[%c0_2, %c0_3] : memref<16x1xf32, #tpu.memory_space<vmem>>, vector<16x1xf32>
    %3 = vector.broadcast %2 : vector<16x1xf32> to vector<16x64xf32>
    %4 = arith.mulf %1, %3 : vector<16x64xf32>
    %c0_4 = arith.constant 0 : index
    %c0_5 = arith.constant 0 : index
    %5 = vector.load %arg3[%c0_4, %c0_5] : memref<16x1xf32, #tpu.memory_space<vmem>>, vector<16x1xf32>
    %6 = vector.broadcast %5 : vector<16x1xf32> to vector<16x64xf32>
    %7 = arith.addf %4, %6 : vector<16x64xf32>
    %cst = arith.constant 0.000000e+00 : f32
    %8 = vector.broadcast %cst : f32 to vector<16x64xf32>
    %9 = arith.maximumf %7, %8 : vector<16x64xf32>
    %cst_6 = arith.constant dense<0.000000e+00> : vector<16xf32>
    %10 = vector.multi_reduction <add>, %9, %cst_6 [1] : vector<16x64xf32> to vector<16xf32>
    %11 = vector.shape_cast %10 : vector<16xf32> to vector<16x1xf32>
    %cst_7 = arith.constant 1.562500e-02 : f32
    %12 = vector.broadcast %cst_7 : f32 to vector<16x1xf32>
    %13 = arith.mulf %11, %12 : vector<16x1xf32>
    %c0_8 = arith.constant 0 : index
    %c0_9 = arith.constant 0 : index
    %14 = vector.load %arg4[%c0_8, %c0_9] : memref<16x2xf32, #tpu.memory_space<vmem>>, vector<16x2xf32>
    %15 = vector.broadcast %13 : vector<16x1xf32> to vector<16x2xf32>
    %16 = arith.mulf %14, %15 : vector<16x2xf32>
    %cst_10 = arith.constant dense<0.000000e+00> : vector<2xf32>
    %17 = vector.multi_reduction <add>, %16, %cst_10 [0] : vector<16x2xf32> to vector<2xf32>
    %18 = vector.shape_cast %17 : vector<2xf32> to vector<1x2xf32>
    %cst_11 = arith.constant 0.000000e+00 : f32
    %19 = vector.broadcast %cst_11 : f32 to vector<1x2xf32>
    %20 = arith.maximumf %18, %19 : vector<1x2xf32>
    %c0_12 = arith.constant 0 : index
    %c0_13 = arith.constant 0 : index
    %21 = vector.load %arg5[%c0_12, %c0_13] : memref<16x2xf32, #tpu.memory_space<vmem>>, vector<16x2xf32>
    %22 = vector.broadcast %20 : vector<1x2xf32> to vector<16x2xf32>
    %23 = arith.mulf %21, %22 : vector<16x2xf32>
    %cst_14 = arith.constant dense<0.000000e+00> : vector<16xf32>
    %24 = vector.multi_reduction <add>, %23, %cst_14 [1] : vector<16x2xf32> to vector<16xf32>
    %25 = vector.shape_cast %24 : vector<16xf32> to vector<16x1xf32>
    %26 = arith.negf %25 : vector<16x1xf32>
    %27 = math.exp %26 : vector<16x1xf32>
    %cst_15 = arith.constant 1.000000e+00 : f32
    %28 = vector.broadcast %cst_15 : f32 to vector<16x1xf32>
    %29 = arith.addf %28, %27 : vector<16x1xf32>
    %30 = arith.divf %28, %29 : vector<16x1xf32>
    %31 = vector.broadcast %30 : vector<16x1xf32> to vector<16x64xf32>
    %32 = arith.mulf %9, %31 : vector<16x64xf32>
    %c0_16 = arith.constant 0 : index
    %c0_17 = arith.constant 0 : index
    %c0_18 = arith.constant 0 : index
    %33 = vector.load %arg6[%c0_16, %c0_17, %c0_18] : memref<1x16x64xf32, #tpu.memory_space<vmem>>, vector<1x16x64xf32>
    %34 = vector.shape_cast %33 : vector<1x16x64xf32> to vector<16x64xf32>
    %35 = vector.shape_cast %32 : vector<16x64xf32> to vector<1x16x64xf32>
    tpu.vector_store %arg6[%c0_16, %c0_17, %c0_18], %35 {strides = array<i32>} : memref<1x16x64xf32, #tpu.memory_space<vmem>>, vector<1x16x64xf32>,
    return
  }
  func.func @transform_0(%arg0: i32) -> (i32, i32, i32) {
    %c0_i32 = arith.constant 0 : i32
    %c0_i32_0 = arith.constant 0 : i32
    %c0_i32_1 = arith.constant 0 : i32
    return %arg0, %c0_i32, %c0_i32_0 : i32, i32, i32
  }
  func.func @transform_1(%arg0: i32) -> (i32, i32) {
    %c0_i32 = arith.constant 0 : i32
    %c0_i32_0 = arith.constant 0 : i32
    %c0_i32_1 = arith.constant 0 : i32
    return %c0_i32, %c0_i32_0 : i32, i32
  }
  func.func @transform_2(%arg0: i32) -> (i32, i32) {
    %c0_i32 = arith.constant 0 : i32
    %c0_i32_0 = arith.constant 0 : i32
    %c0_i32_1 = arith.constant 0 : i32
    return %c0_i32, %c0_i32_0 : i32, i32
  }
  func.func @transform_3(%arg0: i32) -> (i32, i32) {
    %c0_i32 = arith.constant 0 : i32
    %c0_i32_0 = arith.constant 0 : i32
    %c0_i32_1 = arith.constant 0 : i32
    return %c0_i32, %c0_i32_0 : i32, i32
  }
  func.func @transform_4(%arg0: i32) -> (i32, i32) {
    %c0_i32 = arith.constant 0 : i32
    %c0_i32_0 = arith.constant 0 : i32
    %c0_i32_1 = arith.constant 0 : i32
    return %c0_i32, %c0_i32_0 : i32, i32
  }
  func.func @transform_5(%arg0: i32) -> (i32, i32, i32) {
    %c0_i32 = arith.constant 0 : i32
    %c0_i32_0 = arith.constant 0 : i32
    %c0_i32_1 = arith.constant 0 : i32
    return %arg0, %c0_i32, %c0_i32_0 : i32, i32, i32
  }
}

module attributes {stable_mosaic.version = 11 : i64} {
  func.func @_bn_relu_kernel(%arg0: i32, %arg1: memref<1x32x16xf32, #tpu.memory_space<vmem>>, %arg2: memref<32x1xf32, #tpu.memory_space<vmem>>, %arg3: memref<32x1xf32, #tpu.memory_space<vmem>>, %arg4: memref<1x32x16xf32, #tpu.memory_space<vmem>>) attributes {dimension_semantics = [#tpu.dimension_semantics<parallel>], iteration_bounds = array<i64: 2>, scalar_prefetch = 0 : i64, scratch_operands = 0 : i64, tpu.core_type = #tpu.core_type<tc>, window_params = [{transform_indices = @transform_0, window_bounds = array<i64: 1, 32, 16>}, {pipeline_mode = #tpu.pipeline_mode<synchronous>, transform_indices = @transform_1, window_bounds = array<i64: 32, 1>}, {pipeline_mode = #tpu.pipeline_mode<synchronous>, transform_indices = @transform_2, window_bounds = array<i64: 32, 1>}, {transform_indices = @transform_3, window_bounds = array<i64: 1, 32, 16>}]} {
    %c0 = arith.constant 0 : index
    %c0_0 = arith.constant 0 : index
    %c0_1 = arith.constant 0 : index
    %0 = vector.load %arg1[%c0, %c0_0, %c0_1] : memref<1x32x16xf32, #tpu.memory_space<vmem>>, vector<1x32x16xf32>
    %1 = vector.shape_cast %0 : vector<1x32x16xf32> to vector<32x16xf32>
    %c0_2 = arith.constant 0 : index
    %c0_3 = arith.constant 0 : index
    %2 = vector.load %arg2[%c0_2, %c0_3] : memref<32x1xf32, #tpu.memory_space<vmem>>, vector<32x1xf32>
    %3 = vector.broadcast %2 : vector<32x1xf32> to vector<32x16xf32>
    %4 = arith.mulf %1, %3 : vector<32x16xf32>
    %c0_4 = arith.constant 0 : index
    %c0_5 = arith.constant 0 : index
    %5 = vector.load %arg3[%c0_4, %c0_5] : memref<32x1xf32, #tpu.memory_space<vmem>>, vector<32x1xf32>
    %6 = vector.broadcast %5 : vector<32x1xf32> to vector<32x16xf32>
    %7 = arith.addf %4, %6 : vector<32x16xf32>
    %cst = arith.constant 0.000000e+00 : f32
    %8 = vector.broadcast %cst : f32 to vector<32x16xf32>
    %9 = arith.maximumf %7, %8 : vector<32x16xf32>
    %c0_6 = arith.constant 0 : index
    %c0_7 = arith.constant 0 : index
    %c0_8 = arith.constant 0 : index
    %10 = vector.load %arg4[%c0_6, %c0_7, %c0_8] : memref<1x32x16xf32, #tpu.memory_space<vmem>>, vector<1x32x16xf32>
    %11 = vector.shape_cast %10 : vector<1x32x16xf32> to vector<32x16xf32>
    %12 = vector.shape_cast %9 : vector<32x16xf32> to vector<1x32x16xf32>
    tpu.vector_store %arg4[%c0_6, %c0_7, %c0_8], %12 {strides = array<i32>} : memref<1x32x16xf32, #tpu.memory_space<vmem>>, vector<1x32x16xf32>,
    return
  }
  func.func @transform_0(%arg0: i32) -> (i32, i32, i32) {
    %c0_i32 = arith.constant 0 : i32
    %c0_i32_0 = arith.constant 0 : i32
    %c0_i32_1 = arith.constant 0 : i32
    return %arg0, %c0_i32, %c0_i32_0 : i32, i32, i32
  }
  func.func @transform_1(%arg0: i32) -> (i32, i32) {
    %c0_i32 = arith.constant 0 : i32
    %c0_i32_0 = arith.constant 0 : i32
    %c0_i32_1 = arith.constant 0 : i32
    return %c0_i32, %c0_i32_0 : i32, i32
  }
  func.func @transform_2(%arg0: i32) -> (i32, i32) {
    %c0_i32 = arith.constant 0 : i32
    %c0_i32_0 = arith.constant 0 : i32
    %c0_i32_1 = arith.constant 0 : i32
    return %c0_i32, %c0_i32_0 : i32, i32
  }
  func.func @transform_3(%arg0: i32) -> (i32, i32, i32) {
    %c0_i32 = arith.constant 0 : i32
    %c0_i32_0 = arith.constant 0 : i32
    %c0_i32_1 = arith.constant 0 : i32
    return %arg0, %c0_i32, %c0_i32_0 : i32, i32, i32
  }
}

module attributes {stable_mosaic.version = 11 : i64} {
  func.func @_bn_relu_se_kernel(%arg0: i32, %arg1: memref<1x32x16xf32, #tpu.memory_space<vmem>>, %arg2: memref<32x1xf32, #tpu.memory_space<vmem>>, %arg3: memref<32x1xf32, #tpu.memory_space<vmem>>, %arg4: memref<32x4xf32, #tpu.memory_space<vmem>>, %arg5: memref<32x4xf32, #tpu.memory_space<vmem>>, %arg6: memref<1x32x16xf32, #tpu.memory_space<vmem>>) attributes {dimension_semantics = [#tpu.dimension_semantics<parallel>], iteration_bounds = array<i64: 2>, scalar_prefetch = 0 : i64, scratch_operands = 0 : i64, tpu.core_type = #tpu.core_type<tc>, window_params = [{transform_indices = @transform_0, window_bounds = array<i64: 1, 32, 16>}, {pipeline_mode = #tpu.pipeline_mode<synchronous>, transform_indices = @transform_1, window_bounds = array<i64: 32, 1>}, {pipeline_mode = #tpu.pipeline_mode<synchronous>, transform_indices = @transform_2, window_bounds = array<i64: 32, 1>}, {pipeline_mode = #tpu.pipeline_mode<synchronous>, transform_indices = @transform_3, window_bounds = array<i64: 32, 4>}, {pipeline_mode = #tpu.pipeline_mode<synchronous>, transform_indices = @transform_4, window_bounds = array<i64: 32, 4>}, {transform_indices = @transform_5, window_bounds = array<i64: 1, 32, 16>}]} {
    %c0 = arith.constant 0 : index
    %c0_0 = arith.constant 0 : index
    %c0_1 = arith.constant 0 : index
    %0 = vector.load %arg1[%c0, %c0_0, %c0_1] : memref<1x32x16xf32, #tpu.memory_space<vmem>>, vector<1x32x16xf32>
    %1 = vector.shape_cast %0 : vector<1x32x16xf32> to vector<32x16xf32>
    %c0_2 = arith.constant 0 : index
    %c0_3 = arith.constant 0 : index
    %2 = vector.load %arg2[%c0_2, %c0_3] : memref<32x1xf32, #tpu.memory_space<vmem>>, vector<32x1xf32>
    %3 = vector.broadcast %2 : vector<32x1xf32> to vector<32x16xf32>
    %4 = arith.mulf %1, %3 : vector<32x16xf32>
    %c0_4 = arith.constant 0 : index
    %c0_5 = arith.constant 0 : index
    %5 = vector.load %arg3[%c0_4, %c0_5] : memref<32x1xf32, #tpu.memory_space<vmem>>, vector<32x1xf32>
    %6 = vector.broadcast %5 : vector<32x1xf32> to vector<32x16xf32>
    %7 = arith.addf %4, %6 : vector<32x16xf32>
    %cst = arith.constant 0.000000e+00 : f32
    %8 = vector.broadcast %cst : f32 to vector<32x16xf32>
    %9 = arith.maximumf %7, %8 : vector<32x16xf32>
    %cst_6 = arith.constant dense<0.000000e+00> : vector<32xf32>
    %10 = vector.multi_reduction <add>, %9, %cst_6 [1] : vector<32x16xf32> to vector<32xf32>
    %11 = vector.shape_cast %10 : vector<32xf32> to vector<32x1xf32>
    %cst_7 = arith.constant 6.250000e-02 : f32
    %12 = vector.broadcast %cst_7 : f32 to vector<32x1xf32>
    %13 = arith.mulf %11, %12 : vector<32x1xf32>
    %c0_8 = arith.constant 0 : index
    %c0_9 = arith.constant 0 : index
    %14 = vector.load %arg4[%c0_8, %c0_9] : memref<32x4xf32, #tpu.memory_space<vmem>>, vector<32x4xf32>
    %15 = vector.broadcast %13 : vector<32x1xf32> to vector<32x4xf32>
    %16 = arith.mulf %14, %15 : vector<32x4xf32>
    %cst_10 = arith.constant dense<0.000000e+00> : vector<4xf32>
    %17 = vector.multi_reduction <add>, %16, %cst_10 [0] : vector<32x4xf32> to vector<4xf32>
    %18 = vector.shape_cast %17 : vector<4xf32> to vector<1x4xf32>
    %cst_11 = arith.constant 0.000000e+00 : f32
    %19 = vector.broadcast %cst_11 : f32 to vector<1x4xf32>
    %20 = arith.maximumf %18, %19 : vector<1x4xf32>
    %c0_12 = arith.constant 0 : index
    %c0_13 = arith.constant 0 : index
    %21 = vector.load %arg5[%c0_12, %c0_13] : memref<32x4xf32, #tpu.memory_space<vmem>>, vector<32x4xf32>
    %22 = vector.broadcast %20 : vector<1x4xf32> to vector<32x4xf32>
    %23 = arith.mulf %21, %22 : vector<32x4xf32>
    %cst_14 = arith.constant dense<0.000000e+00> : vector<32xf32>
    %24 = vector.multi_reduction <add>, %23, %cst_14 [1] : vector<32x4xf32> to vector<32xf32>
    %25 = vector.shape_cast %24 : vector<32xf32> to vector<32x1xf32>
    %26 = arith.negf %25 : vector<32x1xf32>
    %27 = math.exp %26 : vector<32x1xf32>
    %cst_15 = arith.constant 1.000000e+00 : f32
    %28 = vector.broadcast %cst_15 : f32 to vector<32x1xf32>
    %29 = arith.addf %28, %27 : vector<32x1xf32>
    %30 = arith.divf %28, %29 : vector<32x1xf32>
    %31 = vector.broadcast %30 : vector<32x1xf32> to vector<32x16xf32>
    %32 = arith.mulf %9, %31 : vector<32x16xf32>
    %c0_16 = arith.constant 0 : index
    %c0_17 = arith.constant 0 : index
    %c0_18 = arith.constant 0 : index
    %33 = vector.load %arg6[%c0_16, %c0_17, %c0_18] : memref<1x32x16xf32, #tpu.memory_space<vmem>>, vector<1x32x16xf32>
    %34 = vector.shape_cast %33 : vector<1x32x16xf32> to vector<32x16xf32>
    %35 = vector.shape_cast %32 : vector<32x16xf32> to vector<1x32x16xf32>
    tpu.vector_store %arg6[%c0_16, %c0_17, %c0_18], %35 {strides = array<i32>} : memref<1x32x16xf32, #tpu.memory_space<vmem>>, vector<1x32x16xf32>,
    return
  }
  func.func @transform_0(%arg0: i32) -> (i32, i32, i32) {
    %c0_i32 = arith.constant 0 : i32
    %c0_i32_0 = arith.constant 0 : i32
    %c0_i32_1 = arith.constant 0 : i32
    return %arg0, %c0_i32, %c0_i32_0 : i32, i32, i32
  }
  func.func @transform_1(%arg0: i32) -> (i32, i32) {
    %c0_i32 = arith.constant 0 : i32
    %c0_i32_0 = arith.constant 0 : i32
    %c0_i32_1 = arith.constant 0 : i32
    return %c0_i32, %c0_i32_0 : i32, i32
  }
  func.func @transform_2(%arg0: i32) -> (i32, i32) {
    %c0_i32 = arith.constant 0 : i32
    %c0_i32_0 = arith.constant 0 : i32
    %c0_i32_1 = arith.constant 0 : i32
    return %c0_i32, %c0_i32_0 : i32, i32
  }
  func.func @transform_3(%arg0: i32) -> (i32, i32) {
    %c0_i32 = arith.constant 0 : i32
    %c0_i32_0 = arith.constant 0 : i32
    %c0_i32_1 = arith.constant 0 : i32
    return %c0_i32, %c0_i32_0 : i32, i32
  }
  func.func @transform_4(%arg0: i32) -> (i32, i32) {
    %c0_i32 = arith.constant 0 : i32
    %c0_i32_0 = arith.constant 0 : i32
    %c0_i32_1 = arith.constant 0 : i32
    return %c0_i32, %c0_i32_0 : i32, i32
  }
  func.func @transform_5(%arg0: i32) -> (i32, i32, i32) {
    %c0_i32 = arith.constant 0 : i32
    %c0_i32_0 = arith.constant 0 : i32
    %c0_i32_1 = arith.constant 0 : i32
    return %arg0, %c0_i32, %c0_i32_0 : i32, i32, i32
  }
}

module attributes {stable_mosaic.version = 11 : i64} {
  func.func @_bn_relu_kernel(%arg0: i32, %arg1: memref<1x32x4xf32, #tpu.memory_space<vmem>>, %arg2: memref<32x1xf32, #tpu.memory_space<vmem>>, %arg3: memref<32x1xf32, #tpu.memory_space<vmem>>, %arg4: memref<1x32x4xf32, #tpu.memory_space<vmem>>) attributes {dimension_semantics = [#tpu.dimension_semantics<parallel>], iteration_bounds = array<i64: 2>, scalar_prefetch = 0 : i64, scratch_operands = 0 : i64, tpu.core_type = #tpu.core_type<tc>, window_params = [{transform_indices = @transform_0, window_bounds = array<i64: 1, 32, 4>}, {pipeline_mode = #tpu.pipeline_mode<synchronous>, transform_indices = @transform_1, window_bounds = array<i64: 32, 1>}, {pipeline_mode = #tpu.pipeline_mode<synchronous>, transform_indices = @transform_2, window_bounds = array<i64: 32, 1>}, {transform_indices = @transform_3, window_bounds = array<i64: 1, 32, 4>}]} {
    %c0 = arith.constant 0 : index
    %c0_0 = arith.constant 0 : index
    %c0_1 = arith.constant 0 : index
    %0 = vector.load %arg1[%c0, %c0_0, %c0_1] : memref<1x32x4xf32, #tpu.memory_space<vmem>>, vector<1x32x4xf32>
    %1 = vector.shape_cast %0 : vector<1x32x4xf32> to vector<32x4xf32>
    %c0_2 = arith.constant 0 : index
    %c0_3 = arith.constant 0 : index
    %2 = vector.load %arg2[%c0_2, %c0_3] : memref<32x1xf32, #tpu.memory_space<vmem>>, vector<32x1xf32>
    %3 = vector.broadcast %2 : vector<32x1xf32> to vector<32x4xf32>
    %4 = arith.mulf %1, %3 : vector<32x4xf32>
    %c0_4 = arith.constant 0 : index
    %c0_5 = arith.constant 0 : index
    %5 = vector.load %arg3[%c0_4, %c0_5] : memref<32x1xf32, #tpu.memory_space<vmem>>, vector<32x1xf32>
    %6 = vector.broadcast %5 : vector<32x1xf32> to vector<32x4xf32>
    %7 = arith.addf %4, %6 : vector<32x4xf32>
    %cst = arith.constant 0.000000e+00 : f32
    %8 = vector.broadcast %cst : f32 to vector<32x4xf32>
    %9 = arith.maximumf %7, %8 : vector<32x4xf32>
    %c0_6 = arith.constant 0 : index
    %c0_7 = arith.constant 0 : index
    %c0_8 = arith.constant 0 : index
    %10 = vector.load %arg4[%c0_6, %c0_7, %c0_8] : memref<1x32x4xf32, #tpu.memory_space<vmem>>, vector<1x32x4xf32>
    %11 = vector.shape_cast %10 : vector<1x32x4xf32> to vector<32x4xf32>
    %12 = vector.shape_cast %9 : vector<32x4xf32> to vector<1x32x4xf32>
    tpu.vector_store %arg4[%c0_6, %c0_7, %c0_8], %12 {strides = array<i32>} : memref<1x32x4xf32, #tpu.memory_space<vmem>>, vector<1x32x4xf32>,
    return
  }
  func.func @transform_0(%arg0: i32) -> (i32, i32, i32) {
    %c0_i32 = arith.constant 0 : i32
    %c0_i32_0 = arith.constant 0 : i32
    %c0_i32_1 = arith.constant 0 : i32
    return %arg0, %c0_i32, %c0_i32_0 : i32, i32, i32
  }
  func.func @transform_1(%arg0: i32) -> (i32, i32) {
    %c0_i32 = arith.constant 0 : i32
    %c0_i32_0 = arith.constant 0 : i32
    %c0_i32_1 = arith.constant 0 : i32
    return %c0_i32, %c0_i32_0 : i32, i32
  }
  func.func @transform_2(%arg0: i32) -> (i32, i32) {
    %c0_i32 = arith.constant 0 : i32
    %c0_i32_0 = arith.constant 0 : i32
    %c0_i32_1 = arith.constant 0 : i32
    return %c0_i32, %c0_i32_0 : i32, i32
  }
  func.func @transform_3(%arg0: i32) -> (i32, i32, i32) {
    %c0_i32 = arith.constant 0 : i32
    %c0_i32_0 = arith.constant 0 : i32
    %c0_i32_1 = arith.constant 0 : i32
    return %arg0, %c0_i32, %c0_i32_0 : i32, i32, i32
  }
}

module attributes {stable_mosaic.version = 11 : i64} {
  func.func @_bn_relu_se_kernel(%arg0: i32, %arg1: memref<1x32x4xf32, #tpu.memory_space<vmem>>, %arg2: memref<32x1xf32, #tpu.memory_space<vmem>>, %arg3: memref<32x1xf32, #tpu.memory_space<vmem>>, %arg4: memref<32x4xf32, #tpu.memory_space<vmem>>, %arg5: memref<32x4xf32, #tpu.memory_space<vmem>>, %arg6: memref<1x32x4xf32, #tpu.memory_space<vmem>>) attributes {dimension_semantics = [#tpu.dimension_semantics<parallel>], iteration_bounds = array<i64: 2>, scalar_prefetch = 0 : i64, scratch_operands = 0 : i64, tpu.core_type = #tpu.core_type<tc>, window_params = [{transform_indices = @transform_0, window_bounds = array<i64: 1, 32, 4>}, {pipeline_mode = #tpu.pipeline_mode<synchronous>, transform_indices = @transform_1, window_bounds = array<i64: 32, 1>}, {pipeline_mode = #tpu.pipeline_mode<synchronous>, transform_indices = @transform_2, window_bounds = array<i64: 32, 1>}, {pipeline_mode = #tpu.pipeline_mode<synchronous>, transform_indices = @transform_3, window_bounds = array<i64: 32, 4>}, {pipeline_mode = #tpu.pipeline_mode<synchronous>, transform_indices = @transform_4, window_bounds = array<i64: 32, 4>}, {transform_indices = @transform_5, window_bounds = array<i64: 1, 32, 4>}]} {
    %c0 = arith.constant 0 : index
    %c0_0 = arith.constant 0 : index
    %c0_1 = arith.constant 0 : index
    %0 = vector.load %arg1[%c0, %c0_0, %c0_1] : memref<1x32x4xf32, #tpu.memory_space<vmem>>, vector<1x32x4xf32>
    %1 = vector.shape_cast %0 : vector<1x32x4xf32> to vector<32x4xf32>
    %c0_2 = arith.constant 0 : index
    %c0_3 = arith.constant 0 : index
    %2 = vector.load %arg2[%c0_2, %c0_3] : memref<32x1xf32, #tpu.memory_space<vmem>>, vector<32x1xf32>
    %3 = vector.broadcast %2 : vector<32x1xf32> to vector<32x4xf32>
    %4 = arith.mulf %1, %3 : vector<32x4xf32>
    %c0_4 = arith.constant 0 : index
    %c0_5 = arith.constant 0 : index
    %5 = vector.load %arg3[%c0_4, %c0_5] : memref<32x1xf32, #tpu.memory_space<vmem>>, vector<32x1xf32>
    %6 = vector.broadcast %5 : vector<32x1xf32> to vector<32x4xf32>
    %7 = arith.addf %4, %6 : vector<32x4xf32>
    %cst = arith.constant 0.000000e+00 : f32
    %8 = vector.broadcast %cst : f32 to vector<32x4xf32>
    %9 = arith.maximumf %7, %8 : vector<32x4xf32>
    %cst_6 = arith.constant dense<0.000000e+00> : vector<32xf32>
    %10 = vector.multi_reduction <add>, %9, %cst_6 [1] : vector<32x4xf32> to vector<32xf32>
    %11 = vector.shape_cast %10 : vector<32xf32> to vector<32x1xf32>
    %cst_7 = arith.constant 2.500000e-01 : f32
    %12 = vector.broadcast %cst_7 : f32 to vector<32x1xf32>
    %13 = arith.mulf %11, %12 : vector<32x1xf32>
    %c0_8 = arith.constant 0 : index
    %c0_9 = arith.constant 0 : index
    %14 = vector.load %arg4[%c0_8, %c0_9] : memref<32x4xf32, #tpu.memory_space<vmem>>, vector<32x4xf32>
    %15 = vector.broadcast %13 : vector<32x1xf32> to vector<32x4xf32>
    %16 = arith.mulf %14, %15 : vector<32x4xf32>
    %cst_10 = arith.constant dense<0.000000e+00> : vector<4xf32>
    %17 = vector.multi_reduction <add>, %16, %cst_10 [0] : vector<32x4xf32> to vector<4xf32>
    %18 = vector.shape_cast %17 : vector<4xf32> to vector<1x4xf32>
    %cst_11 = arith.constant 0.000000e+00 : f32
    %19 = vector.broadcast %cst_11 : f32 to vector<1x4xf32>
    %20 = arith.maximumf %18, %19 : vector<1x4xf32>
    %c0_12 = arith.constant 0 : index
    %c0_13 = arith.constant 0 : index
    %21 = vector.load %arg5[%c0_12, %c0_13] : memref<32x4xf32, #tpu.memory_space<vmem>>, vector<32x4xf32>
    %22 = vector.broadcast %20 : vector<1x4xf32> to vector<32x4xf32>
    %23 = arith.mulf %21, %22 : vector<32x4xf32>
    %cst_14 = arith.constant dense<0.000000e+00> : vector<32xf32>
    %24 = vector.multi_reduction <add>, %23, %cst_14 [1] : vector<32x4xf32> to vector<32xf32>
    %25 = vector.shape_cast %24 : vector<32xf32> to vector<32x1xf32>
    %26 = arith.negf %25 : vector<32x1xf32>
    %27 = math.exp %26 : vector<32x1xf32>
    %cst_15 = arith.constant 1.000000e+00 : f32
    %28 = vector.broadcast %cst_15 : f32 to vector<32x1xf32>
    %29 = arith.addf %28, %27 : vector<32x1xf32>
    %30 = arith.divf %28, %29 : vector<32x1xf32>
    %31 = vector.broadcast %30 : vector<32x1xf32> to vector<32x4xf32>
    %32 = arith.mulf %9, %31 : vector<32x4xf32>
    %c0_16 = arith.constant 0 : index
    %c0_17 = arith.constant 0 : index
    %c0_18 = arith.constant 0 : index
    %33 = vector.load %arg6[%c0_16, %c0_17, %c0_18] : memref<1x32x4xf32, #tpu.memory_space<vmem>>, vector<1x32x4xf32>
    %34 = vector.shape_cast %33 : vector<1x32x4xf32> to vector<32x4xf32>
    %35 = vector.shape_cast %32 : vector<32x4xf32> to vector<1x32x4xf32>
    tpu.vector_store %arg6[%c0_16, %c0_17, %c0_18], %35 {strides = array<i32>} : memref<1x32x4xf32, #tpu.memory_space<vmem>>, vector<1x32x4xf32>,
    return
  }
  func.func @transform_0(%arg0: i32) -> (i32, i32, i32) {
    %c0_i32 = arith.constant 0 : i32
    %c0_i32_0 = arith.constant 0 : i32
    %c0_i32_1 = arith.constant 0 : i32
    return %arg0, %c0_i32, %c0_i32_0 : i32, i32, i32
  }
  func.func @transform_1(%arg0: i32) -> (i32, i32) {
    %c0_i32 = arith.constant 0 : i32
    %c0_i32_0 = arith.constant 0 : i32
    %c0_i32_1 = arith.constant 0 : i32
    return %c0_i32, %c0_i32_0 : i32, i32
  }
  func.func @transform_2(%arg0: i32) -> (i32, i32) {
    %c0_i32 = arith.constant 0 : i32
    %c0_i32_0 = arith.constant 0 : i32
    %c0_i32_1 = arith.constant 0 : i32
    return %c0_i32, %c0_i32_0 : i32, i32
  }
  func.func @transform_3(%arg0: i32) -> (i32, i32) {
    %c0_i32 = arith.constant 0 : i32
    %c0_i32_0 = arith.constant 0 : i32
    %c0_i32_1 = arith.constant 0 : i32
    return %c0_i32, %c0_i32_0 : i32, i32
  }
  func.func @transform_4(%arg0: i32) -> (i32, i32) {
    %c0_i32 = arith.constant 0 : i32
    %c0_i32_0 = arith.constant 0 : i32
    %c0_i32_1 = arith.constant 0 : i32
    return %c0_i32, %c0_i32_0 : i32, i32
  }
  func.func @transform_5(%arg0: i32) -> (i32, i32, i32) {
    %c0_i32 = arith.constant 0 : i32
    %c0_i32_0 = arith.constant 0 : i32
    %c0_i32_1 = arith.constant 0 : i32
    return %arg0, %c0_i32, %c0_i32_0 : i32, i32, i32
  }
}

module attributes {stable_mosaic.version = 11 : i64} {
  func.func @_bn_relu_kernel(%arg0: i32, %arg1: memref<1x32x1xf32, #tpu.memory_space<vmem>>, %arg2: memref<32x1xf32, #tpu.memory_space<vmem>>, %arg3: memref<32x1xf32, #tpu.memory_space<vmem>>, %arg4: memref<1x32x1xf32, #tpu.memory_space<vmem>>) attributes {dimension_semantics = [#tpu.dimension_semantics<parallel>], iteration_bounds = array<i64: 2>, scalar_prefetch = 0 : i64, scratch_operands = 0 : i64, tpu.core_type = #tpu.core_type<tc>, window_params = [{transform_indices = @transform_0, window_bounds = array<i64: 1, 32, 1>}, {pipeline_mode = #tpu.pipeline_mode<synchronous>, transform_indices = @transform_1, window_bounds = array<i64: 32, 1>}, {pipeline_mode = #tpu.pipeline_mode<synchronous>, transform_indices = @transform_2, window_bounds = array<i64: 32, 1>}, {transform_indices = @transform_3, window_bounds = array<i64: 1, 32, 1>}]} {
    %c0 = arith.constant 0 : index
    %c0_0 = arith.constant 0 : index
    %c0_1 = arith.constant 0 : index
    %0 = vector.load %arg1[%c0, %c0_0, %c0_1] : memref<1x32x1xf32, #tpu.memory_space<vmem>>, vector<1x32x1xf32>
    %1 = vector.shape_cast %0 : vector<1x32x1xf32> to vector<32x1xf32>
    %c0_2 = arith.constant 0 : index
    %c0_3 = arith.constant 0 : index
    %2 = vector.load %arg2[%c0_2, %c0_3] : memref<32x1xf32, #tpu.memory_space<vmem>>, vector<32x1xf32>
    %3 = arith.mulf %1, %2 : vector<32x1xf32>
    %c0_4 = arith.constant 0 : index
    %c0_5 = arith.constant 0 : index
    %4 = vector.load %arg3[%c0_4, %c0_5] : memref<32x1xf32, #tpu.memory_space<vmem>>, vector<32x1xf32>
    %5 = arith.addf %3, %4 : vector<32x1xf32>
    %cst = arith.constant 0.000000e+00 : f32
    %6 = vector.broadcast %cst : f32 to vector<32x1xf32>
    %7 = arith.maximumf %5, %6 : vector<32x1xf32>
    %c0_6 = arith.constant 0 : index
    %c0_7 = arith.constant 0 : index
    %c0_8 = arith.constant 0 : index
    %8 = vector.load %arg4[%c0_6, %c0_7, %c0_8] : memref<1x32x1xf32, #tpu.memory_space<vmem>>, vector<1x32x1xf32>
    %9 = vector.shape_cast %8 : vector<1x32x1xf32> to vector<32x1xf32>
    %10 = vector.shape_cast %7 : vector<32x1xf32> to vector<1x32x1xf32>
    tpu.vector_store %arg4[%c0_6, %c0_7, %c0_8], %10 {strides = array<i32>} : memref<1x32x1xf32, #tpu.memory_space<vmem>>, vector<1x32x1xf32>,
    return
  }
  func.func @transform_0(%arg0: i32) -> (i32, i32, i32) {
    %c0_i32 = arith.constant 0 : i32
    %c0_i32_0 = arith.constant 0 : i32
    %c0_i32_1 = arith.constant 0 : i32
    return %arg0, %c0_i32, %c0_i32_0 : i32, i32, i32
  }
  func.func @transform_1(%arg0: i32) -> (i32, i32) {
    %c0_i32 = arith.constant 0 : i32
    %c0_i32_0 = arith.constant 0 : i32
    %c0_i32_1 = arith.constant 0 : i32
    return %c0_i32, %c0_i32_0 : i32, i32
  }
  func.func @transform_2(%arg0: i32) -> (i32, i32) {
    %c0_i32 = arith.constant 0 : i32
    %c0_i32_0 = arith.constant 0 : i32
    %c0_i32_1 = arith.constant 0 : i32
    return %c0_i32, %c0_i32_0 : i32, i32
  }
  func.func @transform_3(%arg0: i32) -> (i32, i32, i32) {
    %c0_i32 = arith.constant 0 : i32
    %c0_i32_0 = arith.constant 0 : i32
    %c0_i32_1 = arith.constant 0 : i32
    return %arg0, %c0_i32, %c0_i32_0 : i32, i32, i32
  }
}

module attributes {stable_mosaic.version = 11 : i64} {
  func.func @_bn_relu_se_kernel(%arg0: i32, %arg1: memref<1x32x1xf32, #tpu.memory_space<vmem>>, %arg2: memref<32x1xf32, #tpu.memory_space<vmem>>, %arg3: memref<32x1xf32, #tpu.memory_space<vmem>>, %arg4: memref<32x4xf32, #tpu.memory_space<vmem>>, %arg5: memref<32x4xf32, #tpu.memory_space<vmem>>, %arg6: memref<1x32x1xf32, #tpu.memory_space<vmem>>) attributes {dimension_semantics = [#tpu.dimension_semantics<parallel>], iteration_bounds = array<i64: 2>, scalar_prefetch = 0 : i64, scratch_operands = 0 : i64, tpu.core_type = #tpu.core_type<tc>, window_params = [{transform_indices = @transform_0, window_bounds = array<i64: 1, 32, 1>}, {pipeline_mode = #tpu.pipeline_mode<synchronous>, transform_indices = @transform_1, window_bounds = array<i64: 32, 1>}, {pipeline_mode = #tpu.pipeline_mode<synchronous>, transform_indices = @transform_2, window_bounds = array<i64: 32, 1>}, {pipeline_mode = #tpu.pipeline_mode<synchronous>, transform_indices = @transform_3, window_bounds = array<i64: 32, 4>}, {pipeline_mode = #tpu.pipeline_mode<synchronous>, transform_indices = @transform_4, window_bounds = array<i64: 32, 4>}, {transform_indices = @transform_5, window_bounds = array<i64: 1, 32, 1>}]} {
    %c0 = arith.constant 0 : index
    %c0_0 = arith.constant 0 : index
    %c0_1 = arith.constant 0 : index
    %0 = vector.load %arg1[%c0, %c0_0, %c0_1] : memref<1x32x1xf32, #tpu.memory_space<vmem>>, vector<1x32x1xf32>
    %1 = vector.shape_cast %0 : vector<1x32x1xf32> to vector<32x1xf32>
    %c0_2 = arith.constant 0 : index
    %c0_3 = arith.constant 0 : index
    %2 = vector.load %arg2[%c0_2, %c0_3] : memref<32x1xf32, #tpu.memory_space<vmem>>, vector<32x1xf32>
    %3 = arith.mulf %1, %2 : vector<32x1xf32>
    %c0_4 = arith.constant 0 : index
    %c0_5 = arith.constant 0 : index
    %4 = vector.load %arg3[%c0_4, %c0_5] : memref<32x1xf32, #tpu.memory_space<vmem>>, vector<32x1xf32>
    %5 = arith.addf %3, %4 : vector<32x1xf32>
    %cst = arith.constant 0.000000e+00 : f32
    %6 = vector.broadcast %cst : f32 to vector<32x1xf32>
    %7 = arith.maximumf %5, %6 : vector<32x1xf32>
    %cst_6 = arith.constant dense<0.000000e+00> : vector<32xf32>
    %8 = vector.multi_reduction <add>, %7, %cst_6 [1] : vector<32x1xf32> to vector<32xf32>
    %9 = vector.shape_cast %8 : vector<32xf32> to vector<32x1xf32>
    %cst_7 = arith.constant 1.000000e+00 : f32
    %10 = vector.broadcast %cst_7 : f32 to vector<32x1xf32>
    %11 = arith.mulf %9, %10 : vector<32x1xf32>
    %c0_8 = arith.constant 0 : index
    %c0_9 = arith.constant 0 : index
    %12 = vector.load %arg4[%c0_8, %c0_9] : memref<32x4xf32, #tpu.memory_space<vmem>>, vector<32x4xf32>
    %13 = vector.broadcast %11 : vector<32x1xf32> to vector<32x4xf32>
    %14 = arith.mulf %12, %13 : vector<32x4xf32>
    %cst_10 = arith.constant dense<0.000000e+00> : vector<4xf32>
    %15 = vector.multi_reduction <add>, %14, %cst_10 [0] : vector<32x4xf32> to vector<4xf32>
    %16 = vector.shape_cast %15 : vector<4xf32> to vector<1x4xf32>
    %cst_11 = arith.constant 0.000000e+00 : f32
    %17 = vector.broadcast %cst_11 : f32 to vector<1x4xf32>
    %18 = arith.maximumf %16, %17 : vector<1x4xf32>
    %c0_12 = arith.constant 0 : index
    %c0_13 = arith.constant 0 : index
    %19 = vector.load %arg5[%c0_12, %c0_13] : memref<32x4xf32, #tpu.memory_space<vmem>>, vector<32x4xf32>
    %20 = vector.broadcast %18 : vector<1x4xf32> to vector<32x4xf32>
    %21 = arith.mulf %19, %20 : vector<32x4xf32>
    %cst_14 = arith.constant dense<0.000000e+00> : vector<32xf32>
    %22 = vector.multi_reduction <add>, %21, %cst_14 [1] : vector<32x4xf32> to vector<32xf32>
    %23 = vector.shape_cast %22 : vector<32xf32> to vector<32x1xf32>
    %24 = arith.negf %23 : vector<32x1xf32>
    %25 = math.exp %24 : vector<32x1xf32>
    %cst_15 = arith.constant 1.000000e+00 : f32
    %26 = vector.broadcast %cst_15 : f32 to vector<32x1xf32>
    %27 = arith.addf %26, %25 : vector<32x1xf32>
    %28 = arith.divf %26, %27 : vector<32x1xf32>
    %29 = arith.mulf %7, %28 : vector<32x1xf32>
    %c0_16 = arith.constant 0 : index
    %c0_17 = arith.constant 0 : index
    %c0_18 = arith.constant 0 : index
    %30 = vector.load %arg6[%c0_16, %c0_17, %c0_18] : memref<1x32x1xf32, #tpu.memory_space<vmem>>, vector<1x32x1xf32>
    %31 = vector.shape_cast %30 : vector<1x32x1xf32> to vector<32x1xf32>
    %32 = vector.shape_cast %29 : vector<32x1xf32> to vector<1x32x1xf32>
    tpu.vector_store %arg6[%c0_16, %c0_17, %c0_18], %32 {strides = array<i32>} : memref<1x32x1xf32, #tpu.memory_space<vmem>>, vector<1x32x1xf32>,
    return
  }
  func.func @transform_0(%arg0: i32) -> (i32, i32, i32) {
    %c0_i32 = arith.constant 0 : i32
    %c0_i32_0 = arith.constant 0 : i32
    %c0_i32_1 = arith.constant 0 : i32
    return %arg0, %c0_i32, %c0_i32_0 : i32, i32, i32
  }
  func.func @transform_1(%arg0: i32) -> (i32, i32) {
    %c0_i32 = arith.constant 0 : i32
    %c0_i32_0 = arith.constant 0 : i32
    %c0_i32_1 = arith.constant 0 : i32
    return %c0_i32, %c0_i32_0 : i32, i32
  }
  func.func @transform_2(%arg0: i32) -> (i32, i32) {
    %c0_i32 = arith.constant 0 : i32
    %c0_i32_0 = arith.constant 0 : i32
    %c0_i32_1 = arith.constant 0 : i32
    return %c0_i32, %c0_i32_0 : i32, i32
  }
  func.func @transform_3(%arg0: i32) -> (i32, i32) {
    %c0_i32 = arith.constant 0 : i32
    %c0_i32_0 = arith.constant 0 : i32
    %c0_i32_1 = arith.constant 0 : i32
    return %c0_i32, %c0_i32_0 : i32, i32
  }
  func.func @transform_4(%arg0: i32) -> (i32, i32) {
    %c0_i32 = arith.constant 0 : i32
    %c0_i32_0 = arith.constant 0 : i32
    %c0_i32_1 = arith.constant 0 : i32
    return %c0_i32, %c0_i32_0 : i32, i32
  }
  func.func @transform_5(%arg0: i32) -> (i32, i32, i32) {
    %c0_i32 = arith.constant 0 : i32
    %c0_i32_0 = arith.constant 0 : i32
    %c0_i32_1 = arith.constant 0 : i32
    return %arg0, %c0_i32, %c0_i32_0 : i32, i32, i32
  }
}

module attributes {stable_mosaic.version = 11 : i64} {
  func.func @_pointwise_conv_kernel(%arg0: i32, %arg1: memref<1x8x256xf32, #tpu.memory_space<vmem>>, %arg2: memref<2x8xf32, #tpu.memory_space<smem>>, %arg3: memref<2xf32, #tpu.memory_space<smem>>, %arg4: memref<1x2x256xf32, #tpu.memory_space<vmem>>) attributes {dimension_semantics = [#tpu.dimension_semantics<parallel>], iteration_bounds = array<i64: 2>, scalar_prefetch = 0 : i64, scratch_operands = 0 : i64, tpu.core_type = #tpu.core_type<tc>, window_params = [{transform_indices = @transform_0, window_bounds = array<i64: 1, 8, 256>}, {transform_indices = @transform_1, window_bounds = array<i64: 2, 8>}, {transform_indices = @transform_2, window_bounds = array<i64: 2>}, {transform_indices = @transform_3, window_bounds = array<i64: 1, 2, 256>}]} {
    %c0 = arith.constant 0 : index
    %c0_0 = arith.constant 0 : index
    %c0_1 = arith.constant 0 : index
    %0 = vector.load %arg1[%c0, %c0_0, %c0_1] : memref<1x8x256xf32, #tpu.memory_space<vmem>>, vector<1x8x256xf32>
    %1 = vector.shape_cast %0 : vector<1x8x256xf32> to vector<8x256xf32>
    %cst = arith.constant 0.000000e+00 : f32
    %2 = vector.broadcast %cst : f32 to vector<1x256xf32>
    %c0_2 = arith.constant 0 : index
    %c0_3 = arith.constant 0 : index
    %3 = memref.load %arg2[%c0_2, %c0_3] : memref<2x8xf32, #tpu.memory_space<smem>>
    %4 = vector.extract_strided_slice %1 {offsets = [0, 0], sizes = [1, 256], strides = [1, 1]} : vector<8x256xf32> to vector<1x256xf32>
    %5 = vector.broadcast %3 : f32 to vector<1x256xf32>
    %6 = arith.mulf %5, %4 : vector<1x256xf32>
    %7 = arith.addf %2, %6 : vector<1x256xf32>
    %c0_4 = arith.constant 0 : index
    %c1 = arith.constant 1 : index
    %8 = memref.load %arg2[%c0_4, %c1] : memref<2x8xf32, #tpu.memory_space<smem>>
    %9 = vector.extract_strided_slice %1 {offsets = [1, 0], sizes = [1, 256], strides = [1, 1]} : vector<8x256xf32> to vector<1x256xf32>
    %10 = vector.broadcast %8 : f32 to vector<1x256xf32>
    %11 = arith.mulf %10, %9 : vector<1x256xf32>
    %12 = arith.addf %7, %11 : vector<1x256xf32>
    %c0_5 = arith.constant 0 : index
    %c2 = arith.constant 2 : index
    %13 = memref.load %arg2[%c0_5, %c2] : memref<2x8xf32, #tpu.memory_space<smem>>
    %14 = vector.extract_strided_slice %1 {offsets = [2, 0], sizes = [1, 256], strides = [1, 1]} : vector<8x256xf32> to vector<1x256xf32>
    %15 = vector.broadcast %13 : f32 to vector<1x256xf32>
    %16 = arith.mulf %15, %14 : vector<1x256xf32>
    %17 = arith.addf %12, %16 : vector<1x256xf32>
    %c0_6 = arith.constant 0 : index
    %c3 = arith.constant 3 : index
    %18 = memref.load %arg2[%c0_6, %c3] : memref<2x8xf32, #tpu.memory_space<smem>>
    %19 = vector.extract_strided_slice %1 {offsets = [3, 0], sizes = [1, 256], strides = [1, 1]} : vector<8x256xf32> to vector<1x256xf32>
    %20 = vector.broadcast %18 : f32 to vector<1x256xf32>
    %21 = arith.mulf %20, %19 : vector<1x256xf32>
    %22 = arith.addf %17, %21 : vector<1x256xf32>
    %c0_7 = arith.constant 0 : index
    %c4 = arith.constant 4 : index
    %23 = memref.load %arg2[%c0_7, %c4] : memref<2x8xf32, #tpu.memory_space<smem>>
    %24 = vector.extract_strided_slice %1 {offsets = [4, 0], sizes = [1, 256], strides = [1, 1]} : vector<8x256xf32> to vector<1x256xf32>
    %25 = vector.broadcast %23 : f32 to vector<1x256xf32>
    %26 = arith.mulf %25, %24 : vector<1x256xf32>
    %27 = arith.addf %22, %26 : vector<1x256xf32>
    %c0_8 = arith.constant 0 : index
    %c5 = arith.constant 5 : index
    %28 = memref.load %arg2[%c0_8, %c5] : memref<2x8xf32, #tpu.memory_space<smem>>
    %29 = vector.extract_strided_slice %1 {offsets = [5, 0], sizes = [1, 256], strides = [1, 1]} : vector<8x256xf32> to vector<1x256xf32>
    %30 = vector.broadcast %28 : f32 to vector<1x256xf32>
    %31 = arith.mulf %30, %29 : vector<1x256xf32>
    %32 = arith.addf %27, %31 : vector<1x256xf32>
    %c0_9 = arith.constant 0 : index
    %c6 = arith.constant 6 : index
    %33 = memref.load %arg2[%c0_9, %c6] : memref<2x8xf32, #tpu.memory_space<smem>>
    %34 = vector.extract_strided_slice %1 {offsets = [6, 0], sizes = [1, 256], strides = [1, 1]} : vector<8x256xf32> to vector<1x256xf32>
    %35 = vector.broadcast %33 : f32 to vector<1x256xf32>
    %36 = arith.mulf %35, %34 : vector<1x256xf32>
    %37 = arith.addf %32, %36 : vector<1x256xf32>
    %c0_10 = arith.constant 0 : index
    %c7 = arith.constant 7 : index
    %38 = memref.load %arg2[%c0_10, %c7] : memref<2x8xf32, #tpu.memory_space<smem>>
    %39 = vector.extract_strided_slice %1 {offsets = [7, 0], sizes = [1, 256], strides = [1, 1]} : vector<8x256xf32> to vector<1x256xf32>
    %40 = vector.broadcast %38 : f32 to vector<1x256xf32>
    %41 = arith.mulf %40, %39 : vector<1x256xf32>
    %42 = arith.addf %37, %41 : vector<1x256xf32>
    %c0_11 = arith.constant 0 : index
    %43 = memref.load %arg3[%c0_11] : memref<2xf32, #tpu.memory_space<smem>>
    %44 = vector.broadcast %43 : f32 to vector<1x256xf32>
    %45 = arith.addf %42, %44 : vector<1x256xf32>
    %cst_12 = arith.constant 0.000000e+00 : f32
    %46 = vector.broadcast %cst_12 : f32 to vector<1x256xf32>
    %c1_13 = arith.constant 1 : index
    %c0_14 = arith.constant 0 : index
    %47 = memref.load %arg2[%c1_13, %c0_14] : memref<2x8xf32, #tpu.memory_space<smem>>
    %48 = vector.extract_strided_slice %1 {offsets = [0, 0], sizes = [1, 256], strides = [1, 1]} : vector<8x256xf32> to vector<1x256xf32>
    %49 = vector.broadcast %47 : f32 to vector<1x256xf32>
    %50 = arith.mulf %49, %48 : vector<1x256xf32>
    %51 = arith.addf %46, %50 : vector<1x256xf32>
    %c1_15 = arith.constant 1 : index
    %c1_16 = arith.constant 1 : index
    %52 = memref.load %arg2[%c1_15, %c1_16] : memref<2x8xf32, #tpu.memory_space<smem>>
    %53 = vector.extract_strided_slice %1 {offsets = [1, 0], sizes = [1, 256], strides = [1, 1]} : vector<8x256xf32> to vector<1x256xf32>
    %54 = vector.broadcast %52 : f32 to vector<1x256xf32>
    %55 = arith.mulf %54, %53 : vector<1x256xf32>
    %56 = arith.addf %51, %55 : vector<1x256xf32>
    %c1_17 = arith.constant 1 : index
    %c2_18 = arith.constant 2 : index
    %57 = memref.load %arg2[%c1_17, %c2_18] : memref<2x8xf32, #tpu.memory_space<smem>>
    %58 = vector.extract_strided_slice %1 {offsets = [2, 0], sizes = [1, 256], strides = [1, 1]} : vector<8x256xf32> to vector<1x256xf32>
    %59 = vector.broadcast %57 : f32 to vector<1x256xf32>
    %60 = arith.mulf %59, %58 : vector<1x256xf32>
    %61 = arith.addf %56, %60 : vector<1x256xf32>
    %c1_19 = arith.constant 1 : index
    %c3_20 = arith.constant 3 : index
    %62 = memref.load %arg2[%c1_19, %c3_20] : memref<2x8xf32, #tpu.memory_space<smem>>
    %63 = vector.extract_strided_slice %1 {offsets = [3, 0], sizes = [1, 256], strides = [1, 1]} : vector<8x256xf32> to vector<1x256xf32>
    %64 = vector.broadcast %62 : f32 to vector<1x256xf32>
    %65 = arith.mulf %64, %63 : vector<1x256xf32>
    %66 = arith.addf %61, %65 : vector<1x256xf32>
    %c1_21 = arith.constant 1 : index
    %c4_22 = arith.constant 4 : index
    %67 = memref.load %arg2[%c1_21, %c4_22] : memref<2x8xf32, #tpu.memory_space<smem>>
    %68 = vector.extract_strided_slice %1 {offsets = [4, 0], sizes = [1, 256], strides = [1, 1]} : vector<8x256xf32> to vector<1x256xf32>
    %69 = vector.broadcast %67 : f32 to vector<1x256xf32>
    %70 = arith.mulf %69, %68 : vector<1x256xf32>
    %71 = arith.addf %66, %70 : vector<1x256xf32>
    %c1_23 = arith.constant 1 : index
    %c5_24 = arith.constant 5 : index
    %72 = memref.load %arg2[%c1_23, %c5_24] : memref<2x8xf32, #tpu.memory_space<smem>>
    %73 = vector.extract_strided_slice %1 {offsets = [5, 0], sizes = [1, 256], strides = [1, 1]} : vector<8x256xf32> to vector<1x256xf32>
    %74 = vector.broadcast %72 : f32 to vector<1x256xf32>
    %75 = arith.mulf %74, %73 : vector<1x256xf32>
    %76 = arith.addf %71, %75 : vector<1x256xf32>
    %c1_25 = arith.constant 1 : index
    %c6_26 = arith.constant 6 : index
    %77 = memref.load %arg2[%c1_25, %c6_26] : memref<2x8xf32, #tpu.memory_space<smem>>
    %78 = vector.extract_strided_slice %1 {offsets = [6, 0], sizes = [1, 256], strides = [1, 1]} : vector<8x256xf32> to vector<1x256xf32>
    %79 = vector.broadcast %77 : f32 to vector<1x256xf32>
    %80 = arith.mulf %79, %78 : vector<1x256xf32>
    %81 = arith.addf %76, %80 : vector<1x256xf32>
    %c1_27 = arith.constant 1 : index
    %c7_28 = arith.constant 7 : index
    %82 = memref.load %arg2[%c1_27, %c7_28] : memref<2x8xf32, #tpu.memory_space<smem>>
    %83 = vector.extract_strided_slice %1 {offsets = [7, 0], sizes = [1, 256], strides = [1, 1]} : vector<8x256xf32> to vector<1x256xf32>
    %84 = vector.broadcast %82 : f32 to vector<1x256xf32>
    %85 = arith.mulf %84, %83 : vector<1x256xf32>
    %86 = arith.addf %81, %85 : vector<1x256xf32>
    %c1_29 = arith.constant 1 : index
    %87 = memref.load %arg3[%c1_29] : memref<2xf32, #tpu.memory_space<smem>>
    %88 = vector.broadcast %87 : f32 to vector<1x256xf32>
    %89 = arith.addf %86, %88 : vector<1x256xf32>
    %90 = tpu.concatenate %45, %89 in 0 : vector<1x256xf32>, vector<1x256xf32> -> vector<2x256xf32>
    %c0_30 = arith.constant 0 : index
    %c0_31 = arith.constant 0 : index
    %c0_32 = arith.constant 0 : index
    %91 = vector.load %arg4[%c0_30, %c0_31, %c0_32] : memref<1x2x256xf32, #tpu.memory_space<vmem>>, vector<1x2x256xf32>
    %92 = vector.shape_cast %91 : vector<1x2x256xf32> to vector<2x256xf32>
    %93 = vector.shape_cast %90 : vector<2x256xf32> to vector<1x2x256xf32>
    tpu.vector_store %arg4[%c0_30, %c0_31, %c0_32], %93 {strides = array<i32>} : memref<1x2x256xf32, #tpu.memory_space<vmem>>, vector<1x2x256xf32>,
    return
  }
  func.func @transform_0(%arg0: i32) -> (i32, i32, i32) {
    %c0_i32 = arith.constant 0 : i32
    %c0_i32_0 = arith.constant 0 : i32
    %c0_i32_1 = arith.constant 0 : i32
    return %arg0, %c0_i32, %c0_i32_0 : i32, i32, i32
  }
  func.func @transform_1(%arg0: i32) -> (i32, i32) {
    %c0_i32 = arith.constant 0 : i32
    %c0_i32_0 = arith.constant 0 : i32
    %c0_i32_1 = arith.constant 0 : i32
    return %c0_i32, %c0_i32_0 : i32, i32
  }
  func.func @transform_2(%arg0: i32) -> i32 {
    %c0_i32 = arith.constant 0 : i32
    %c0_i32_0 = arith.constant 0 : i32
    return %c0_i32 : i32
  }
  func.func @transform_3(%arg0: i32) -> (i32, i32, i32) {
    %c0_i32 = arith.constant 0 : i32
    %c0_i32_0 = arith.constant 0 : i32
    %c0_i32_1 = arith.constant 0 : i32
    return %arg0, %c0_i32, %c0_i32_0 : i32, i32, i32
  }
}

</mosaic_0001>

<llo_original>
// kernel: nested_unet.31
$region0: #{nested_unet.31}
  #allocation0 [shape = 'u32[]', space=smem, size = 0x4, offset = 0x4, fixed_abs, tag = 'smem constant byte address 0x4 - core index']
  #allocation1 [shape = 'u32[72,128]{1,0:T(1,128)}', space=vmem, size = 0x9000, scoped, tag = 'internal scratch']
  %s0 = inlined_call_operand.vmem [shape: f32[2,8,256], index: 0, kind: input, shape index: {}]
  %s1 = inlined_call_operand.vmem [shape: f32[8,1], index: 1, kind: input, shape index: {}]
  %s2 = inlined_call_operand.vmem [shape: f32[8,1], index: 2, kind: input, shape index: {}]
  %s3 = inlined_call_operand.vmem [shape: f32[2,8,256], index: 3, kind: output, shape index: {}]
  %s4 = sld [smem:[#allocation0]]
  $region45: #{nested_unet.31} parent=0
    _
  %s6 = ssub.s32 1, %s4
  %s7 = scalar_select 0, %s6, %s4
  loop: start=0, step=1, limit=4
  $region2: #{nested_unet.31} parent=0 // loop_pre_header
    _
  $region3: #{nested_unet.31} parent=0 // loop_header
    %s9 = sphi 0, %s13
    %p10 = scmp.ge.s32.totalorder %s9, 4
    %s19 = sphi 0, %s21
    %s22 = sphi 0, %s19
    %s23 = sphi 0, %s22
    %s39 = sphi 0, %s23
    %s43 = sphi 0, %s43
    %s45 = sphi 0, %s43
    %s46 = sphi 0, %s45
    %s60 = sphi 0, %s46
    %s64 = sphi 0, %s64
    %s66 = sphi 0, %s64
    %s67 = sphi 0, %s66
    %s81 = sphi 0, %s67
    %s87 = sphi 0, %s89
    %s90 = sphi 0, %s87
    %s91 = sphi 0, %s90
    %s107 = sphi 0, %s91
  $region4: #{nested_unet.31} parent=0 // loop_header_branch
    %12 = sbr.rel (%p10) target = $region8
  $region5: #{nested_unet.31} parent=0 // loop_body
    %s14 = ssub.s32 %s9, 1
    %s15 = ssub.s32 %s9, 2
    %s16 = sadd.s32 %s9, 1
    %s17 = ssub.s32 %s9, %s16
    %p18 = scmp.eq.s32.totalorder %s17, 0
    %s20 = sadd.s32 %s19, 1
    %s21 = scalar_select %p18, %s19, %s20
    %p24 = pneg %p18
    %p25 = scmp.eq.s32.totalorder %s9, 1
    %p26 = por %p24, %p25
    %p27 = scmp.ne.s32.totalorder %s19, %s22
    %p28 = scmp.eq.s32.totalorder %s9, 0
    %p29 = por %p27, %p28
    %p30 = scmp.ne.s32.totalorder %s19, %s22
    %p31 = scmp.eq.s32.totalorder %s14, 1
    %p32 = por %p30, %p31
    %p33 = scmp.ne.s32.totalorder %s22, %s23
    %p34 = scmp.eq.s32.totalorder %s14, 0
    %p35 = por %p33, %p34
    %p36 = scmp.ne.s32.totalorder %s22, %s23
    %p37 = scmp.eq.s32.totalorder %s15, 1
    %p38 = por %p36, %p37
    %p40 = scmp.ne.s32.totalorder %s23, %s39
    %p41 = scmp.eq.s32.totalorder %s15, 0
    %p42 = por %p40, %p41
    %s44 = sadd.s32 %s43, 1
    %p47 = scmp.eq.s32.totalorder %s9, 1
    %p48 = scmp.ne.s32.totalorder %s43, %s45
    %p49 = scmp.eq.s32.totalorder %s9, 0
    %p50 = por %p48, %p49
    %p51 = scmp.ne.s32.totalorder %s43, %s45
    %p52 = scmp.eq.s32.totalorder %s14, 1
    %p53 = por %p51, %p52
    %p54 = scmp.ne.s32.totalorder %s45, %s46
    %p55 = scmp.eq.s32.totalorder %s14, 0
    %p56 = por %p54, %p55
    %p57 = scmp.ne.s32.totalorder %s45, %s46
    %p58 = scmp.eq.s32.totalorder %s15, 1
    %p59 = por %p57, %p58
    %p61 = scmp.ne.s32.totalorder %s46, %s60
    %p62 = scmp.eq.s32.totalorder %s15, 0
    %p63 = por %p61, %p62
    %s65 = sadd.s32 %s64, 1
    %p68 = scmp.eq.s32.totalorder %s9, 1
    %p69 = scmp.ne.s32.totalorder %s64, %s66
    %p70 = scmp.eq.s32.totalorder %s9, 0
    %p71 = por %p69, %p70
    %p72 = scmp.ne.s32.totalorder %s64, %s66
    %p73 = scmp.eq.s32.totalorder %s14, 1
    %p74 = por %p72, %p73
    %p75 = scmp.ne.s32.totalorder %s66, %s67
    %p76 = scmp.eq.s32.totalorder %s14, 0
    %p77 = por %p75, %p76
    %p78 = scmp.ne.s32.totalorder %s66, %s67
    %p79 = scmp.eq.s32.totalorder %s15, 1
    %p80 = por %p78, %p79
    %p82 = scmp.ne.s32.totalorder %s67, %s81
    %p83 = scmp.eq.s32.totalorder %s15, 0
    %p84 = por %p82, %p83
    %s85 = ssub.s32 %s9, %s16
    %p86 = scmp.eq.s32.totalorder %s85, 0
    %s88 = sadd.s32 %s87, 1
    %s89 = scalar_select %p86, %s87, %s88
    %p92 = pneg %p86
    %p93 = scmp.eq.s32.totalorder %s9, 1
    %p94 = por %p92, %p93
    %p95 = scmp.ne.s32.totalorder %s87, %s90
    %p96 = scmp.eq.s32.totalorder %s9, 0
    %p97 = por %p95, %p96
    %p98 = scmp.ne.s32.totalorder %s87, %s90
    %p99 = scmp.eq.s32.totalorder %s14, 1
    %p100 = por %p98, %p99
    %p101 = scmp.ne.s32.totalorder %s90, %s91
    %p102 = scmp.eq.s32.totalorder %s14, 0
    %p103 = por %p101, %p102
    %p104 = scmp.ne.s32.totalorder %s90, %s91
    %p105 = scmp.eq.s32.totalorder %s15, 1
    %p106 = por %p104, %p105
    %p108 = scmp.ne.s32.totalorder %s91, %s107
    %p109 = scmp.eq.s32.totalorder %s15, 0
    %p110 = por %p108, %p109
    %p111 = scmp.le.s32.totalorder 1, %s9
    %p112 = scmp.lt.s32.totalorder %s9, 3
    %p113 = pnand %p111, %p112
    %p114 = pneg %p113
    // Predicated region
    $region9: #{nested_unet.31} parent=5 // pred_check
      _
    $region10: #{nested_unet.31} parent=5 // pred_check_branch
      %116 = sbr.rel (%p113) target = $region12
    $region11: #{nested_unet.31} parent=5 // pred_region
      %s117 = ssub.s32 %s9, 1
      // Predicated region
      $region13: #{nested_unet.31} parent=11 // pred_check
        %p118 = pneg %p56
      $region14: #{nested_unet.31} parent=11 // pred_check_branch
        %120 = sbr.rel (%p118) target = $region16
      $region15: #{nested_unet.31} parent=11 // pred_region
        _
      $region16: #{nested_unet.31} parent=11 // pred_fallthru
        _
      // Predicated region
      $region17: #{nested_unet.31} parent=11 // pred_check
        %p121 = pneg %p77
      $region18: #{nested_unet.31} parent=11 // pred_check_branch
        %123 = sbr.rel (%p121) target = $region20
      $region19: #{nested_unet.31} parent=11 // pred_region
        _
      $region20: #{nested_unet.31} parent=11 // pred_fallthru
        _
    $region12: #{nested_unet.31} parent=5 // pred_fallthru
      _
    %p124 = scmp.lt.s32.totalorder %s9, 2
    // Predicated region
    $region21: #{nested_unet.31} parent=5 // pred_check
      %p125 = pneg %p124
    $region22: #{nested_unet.31} parent=5 // pred_check_branch
      %127 = sbr.rel (%p125) target = $region24
    $region23: #{nested_unet.31} parent=5 // pred_region
      // Predicated region
      $region25: #{nested_unet.31} parent=23 // pred_check
        %p128 = pneg %p29
      $region26: #{nested_unet.31} parent=23 // pred_check_branch
        %130 = sbr.rel (%p128) target = $region28
      $region27: #{nested_unet.31} parent=23 // pred_region
        %p131 = scmp.lt.s32.totalorder %s9, 1
        %s132 = scalar_select %p131, %s9, 1
        %s133 = smul.addr %s132, 2
        %s134 = smul.addr %s133, 8
        %s135 = scalar_lea.vmem %s0, %s134
      $region28: #{nested_unet.31} parent=23 // pred_fallthru
        _
    $region24: #{nested_unet.31} parent=5 // pred_fallthru
      _
    %p136 = scmp.le.s32.totalorder 1, %s9
    %p137 = scmp.lt.s32.totalorder %s9, 3
    %p138 = pnand %p136, %p137
    %p139 = pneg %p138
    // Predicated region
    $region29: #{nested_unet.31} parent=5 // pred_check
      _
    $region30: #{nested_unet.31} parent=5 // pred_check_branch
      %141 = sbr.rel (%p138) target = $region32
    $region31: #{nested_unet.31} parent=5 // pred_region
      %s142 = ssub.s32 %s9, 1
      %p143 = scmp.lt.s32.totalorder %s14, 1
      %s144 = scalar_select %p143, %s14, 1
      %s145 = smul.addr %s144, 2
      %s146 = smul.addr %s145, 8
      %s147 = scalar_lea.vmem %s0, %s146
      %p148 = pneg %p35
      %p149 = pneg %p32
      %p150 = pneg %p56
      %p151 = pneg %p53
      %p152 = pneg %p77
      %p153 = pneg %p74
      %p154 = pneg %p103
      %p155 = pneg %p100
      %p156 = scmp.lt.s32.totalorder %s14, 1
      %s157 = scalar_select %p156, %s14, 1
      %s158 = smul.addr %s157, 2
      %s159 = smul.addr %s158, 8
      %s160 = scalar_lea.vmem %s3, %s159
      %p161 = scmp.lt.s32.totalorder %s14, 1
      %s162 = scalar_select %p161, %s14, 1
      %s163 = smul.addr %s162, 2
      %s164 = smul.addr %s163, 8
      %s165 = scalar_lea.vmem %s0, %s164
      %p166 = scmp.lt.s32.totalorder %s14, 1
      %s167 = scalar_select %p166, %s14, 1
      %s168 = smul.addr %s167, 2
      %s169 = smul.addr %s168, 8
      %s170 = scalar_lea.vmem %s3, %s169
      %v171 = vld [vmem:[%s165] sm:$0xff]
      %v172 = vld [vmem:[%s165 + $0x8] sm:$0xff]
      %v173 = vld [vmem:[%s1] sm:$0xff]
      %175 = vset.pattern.permute.xlu0 0
      %176 = vperm.xlu0 %175, %v173
      %v177 = vpop.permute.xlu0 %176
      %v179 = vmul.f32 %v171, %v177
      %v180 = vmul.f32 %v172, %v177
      %v181 = vld [vmem:[%s2] sm:$0xff]
      %183 = vset.pattern.permute.xlu0 0
      %184 = vperm.xlu0 %183, %v181
      %v185 = vpop.permute.xlu0 %184
      %v187 = vadd.f32 %v179, %v185
      %v188 = vadd.f32 %v180, %v185
      %v189 = vmax.f32 %v187, 0.0
      %v190 = vmax.f32 %v188, 0.0
      %191 = vst [vmem:[%s170] sm:$0xff] %v189
      %192 = vst [vmem:[%s170 + $0x8] sm:$0xff] %v190
      %p193 = scmp.lt.s32.totalorder %s14, 1
      %s194 = scalar_select %p193, %s14, 1
      %s195 = smul.addr %s194, 2
      %s196 = smul.addr %s195, 8
      %s197 = scalar_lea.vmem %s3, %s196
      // Predicated region
      $region33: #{nested_unet.31} parent=31 // pred_check
        %p198 = pneg %p100
      $region34: #{nested_unet.31} parent=31 // pred_check_branch
        %200 = sbr.rel (%p198) target = $region36
      $region35: #{nested_unet.31} parent=31 // pred_region
        _
      $region36: #{nested_unet.31} parent=31 // pred_fallthru
        _
    $region32: #{nested_unet.31} parent=5 // pred_fallthru
      _
    %p201 = scmp.le.s32.totalorder 2, %s9
    // Predicated region
    $region37: #{nested_unet.31} parent=5 // pred_check
      %p202 = pneg %p201
    $region38: #{nested_unet.31} parent=5 // pred_check_branch
      %204 = sbr.rel (%p202) target = $region40
    $region39: #{nested_unet.31} parent=5 // pred_region
      %s205 = ssub.s32 %s9, 2
      // Predicated region
      $region41: #{nested_unet.31} parent=39 // pred_check
        %p206 = pneg %p106
      $region42: #{nested_unet.31} parent=39 // pred_check_branch
        %208 = sbr.rel (%p206) target = $region44
      $region43: #{nested_unet.31} parent=39 // pred_region
        %p209 = scmp.lt.s32.totalorder %s15, 1
        %s210 = scalar_select %p209, %s15, 1
        %s211 = smul.addr %s210, 2
        %s212 = smul.addr %s211, 8
        %s213 = scalar_lea.vmem %s3, %s212
      $region44: #{nested_unet.31} parent=39 // pred_fallthru
        _
    $region40: #{nested_unet.31} parent=5 // pred_fallthru
      _
  $region6: #{nested_unet.31} parent=0 // loop_footer
    %s13 = sadd.s32 1, %s9
  $region7: #{nested_unet.31} parent=0 // loop_footer_branch
    %8 = sbr.rel target = $region3
  $region8: #{nested_unet.31} parent=0 // loop_exit
    _

// kernel: nested_unet.32
$region0: #{nested_unet.32}
  #allocation0 [shape = 'u32[]', space=smem, size = 0x4, offset = 0x4, fixed_abs, tag = 'smem constant byte address 0x4 - core index']
  #allocation1 [shape = 'u32[72,128]{1,0:T(1,128)}', space=vmem, size = 0x9000, scoped, tag = 'internal scratch']
  %s0 = inlined_call_operand.vmem [shape: f32[2,8,256], index: 0, kind: input, shape index: {}]
  %s1 = inlined_call_operand.vmem [shape: f32[8,1], index: 1, kind: input, shape index: {}]
  %s2 = inlined_call_operand.vmem [shape: f32[8,1], index: 2, kind: input, shape index: {}]
  %s3 = inlined_call_operand.vmem [shape: f32[8,1], index: 3, kind: input, shape index: {}]
  %s4 = inlined_call_operand.vmem [shape: f32[8,1], index: 4, kind: input, shape index: {}]
  %s5 = inlined_call_operand.vmem [shape: f32[2,8,256], index: 5, kind: output, shape index: {}]
  %s6 = sld [smem:[#allocation0]]
  $region53: #{nested_unet.32} parent=0
    _
  %s8 = ssub.s32 1, %s6
  %s9 = scalar_select 0, %s8, %s6
  loop: start=0, step=1, limit=4
  $region2: #{nested_unet.32} parent=0 // loop_pre_header
    _
  $region3: #{nested_unet.32} parent=0 // loop_header
    %s11 = sphi 0, %s15
    %p12 = scmp.ge.s32.totalorder %s11, 4
    %s21 = sphi 0, %s23
    %s24 = sphi 0, %s21
    %s25 = sphi 0, %s24
    %s41 = sphi 0, %s25
    %s45 = sphi 0, %s45
    %s47 = sphi 0, %s45
    %s48 = sphi 0, %s47
    %s62 = sphi 0, %s48
    %s66 = sphi 0, %s66
    %s68 = sphi 0, %s66
    %s69 = sphi 0, %s68
    %s83 = sphi 0, %s69
    %s87 = sphi 0, %s87
    %s89 = sphi 0, %s87
    %s90 = sphi 0, %s89
    %s104 = sphi 0, %s90
    %s108 = sphi 0, %s108
    %s110 = sphi 0, %s108
    %s111 = sphi 0, %s110
    %s125 = sphi 0, %s111
    %s131 = sphi 0, %s133
    %s134 = sphi 0, %s131
    %s135 = sphi 0, %s134
    %s151 = sphi 0, %s135
  $region4: #{nested_unet.32} parent=0 // loop_header_branch
    %14 = sbr.rel (%p12) target = $region8
  $region5: #{nested_unet.32} parent=0 // loop_body
    %s16 = ssub.s32 %s11, 1
    %s17 = ssub.s32 %s11, 2
    %s18 = sadd.s32 %s11, 1
    %s19 = ssub.s32 %s11, %s18
    %p20 = scmp.eq.s32.totalorder %s19, 0
    %s22 = sadd.s32 %s21, 1
    %s23 = scalar_select %p20, %s21, %s22
    %p26 = pneg %p20
    %p27 = scmp.eq.s32.totalorder %s11, 1
    %p28 = por %p26, %p27
    %p29 = scmp.ne.s32.totalorder %s21, %s24
    %p30 = scmp.eq.s32.totalorder %s11, 0
    %p31 = por %p29, %p30
    %p32 = scmp.ne.s32.totalorder %s21, %s24
    %p33 = scmp.eq.s32.totalorder %s16, 1
    %p34 = por %p32, %p33
    %p35 = scmp.ne.s32.totalorder %s24, %s25
    %p36 = scmp.eq.s32.totalorder %s16, 0
    %p37 = por %p35, %p36
    %p38 = scmp.ne.s32.totalorder %s24, %s25
    %p39 = scmp.eq.s32.totalorder %s17, 1
    %p40 = por %p38, %p39
    %p42 = scmp.ne.s32.totalorder %s25, %s41
    %p43 = scmp.eq.s32.totalorder %s17, 0
    %p44 = por %p42, %p43
    %s46 = sadd.s32 %s45, 1
    %p49 = scmp.eq.s32.totalorder %s11, 1
    %p50 = scmp.ne.s32.totalorder %s45, %s47
    %p51 = scmp.eq.s32.totalorder %s11, 0
    %p52 = por %p50, %p51
    %p53 = scmp.ne.s32.totalorder %s45, %s47
    %p54 = scmp.eq.s32.totalorder %s16, 1
    %p55 = por %p53, %p54
    %p56 = scmp.ne.s32.totalorder %s47, %s48
    %p57 = scmp.eq.s32.totalorder %s16, 0
    %p58 = por %p56, %p57
    %p59 = scmp.ne.s32.totalorder %s47, %s48
    %p60 = scmp.eq.s32.totalorder %s17, 1
    %p61 = por %p59, %p60
    %p63 = scmp.ne.s32.totalorder %s48, %s62
    %p64 = scmp.eq.s32.totalorder %s17, 0
    %p65 = por %p63, %p64
    %s67 = sadd.s32 %s66, 1
    %p70 = scmp.eq.s32.totalorder %s11, 1
    %p71 = scmp.ne.s32.totalorder %s66, %s68
    %p72 = scmp.eq.s32.totalorder %s11, 0
    %p73 = por %p71, %p72
    %p74 = scmp.ne.s32.totalorder %s66, %s68
    %p75 = scmp.eq.s32.totalorder %s16, 1
    %p76 = por %p74, %p75
    %p77 = scmp.ne.s32.totalorder %s68, %s69
    %p78 = scmp.eq.s32.totalorder %s16, 0
    %p79 = por %p77, %p78
    %p80 = scmp.ne.s32.totalorder %s68, %s69
    %p81 = scmp.eq.s32.totalorder %s17, 1
    %p82 = por %p80, %p81
    %p84 = scmp.ne.s32.totalorder %s69, %s83
    %p85 = scmp.eq.s32.totalorder %s17, 0
    %p86 = por %p84, %p85
    %s88 = sadd.s32 %s87, 1
    %p91 = scmp.eq.s32.totalorder %s11, 1
    %p92 = scmp.ne.s32.totalorder %s87, %s89
    %p93 = scmp.eq.s32.totalorder %s11, 0
    %p94 = por %p92, %p93
    %p95 = scmp.ne.s32.totalorder %s87, %s89
    %p96 = scmp.eq.s32.totalorder %s16, 1
    %p97 = por %p95, %p96
    %p98 = scmp.ne.s32.totalorder %s89, %s90
    %p99 = scmp.eq.s32.totalorder %s16, 0
    %p100 = por %p98, %p99
    %p101 = scmp.ne.s32.totalorder %s89, %s90
    %p102 = scmp.eq.s32.totalorder %s17, 1
    %p103 = por %p101, %p102
    %p105 = scmp.ne.s32.totalorder %s90, %s104
    %p106 = scmp.eq.s32.totalorder %s17, 0
    %p107 = por %p105, %p106
    %s109 = sadd.s32 %s108, 1
    %p112 = scmp.eq.s32.totalorder %s11, 1
    %p113 = scmp.ne.s32.totalorder %s108, %s110
    %p114 = scmp.eq.s32.totalorder %s11, 0
    %p115 = por %p113, %p114
    %p116 = scmp.ne.s32.totalorder %s108, %s110
    %p117 = scmp.eq.s32.totalorder %s16, 1
    %p118 = por %p116, %p117
    %p119 = scmp.ne.s32.totalorder %s110, %s111
    %p120 = scmp.eq.s32.totalorder %s16, 0
    %p121 = por %p119, %p120
    %p122 = scmp.ne.s32.totalorder %s110, %s111
    %p123 = scmp.eq.s32.totalorder %s17, 1
    %p124 = por %p122, %p123
    %p126 = scmp.ne.s32.totalorder %s111, %s125
    %p127 = scmp.eq.s32.totalorder %s17, 0
    %p128 = por %p126, %p127
    %s129 = ssub.s32 %s11, %s18
    %p130 = scmp.eq.s32.totalorder %s129, 0
    %s132 = sadd.s32 %s131, 1
    %s133 = scalar_select %p130, %s131, %s132
    %p136 = pneg %p130
    %p137 = scmp.eq.s32.totalorder %s11, 1
    %p138 = por %p136, %p137
    %p139 = scmp.ne.s32.totalorder %s131, %s134
    %p140 = scmp.eq.s32.totalorder %s11, 0
    %p141 = por %p139, %p140
    %p142 = scmp.ne.s32.totalorder %s131, %s134
    %p143 = scmp.eq.s32.totalorder %s16, 1
    %p144 = por %p142, %p143
    %p145 = scmp.ne.s32.totalorder %s134, %s135
    %p146 = scmp.eq.s32.totalorder %s16, 0
    %p147 = por %p145, %p146
    %p148 = scmp.ne.s32.totalorder %s134, %s135
    %p149 = scmp.eq.s32.totalorder %s17, 1
    %p150 = por %p148, %p149
    %p152 = scmp.ne.s32.totalorder %s135, %s151
    %p153 = scmp.eq.s32.totalorder %s17, 0
    %p154 = por %p152, %p153
    %p155 = scmp.le.s32.totalorder 1, %s11
    %p156 = scmp.lt.s32.totalorder %s11, 3
    %p157 = pnand %p155, %p156
    %p158 = pneg %p157
    // Predicated region
    $region9: #{nested_unet.32} parent=5 // pred_check
      _
    $region10: #{nested_unet.32} parent=5 // pred_check_branch
      %160 = sbr.rel (%p157) target = $region12
    $region11: #{nested_unet.32} parent=5 // pred_region
      %s161 = ssub.s32 %s11, 1
      // Predicated region
      $region13: #{nested_unet.32} parent=11 // pred_check
        %p162 = pneg %p58
      $region14: #{nested_unet.32} parent=11 // pred_check_branch
        %164 = sbr.rel (%p162) target = $region16
      $region15: #{nested_unet.32} parent=11 // pred_region
        _
      $region16: #{nested_unet.32} parent=11 // pred_fallthru
        _
      // Predicated region
      $region17: #{nested_unet.32} parent=11 // pred_check
        %p165 = pneg %p79
      $region18: #{nested_unet.32} parent=11 // pred_check_branch
        %167 = sbr.rel (%p165) target = $region20
      $region19: #{nested_unet.32} parent=11 // pred_region
        _
      $region20: #{nested_unet.32} parent=11 // pred_fallthru
        _
      // Predicated region
      $region21: #{nested_unet.32} parent=11 // pred_check
        %p168 = pneg %p100
      $region22: #{nested_unet.32} parent=11 // pred_check_branch
        %170 = sbr.rel (%p168) target = $region24
      $region23: #{nested_unet.32} parent=11 // pred_region
        _
      $region24: #{nested_unet.32} parent=11 // pred_fallthru
        _
      // Predicated region
      $region25: #{nested_unet.32} parent=11 // pred_check
        %p171 = pneg %p121
      $region26: #{nested_unet.32} parent=11 // pred_check_branch
        %173 = sbr.rel (%p171) target = $region28
      $region27: #{nested_unet.32} parent=11 // pred_region
        _
      $region28: #{nested_unet.32} parent=11 // pred_fallthru
        _
    $region12: #{nested_unet.32} parent=5 // pred_fallthru
      _
    %p174 = scmp.lt.s32.totalorder %s11, 2
    // Predicated region
    $region29: #{nested_unet.32} parent=5 // pred_check
      %p175 = pneg %p174
    $region30: #{nested_unet.32} parent=5 // pred_check_branch
      %177 = sbr.rel (%p175) target = $region32
    $region31: #{nested_unet.32} parent=5 // pred_region
      // Predicated region
      $region33: #{nested_unet.32} parent=31 // pred_check
        %p178 = pneg %p31
      $region34: #{nested_unet.32} parent=31 // pred_check_branch
        %180 = sbr.rel (%p178) target = $region36
      $region35: #{nested_unet.32} parent=31 // pred_region
        %p181 = scmp.lt.s32.totalorder %s11, 1
        %s182 = scalar_select %p181, %s11, 1
        %s183 = smul.addr %s182, 2
        %s184 = smul.addr %s183, 8
        %s185 = scalar_lea.vmem %s0, %s184
      $region36: #{nested_unet.32} parent=31 // pred_fallthru
        _
    $region32: #{nested_unet.32} parent=5 // pred_fallthru
      _
    %p186 = scmp.le.s32.totalorder 1, %s11
    %p187 = scmp.lt.s32.totalorder %s11, 3
    %p188 = pnand %p186, %p187
    %p189 = pneg %p188
    // Predicated region
    $region37: #{nested_unet.32} parent=5 // pred_check
      _
    $region38: #{nested_unet.32} parent=5 // pred_check_branch
      %191 = sbr.rel (%p188) target = $region40
    $region39: #{nested_unet.32} parent=5 // pred_region
      %s192 = ssub.s32 %s11, 1
      %p193 = scmp.lt.s32.totalorder %s16, 1
      %s194 = scalar_select %p193, %s16, 1
      %s195 = smul.addr %s194, 2
      %s196 = smul.addr %s195, 8
      %s197 = scalar_lea.vmem %s0, %s196
      %p198 = pneg %p37
      %p199 = pneg %p34
      %p200 = pneg %p58
      %p201 = pneg %p55
      %p202 = pneg %p79
      %p203 = pneg %p76
      %p204 = pneg %p100
      %p205 = pneg %p97
      %p206 = pneg %p121
      %p207 = pneg %p118
      %p208 = pneg %p147
      %p209 = pneg %p144
      %p210 = scmp.lt.s32.totalorder %s16, 1
      %s211 = scalar_select %p210, %s16, 1
      %s212 = smul.addr %s211, 2
      %s213 = smul.addr %s212, 8
      %s214 = scalar_lea.vmem %s5, %s213
      %p215 = scmp.lt.s32.totalorder %s16, 1
      %s216 = scalar_select %p215, %s16, 1
      %s217 = smul.addr %s216, 2
      %s218 = smul.addr %s217, 8
      %s219 = scalar_lea.vmem %s0, %s218
      %p220 = scmp.lt.s32.totalorder %s16, 1
      %s221 = scalar_select %p220, %s16, 1
      %s222 = smul.addr %s221, 2
      %s223 = smul.addr %s222, 8
      %s224 = scalar_lea.vmem %s5, %s223
      %v225 = vld [vmem:[%s219] sm:$0xff]
      %v226 = vld [vmem:[%s219 + $0x8] sm:$0xff]
      %v227 = vld [vmem:[%s1] sm:$0xff]
      %229 = vset.pattern.permute.xlu0 0
      %230 = vperm.xlu0 %229, %v227
      %v231 = vpop.permute.xlu0 %230
      %v233 = vmul.f32 %v225, %v231
      %v234 = vmul.f32 %v226, %v231
      %v235 = vld [vmem:[%s2] sm:$0xff]
      %237 = vset.pattern.permute.xlu0 0
      %238 = vperm.xlu0 %237, %v235
      %v239 = vpop.permute.xlu0 %238
      %v241 = vadd.f32 %v233, %v239
      %v242 = vadd.f32 %v234, %v239
      %v243 = vmax.f32 %v241, 0.0
      %v244 = vmax.f32 %v242, 0.0
      %v245 = vadd.f32 %v243, %v244
      %246 = vadd.xlane.f32.xlu0 %v245
      %v247 = vpop.xlane.xlu0 %246
      %v248 = vmul.f32 %v247, 0.00390625
      %v249 = vld [vmem:[%s3] sm:$0xff]
      %v250 = vmul.f32 %v249, %v248
      %vm251 = vcmask 7168
      %v252 = vsel %vm251, %v250, 0.0
      %v253 = vrot.slane %v252, 4
      %v254 = vadd.f32 %v252, %v253
      %v255 = vrot.slane %v254, 2
      %v256 = vadd.f32 %v254, %v255
      %v257 = vrot.slane %v256, 1
      %v258 = vadd.f32 %v256, %v257
      %v259 = vmax.f32 %v258, 0.0
      %v260 = vld [vmem:[%s4] sm:$0xff]
      %v261 = vmul.f32 %v260, %v259
      %v262 = vadd.f32 %v261, 0.0
      %v263 = vxor.u32 %v262, 2147483648
      %v264 = vmul.f32 %v263, 1.442695
      %v265 = vpow.pop %v264
      %v266 = vadd.f32 %v265, 1.0
      %v267 = vrcp.pop %v266
      %v268 = vmul.f32 %v266, %v267
      %v269 = vsub.f32 1.0, %v268
      %v270 = vmul.f32 %v267, %v269
      %v271 = vadd.f32 %v267, %v270
      %vm272 = vweird.f32 %v266
      %vm273 = vweird.f32 %v267
      %vm274 = vmor %vm272, %vm273
      %v275 = vsel %vm274, %v267, %v271
      %v276 = vand.u32 2147483647, %v266
      %vm277 = vcmp.eq.f32.partialorder %v276, 8.507059e+37
      %v278 = vand.u32 %v266, 2147483648
      %v279 = vor.u32 1.1754944e-38, %v278
      %v280 = vsel %vm277, %v279, %v275
      %v281 = vmul.f32 1.0, %v280
      %283 = vset.pattern.permute.xlu0 0
      %284 = vperm.xlu0 %283, %v281
      %v285 = vpop.permute.xlu0 %284
      %v287 = vmul.f32 %v243, %v285
      %v288 = vmul.f32 %v244, %v285
      %289 = vst [vmem:[%s224] sm:$0xff] %v287
      %290 = vst [vmem:[%s224 + $0x8] sm:$0xff] %v288
      %p291 = scmp.lt.s32.totalorder %s16, 1
      %s292 = scalar_select %p291, %s16, 1
      %s293 = smul.addr %s292, 2
      %s294 = smul.addr %s293, 8
      %s295 = scalar_lea.vmem %s5, %s294
      // Predicated region
      $region41: #{nested_unet.32} parent=39 // pred_check
        %p296 = pneg %p144
      $region42: #{nested_unet.32} parent=39 // pred_check_branch
        %298 = sbr.rel (%p296) target = $region44
      $region43: #{nested_unet.32} parent=39 // pred_region
        _
      $region44: #{nested_unet.32} parent=39 // pred_fallthru
        _
    $region40: #{nested_unet.32} parent=5 // pred_fallthru
      _
    %p299 = scmp.le.s32.totalorder 2, %s11
    // Predicated region
    $region45: #{nested_unet.32} parent=5 // pred_check
      %p300 = pneg %p299
    $region46: #{nested_unet.32} parent=5 // pred_check_branch
      %302 = sbr.rel (%p300) target = $region48
    $region47: #{nested_unet.32} parent=5 // pred_region
      %s303 = ssub.s32 %s11, 2
      // Predicated region
      $region49: #{nested_unet.32} parent=47 // pred_check
        %p304 = pneg %p150
      $region50: #{nested_unet.32} parent=47 // pred_check_branch
        %306 = sbr.rel (%p304) target = $region52
      $region51: #{nested_unet.32} parent=47 // pred_region
        %p307 = scmp.lt.s32.totalorder %s17, 1
        %s308 = scalar_select %p307, %s17, 1
        %s309 = smul.addr %s308, 2
        %s310 = smul.addr %s309, 8
        %s311 = scalar_lea.vmem %s5, %s310
      $region52: #{nested_unet.32} parent=47 // pred_fallthru
        _
    $region48: #{nested_unet.32} parent=5 // pred_fallthru
      _
  $region6: #{nested_unet.32} parent=0 // loop_footer
    %s15 = sadd.s32 1, %s11
  $region7: #{nested_unet.32} parent=0 // loop_footer_branch
    %10 = sbr.rel target = $region3
  $region8: #{nested_unet.32} parent=0 // loop_exit
    _

// kernel: nested_unet.33
$region0: #{nested_unet.33}
  #allocation0 [shape = 'u32[]', space=smem, size = 0x4, offset = 0x4, fixed_abs, tag = 'smem constant byte address 0x4 - core index']
  #allocation1 [shape = 'u32[72,128]{1,0:T(1,128)}', space=vmem, size = 0x9000, scoped, tag = 'internal scratch']
  %s0 = inlined_call_operand.vmem [shape: f32[2,16,64], index: 0, kind: input, shape index: {}]
  %s1 = inlined_call_operand.vmem [shape: f32[16,1], index: 1, kind: input, shape index: {}]
  %s2 = inlined_call_operand.vmem [shape: f32[16,1], index: 2, kind: input, shape index: {}]
  %s3 = inlined_call_operand.vmem [shape: f32[2,16,64], index: 3, kind: output, shape index: {}]
  %s4 = sld [smem:[#allocation0]]
  $region45: #{nested_unet.33} parent=0
    _
  %s6 = ssub.s32 1, %s4
  %s7 = scalar_select 0, %s6, %s4
  loop: start=0, step=1, limit=4
  $region2: #{nested_unet.33} parent=0 // loop_pre_header
    _
  $region3: #{nested_unet.33} parent=0 // loop_header
    %s9 = sphi 0, %s13
    %p10 = scmp.ge.s32.totalorder %s9, 4
    %s19 = sphi 0, %s21
    %s22 = sphi 0, %s19
    %s23 = sphi 0, %s22
    %s39 = sphi 0, %s23
    %s43 = sphi 0, %s43
    %s45 = sphi 0, %s43
    %s46 = sphi 0, %s45
    %s60 = sphi 0, %s46
    %s64 = sphi 0, %s64
    %s66 = sphi 0, %s64
    %s67 = sphi 0, %s66
    %s81 = sphi 0, %s67
    %s87 = sphi 0, %s89
    %s90 = sphi 0, %s87
    %s91 = sphi 0, %s90
    %s107 = sphi 0, %s91
  $region4: #{nested_unet.33} parent=0 // loop_header_branch
    %12 = sbr.rel (%p10) target = $region8
  $region5: #{nested_unet.33} parent=0 // loop_body
    %s14 = ssub.s32 %s9, 1
    %s15 = ssub.s32 %s9, 2
    %s16 = sadd.s32 %s9, 1
    %s17 = ssub.s32 %s9, %s16
    %p18 = scmp.eq.s32.totalorder %s17, 0
    %s20 = sadd.s32 %s19, 1
    %s21 = scalar_select %p18, %s19, %s20
    %p24 = pneg %p18
    %p25 = scmp.eq.s32.totalorder %s9, 1
    %p26 = por %p24, %p25
    %p27 = scmp.ne.s32.totalorder %s19, %s22
    %p28 = scmp.eq.s32.totalorder %s9, 0
    %p29 = por %p27, %p28
    %p30 = scmp.ne.s32.totalorder %s19, %s22
    %p31 = scmp.eq.s32.totalorder %s14, 1
    %p32 = por %p30, %p31
    %p33 = scmp.ne.s32.totalorder %s22, %s23
    %p34 = scmp.eq.s32.totalorder %s14, 0
    %p35 = por %p33, %p34
    %p36 = scmp.ne.s32.totalorder %s22, %s23
    %p37 = scmp.eq.s32.totalorder %s15, 1
    %p38 = por %p36, %p37
    %p40 = scmp.ne.s32.totalorder %s23, %s39
    %p41 = scmp.eq.s32.totalorder %s15, 0
    %p42 = por %p40, %p41
    %s44 = sadd.s32 %s43, 1
    %p47 = scmp.eq.s32.totalorder %s9, 1
    %p48 = scmp.ne.s32.totalorder %s43, %s45
    %p49 = scmp.eq.s32.totalorder %s9, 0
    %p50 = por %p48, %p49
    %p51 = scmp.ne.s32.totalorder %s43, %s45
    %p52 = scmp.eq.s32.totalorder %s14, 1
    %p53 = por %p51, %p52
    %p54 = scmp.ne.s32.totalorder %s45, %s46
    %p55 = scmp.eq.s32.totalorder %s14, 0
    %p56 = por %p54, %p55
    %p57 = scmp.ne.s32.totalorder %s45, %s46
    %p58 = scmp.eq.s32.totalorder %s15, 1
    %p59 = por %p57, %p58
    %p61 = scmp.ne.s32.totalorder %s46, %s60
    %p62 = scmp.eq.s32.totalorder %s15, 0
    %p63 = por %p61, %p62
    %s65 = sadd.s32 %s64, 1
    %p68 = scmp.eq.s32.totalorder %s9, 1
    %p69 = scmp.ne.s32.totalorder %s64, %s66
    %p70 = scmp.eq.s32.totalorder %s9, 0
    %p71 = por %p69, %p70
    %p72 = scmp.ne.s32.totalorder %s64, %s66
    %p73 = scmp.eq.s32.totalorder %s14, 1
    %p74 = por %p72, %p73
    %p75 = scmp.ne.s32.totalorder %s66, %s67
    %p76 = scmp.eq.s32.totalorder %s14, 0
    %p77 = por %p75, %p76
    %p78 = scmp.ne.s32.totalorder %s66, %s67
    %p79 = scmp.eq.s32.totalorder %s15, 1
    %p80 = por %p78, %p79
    %p82 = scmp.ne.s32.totalorder %s67, %s81
    %p83 = scmp.eq.s32.totalorder %s15, 0
    %p84 = por %p82, %p83
    %s85 = ssub.s32 %s9, %s16
    %p86 = scmp.eq.s32.totalorder %s85, 0
    %s88 = sadd.s32 %s87, 1
    %s89 = scalar_select %p86, %s87, %s88
    %p92 = pneg %p86
    %p93 = scmp.eq.s32.totalorder %s9, 1
    %p94 = por %p92, %p93
    %p95 = scmp.ne.s32.totalorder %s87, %s90
    %p96 = scmp.eq.s32.totalorder %s9, 0
    %p97 = por %p95, %p96
    %p98 = scmp.ne.s32.totalorder %s87, %s90
    %p99 = scmp.eq.s32.totalorder %s14, 1
    %p100 = por %p98, %p99
    %p101 = scmp.ne.s32.totalorder %s90, %s91
    %p102 = scmp.eq.s32.totalorder %s14, 0
    %p103 = por %p101, %p102
    %p104 = scmp.ne.s32.totalorder %s90, %s91
    %p105 = scmp.eq.s32.totalorder %s15, 1
    %p106 = por %p104, %p105
    %p108 = scmp.ne.s32.totalorder %s91, %s107
    %p109 = scmp.eq.s32.totalorder %s15, 0
    %p110 = por %p108, %p109
    %p111 = scmp.le.s32.totalorder 1, %s9
    %p112 = scmp.lt.s32.totalorder %s9, 3
    %p113 = pnand %p111, %p112
    %p114 = pneg %p113
    // Predicated region
    $region9: #{nested_unet.33} parent=5 // pred_check
      _
    $region10: #{nested_unet.33} parent=5 // pred_check_branch
      %116 = sbr.rel (%p113) target = $region12
    $region11: #{nested_unet.33} parent=5 // pred_region
      %s117 = ssub.s32 %s9, 1
      // Predicated region
      $region13: #{nested_unet.33} parent=11 // pred_check
        %p118 = pneg %p56
      $region14: #{nested_unet.33} parent=11 // pred_check_branch
        %120 = sbr.rel (%p118) target = $region16
      $region15: #{nested_unet.33} parent=11 // pred_region
        _
      $region16: #{nested_unet.33} parent=11 // pred_fallthru
        _
      // Predicated region
      $region17: #{nested_unet.33} parent=11 // pred_check
        %p121 = pneg %p77
      $region18: #{nested_unet.33} parent=11 // pred_check_branch
        %123 = sbr.rel (%p121) target = $region20
      $region19: #{nested_unet.33} parent=11 // pred_region
        _
      $region20: #{nested_unet.33} parent=11 // pred_fallthru
        _
    $region12: #{nested_unet.33} parent=5 // pred_fallthru
      _
    %p124 = scmp.lt.s32.totalorder %s9, 2
    // Predicated region
    $region21: #{nested_unet.33} parent=5 // pred_check
      %p125 = pneg %p124
    $region22: #{nested_unet.33} parent=5 // pred_check_branch
      %127 = sbr.rel (%p125) target = $region24
    $region23: #{nested_unet.33} parent=5 // pred_region
      // Predicated region
      $region25: #{nested_unet.33} parent=23 // pred_check
        %p128 = pneg %p29
      $region26: #{nested_unet.33} parent=23 // pred_check_branch
        %130 = sbr.rel (%p128) target = $region28
      $region27: #{nested_unet.33} parent=23 // pred_region
        %p131 = scmp.lt.s32.totalorder %s9, 1
        %s132 = scalar_select %p131, %s9, 1
        %s133 = smul.addr %s132, 2
        %s134 = smul.addr %s133, 8
        %s135 = scalar_lea.vmem %s0, %s134
      $region28: #{nested_unet.33} parent=23 // pred_fallthru
        _
    $region24: #{nested_unet.33} parent=5 // pred_fallthru
      _
    %p136 = scmp.le.s32.totalorder 1, %s9
    %p137 = scmp.lt.s32.totalorder %s9, 3
    %p138 = pnand %p136, %p137
    %p139 = pneg %p138
    // Predicated region
    $region29: #{nested_unet.33} parent=5 // pred_check
      _
    $region30: #{nested_unet.33} parent=5 // pred_check_branch
      %141 = sbr.rel (%p138) target = $region32
    $region31: #{nested_unet.33} parent=5 // pred_region
      %s142 = ssub.s32 %s9, 1
      %p143 = scmp.lt.s32.totalorder %s14, 1
      %s144 = scalar_select %p143, %s14, 1
      %s145 = smul.addr %s144, 2
      %s146 = smul.addr %s145, 8
      %s147 = scalar_lea.vmem %s0, %s146
      %p148 = pneg %p35
      %p149 = pneg %p32
      %p150 = pneg %p56
      %p151 = pneg %p53
      %p152 = pneg %p77
      %p153 = pneg %p74
      %p154 = pneg %p103
      %p155 = pneg %p100
      %p156 = scmp.lt.s32.totalorder %s14, 1
      %s157 = scalar_select %p156, %s14, 1
      %s158 = smul.addr %s157, 2
      %s159 = smul.addr %s158, 8
      %s160 = scalar_lea.vmem %s3, %s159
      %p161 = scmp.lt.s32.totalorder %s14, 1
      %s162 = scalar_select %p161, %s14, 1
      %s163 = smul.addr %s162, 2
      %s164 = smul.addr %s163, 8
      %s165 = scalar_lea.vmem %s0, %s164
      %p166 = scmp.lt.s32.totalorder %s14, 1
      %s167 = scalar_select %p166, %s14, 1
      %s168 = smul.addr %s167, 2
      %s169 = smul.addr %s168, 8
      %s170 = scalar_lea.vmem %s3, %s169
      %v171 = vld [vmem:[%s165] sm:$0xff]
      %v172 = vld [vmem:[%s165 + $0x8] sm:$0xff]
      %v173 = vld [vmem:[%s1] sm:$0xff]
      %v174 = vld [vmem:[%s1 + $0x8] sm:$0xff]
      %176 = vset.pattern.permute.xlu0 0
      %177 = vperm.xlu0 %176, %v173
      %v178 = vpop.permute.xlu0 %177
      %181 = vset.pattern.permute.xlu0 0
      %182 = vperm.xlu0 %181, %v174
      %v183 = vpop.permute.xlu0 %182
      %v185 = vmul.f32 %v171, %v178
      %v186 = vmul.f32 %v172, %v183
      %v187 = vld [vmem:[%s2] sm:$0xff]
      %v188 = vld [vmem:[%s2 + $0x8] sm:$0xff]
      %190 = vset.pattern.permute.xlu0 0
      %191 = vperm.xlu0 %190, %v187
      %v192 = vpop.permute.xlu0 %191
      %195 = vset.pattern.permute.xlu0 0
      %196 = vperm.xlu0 %195, %v188
      %v197 = vpop.permute.xlu0 %196
      %v199 = vadd.f32 %v185, %v192
      %v200 = vadd.f32 %v186, %v197
      %v201 = vmax.f32 %v199, 0.0
      %v202 = vmax.f32 %v200, 0.0
      %vm203 = vcmask 523264
      %204 = vst.msk [vmem:[%s170] sm:$0xff] %vm203, %v201
      %205 = vst.msk [vmem:[%s170 + $0x8] sm:$0xff] %vm203, %v202
      %p206 = scmp.lt.s32.totalorder %s14, 1
      %s207 = scalar_select %p206, %s14, 1
      %s208 = smul.addr %s207, 2
      %s209 = smul.addr %s208, 8
      %s210 = scalar_lea.vmem %s3, %s209
      // Predicated region
      $region33: #{nested_unet.33} parent=31 // pred_check
        %p211 = pneg %p100
      $region34: #{nested_unet.33} parent=31 // pred_check_branch
        %213 = sbr.rel (%p211) target = $region36
      $region35: #{nested_unet.33} parent=31 // pred_region
        _
      $region36: #{nested_unet.33} parent=31 // pred_fallthru
        _
    $region32: #{nested_unet.33} parent=5 // pred_fallthru
      _
    %p214 = scmp.le.s32.totalorder 2, %s9
    // Predicated region
    $region37: #{nested_unet.33} parent=5 // pred_check
      %p215 = pneg %p214
    $region38: #{nested_unet.33} parent=5 // pred_check_branch
      %217 = sbr.rel (%p215) target = $region40
    $region39: #{nested_unet.33} parent=5 // pred_region
      %s218 = ssub.s32 %s9, 2
      // Predicated region
      $region41: #{nested_unet.33} parent=39 // pred_check
        %p219 = pneg %p106
      $region42: #{nested_unet.33} parent=39 // pred_check_branch
        %221 = sbr.rel (%p219) target = $region44
      $region43: #{nested_unet.33} parent=39 // pred_region
        %p222 = scmp.lt.s32.totalorder %s15, 1
        %s223 = scalar_select %p222, %s15, 1
        %s224 = smul.addr %s223, 2
        %s225 = smul.addr %s224, 8
        %s226 = scalar_lea.vmem %s3, %s225
      $region44: #{nested_unet.33} parent=39 // pred_fallthru
        _
    $region40: #{nested_unet.33} parent=5 // pred_fallthru
      _
  $region6: #{nested_unet.33} parent=0 // loop_footer
    %s13 = sadd.s32 1, %s9
  $region7: #{nested_unet.33} parent=0 // loop_footer_branch
    %8 = sbr.rel target = $region3
  $region8: #{nested_unet.33} parent=0 // loop_exit
    _

// kernel: nested_unet.34
$region0: #{nested_unet.34}
  #allocation0 [shape = 'u32[]', space=smem, size = 0x4, offset = 0x4, fixed_abs, tag = 'smem constant byte address 0x4 - core index']
  #allocation1 [shape = 'u32[72,128]{1,0:T(1,128)}', space=vmem, size = 0x9000, scoped, tag = 'internal scratch']
  %s0 = inlined_call_operand.vmem [shape: f32[2,16,64], index: 0, kind: input, shape index: {}]
  %s1 = inlined_call_operand.vmem [shape: f32[16,1], index: 1, kind: input, shape index: {}]
  %s2 = inlined_call_operand.vmem [shape: f32[16,1], index: 2, kind: input, shape index: {}]
  %s3 = inlined_call_operand.vmem [shape: f32[16,2], index: 3, kind: input, shape index: {}]
  %s4 = inlined_call_operand.vmem [shape: f32[16,2], index: 4, kind: input, shape index: {}]
  %s5 = inlined_call_operand.vmem [shape: f32[2,16,64], index: 5, kind: output, shape index: {}]
  %s6 = sld [smem:[#allocation0]]
  $region53: #{nested_unet.34} parent=0
    _
  %s8 = ssub.s32 1, %s6
  %s9 = scalar_select 0, %s8, %s6
  loop: start=0, step=1, limit=4
  $region2: #{nested_unet.34} parent=0 // loop_pre_header
    _
  $region3: #{nested_unet.34} parent=0 // loop_header
    %s11 = sphi 0, %s15
    %p12 = scmp.ge.s32.totalorder %s11, 4
    %s21 = sphi 0, %s23
    %s24 = sphi 0, %s21
    %s25 = sphi 0, %s24
    %s41 = sphi 0, %s25
    %s45 = sphi 0, %s45
    %s47 = sphi 0, %s45
    %s48 = sphi 0, %s47
    %s62 = sphi 0, %s48
    %s66 = sphi 0, %s66
    %s68 = sphi 0, %s66
    %s69 = sphi 0, %s68
    %s83 = sphi 0, %s69
    %s87 = sphi 0, %s87
    %s89 = sphi 0, %s87
    %s90 = sphi 0, %s89
    %s104 = sphi 0, %s90
    %s108 = sphi 0, %s108
    %s110 = sphi 0, %s108
    %s111 = sphi 0, %s110
    %s125 = sphi 0, %s111
    %s131 = sphi 0, %s133
    %s134 = sphi 0, %s131
    %s135 = sphi 0, %s134
    %s151 = sphi 0, %s135
  $region4: #{nested_unet.34} parent=0 // loop_header_branch
    %14 = sbr.rel (%p12) target = $region8
  $region5: #{nested_unet.34} parent=0 // loop_body
    %s16 = ssub.s32 %s11, 1
    %s17 = ssub.s32 %s11, 2
    %s18 = sadd.s32 %s11, 1
    %s19 = ssub.s32 %s11, %s18
    %p20 = scmp.eq.s32.totalorder %s19, 0
    %s22 = sadd.s32 %s21, 1
    %s23 = scalar_select %p20, %s21, %s22
    %p26 = pneg %p20
    %p27 = scmp.eq.s32.totalorder %s11, 1
    %p28 = por %p26, %p27
    %p29 = scmp.ne.s32.totalorder %s21, %s24
    %p30 = scmp.eq.s32.totalorder %s11, 0
    %p31 = por %p29, %p30
    %p32 = scmp.ne.s32.totalorder %s21, %s24
    %p33 = scmp.eq.s32.totalorder %s16, 1
    %p34 = por %p32, %p33
    %p35 = scmp.ne.s32.totalorder %s24, %s25
    %p36 = scmp.eq.s32.totalorder %s16, 0
    %p37 = por %p35, %p36
    %p38 = scmp.ne.s32.totalorder %s24, %s25
    %p39 = scmp.eq.s32.totalorder %s17, 1
    %p40 = por %p38, %p39
    %p42 = scmp.ne.s32.totalorder %s25, %s41
    %p43 = scmp.eq.s32.totalorder %s17, 0
    %p44 = por %p42, %p43
    %s46 = sadd.s32 %s45, 1
    %p49 = scmp.eq.s32.totalorder %s11, 1
    %p50 = scmp.ne.s32.totalorder %s45, %s47
    %p51 = scmp.eq.s32.totalorder %s11, 0
    %p52 = por %p50, %p51
    %p53 = scmp.ne.s32.totalorder %s45, %s47
    %p54 = scmp.eq.s32.totalorder %s16, 1
    %p55 = por %p53, %p54
    %p56 = scmp.ne.s32.totalorder %s47, %s48
    %p57 = scmp.eq.s32.totalorder %s16, 0
    %p58 = por %p56, %p57
    %p59 = scmp.ne.s32.totalorder %s47, %s48
    %p60 = scmp.eq.s32.totalorder %s17, 1
    %p61 = por %p59, %p60
    %p63 = scmp.ne.s32.totalorder %s48, %s62
    %p64 = scmp.eq.s32.totalorder %s17, 0
    %p65 = por %p63, %p64
    %s67 = sadd.s32 %s66, 1
    %p70 = scmp.eq.s32.totalorder %s11, 1
    %p71 = scmp.ne.s32.totalorder %s66, %s68
    %p72 = scmp.eq.s32.totalorder %s11, 0
    %p73 = por %p71, %p72
    %p74 = scmp.ne.s32.totalorder %s66, %s68
    %p75 = scmp.eq.s32.totalorder %s16, 1
    %p76 = por %p74, %p75
    %p77 = scmp.ne.s32.totalorder %s68, %s69
    %p78 = scmp.eq.s32.totalorder %s16, 0
    %p79 = por %p77, %p78
    %p80 = scmp.ne.s32.totalorder %s68, %s69
    %p81 = scmp.eq.s32.totalorder %s17, 1
    %p82 = por %p80, %p81
    %p84 = scmp.ne.s32.totalorder %s69, %s83
    %p85 = scmp.eq.s32.totalorder %s17, 0
    %p86 = por %p84, %p85
    %s88 = sadd.s32 %s87, 1
    %p91 = scmp.eq.s32.totalorder %s11, 1
    %p92 = scmp.ne.s32.totalorder %s87, %s89
    %p93 = scmp.eq.s32.totalorder %s11, 0
    %p94 = por %p92, %p93
    %p95 = scmp.ne.s32.totalorder %s87, %s89
    %p96 = scmp.eq.s32.totalorder %s16, 1
    %p97 = por %p95, %p96
    %p98 = scmp.ne.s32.totalorder %s89, %s90
    %p99 = scmp.eq.s32.totalorder %s16, 0
    %p100 = por %p98, %p99
    %p101 = scmp.ne.s32.totalorder %s89, %s90
    %p102 = scmp.eq.s32.totalorder %s17, 1
    %p103 = por %p101, %p102
    %p105 = scmp.ne.s32.totalorder %s90, %s104
    %p106 = scmp.eq.s32.totalorder %s17, 0
    %p107 = por %p105, %p106
    %s109 = sadd.s32 %s108, 1
    %p112 = scmp.eq.s32.totalorder %s11, 1
    %p113 = scmp.ne.s32.totalorder %s108, %s110
    %p114 = scmp.eq.s32.totalorder %s11, 0
    %p115 = por %p113, %p114
    %p116 = scmp.ne.s32.totalorder %s108, %s110
    %p117 = scmp.eq.s32.totalorder %s16, 1
    %p118 = por %p116, %p117
    %p119 = scmp.ne.s32.totalorder %s110, %s111
    %p120 = scmp.eq.s32.totalorder %s16, 0
    %p121 = por %p119, %p120
    %p122 = scmp.ne.s32.totalorder %s110, %s111
    %p123 = scmp.eq.s32.totalorder %s17, 1
    %p124 = por %p122, %p123
    %p126 = scmp.ne.s32.totalorder %s111, %s125
    %p127 = scmp.eq.s32.totalorder %s17, 0
    %p128 = por %p126, %p127
    %s129 = ssub.s32 %s11, %s18
    %p130 = scmp.eq.s32.totalorder %s129, 0
    %s132 = sadd.s32 %s131, 1
    %s133 = scalar_select %p130, %s131, %s132
    %p136 = pneg %p130
    %p137 = scmp.eq.s32.totalorder %s11, 1
    %p138 = por %p136, %p137
    %p139 = scmp.ne.s32.totalorder %s131, %s134
    %p140 = scmp.eq.s32.totalorder %s11, 0
    %p141 = por %p139, %p140
    %p142 = scmp.ne.s32.totalorder %s131, %s134
    %p143 = scmp.eq.s32.totalorder %s16, 1
    %p144 = por %p142, %p143
    %p145 = scmp.ne.s32.totalorder %s134, %s135
    %p146 = scmp.eq.s32.totalorder %s16, 0
    %p147 = por %p145, %p146
    %p148 = scmp.ne.s32.totalorder %s134, %s135
    %p149 = scmp.eq.s32.totalorder %s17, 1
    %p150 = por %p148, %p149
    %p152 = scmp.ne.s32.totalorder %s135, %s151
    %p153 = scmp.eq.s32.totalorder %s17, 0
    %p154 = por %p152, %p153
    %p155 = scmp.le.s32.totalorder 1, %s11
    %p156 = scmp.lt.s32.totalorder %s11, 3
    %p157 = pnand %p155, %p156
    %p158 = pneg %p157
    // Predicated region
    $region9: #{nested_unet.34} parent=5 // pred_check
      _
    $region10: #{nested_unet.34} parent=5 // pred_check_branch
      %160 = sbr.rel (%p157) target = $region12
    $region11: #{nested_unet.34} parent=5 // pred_region
      %s161 = ssub.s32 %s11, 1
      // Predicated region
      $region13: #{nested_unet.34} parent=11 // pred_check
        %p162 = pneg %p58
      $region14: #{nested_unet.34} parent=11 // pred_check_branch
        %164 = sbr.rel (%p162) target = $region16
      $region15: #{nested_unet.34} parent=11 // pred_region
        _
      $region16: #{nested_unet.34} parent=11 // pred_fallthru
        _
      // Predicated region
      $region17: #{nested_unet.34} parent=11 // pred_check
        %p165 = pneg %p79
      $region18: #{nested_unet.34} parent=11 // pred_check_branch
        %167 = sbr.rel (%p165) target = $region20
      $region19: #{nested_unet.34} parent=11 // pred_region
        _
      $region20: #{nested_unet.34} parent=11 // pred_fallthru
        _
      // Predicated region
      $region21: #{nested_unet.34} parent=11 // pred_check
        %p168 = pneg %p100
      $region22: #{nested_unet.34} parent=11 // pred_check_branch
        %170 = sbr.rel (%p168) target = $region24
      $region23: #{nested_unet.34} parent=11 // pred_region
        _
      $region24: #{nested_unet.34} parent=11 // pred_fallthru
        _
      // Predicated region
      $region25: #{nested_unet.34} parent=11 // pred_check
        %p171 = pneg %p121
      $region26: #{nested_unet.34} parent=11 // pred_check_branch
        %173 = sbr.rel (%p171) target = $region28
      $region27: #{nested_unet.34} parent=11 // pred_region
        _
      $region28: #{nested_unet.34} parent=11 // pred_fallthru
        _
    $region12: #{nested_unet.34} parent=5 // pred_fallthru
      _
    %p174 = scmp.lt.s32.totalorder %s11, 2
    // Predicated region
    $region29: #{nested_unet.34} parent=5 // pred_check
      %p175 = pneg %p174
    $region30: #{nested_unet.34} parent=5 // pred_check_branch
      %177 = sbr.rel (%p175) target = $region32
    $region31: #{nested_unet.34} parent=5 // pred_region
      // Predicated region
      $region33: #{nested_unet.34} parent=31 // pred_check
        %p178 = pneg %p31
      $region34: #{nested_unet.34} parent=31 // pred_check_branch
        %180 = sbr.rel (%p178) target = $region36
      $region35: #{nested_unet.34} parent=31 // pred_region
        %p181 = scmp.lt.s32.totalorder %s11, 1
        %s182 = scalar_select %p181, %s11, 1
        %s183 = smul.addr %s182, 2
        %s184 = smul.addr %s183, 8
        %s185 = scalar_lea.vmem %s0, %s184
      $region36: #{nested_unet.34} parent=31 // pred_fallthru
        _
    $region32: #{nested_unet.34} parent=5 // pred_fallthru
      _
    %p186 = scmp.le.s32.totalorder 1, %s11
    %p187 = scmp.lt.s32.totalorder %s11, 3
    %p188 = pnand %p186, %p187
    %p189 = pneg %p188
    // Predicated region
    $region37: #{nested_unet.34} parent=5 // pred_check
      _
    $region38: #{nested_unet.34} parent=5 // pred_check_branch
      %191 = sbr.rel (%p188) target = $region40
    $region39: #{nested_unet.34} parent=5 // pred_region
      %s192 = ssub.s32 %s11, 1
      %p193 = scmp.lt.s32.totalorder %s16, 1
      %s194 = scalar_select %p193, %s16, 1
      %s195 = smul.addr %s194, 2
      %s196 = smul.addr %s195, 8
      %s197 = scalar_lea.vmem %s0, %s196
      %p198 = pneg %p37
      %p199 = pneg %p34
      %p200 = pneg %p58
      %p201 = pneg %p55
      %p202 = pneg %p79
      %p203 = pneg %p76
      %p204 = pneg %p100
      %p205 = pneg %p97
      %p206 = pneg %p121
      %p207 = pneg %p118
      %p208 = pneg %p147
      %p209 = pneg %p144
      %p210 = scmp.lt.s32.totalorder %s16, 1
      %s211 = scalar_select %p210, %s16, 1
      %s212 = smul.addr %s211, 2
      %s213 = smul.addr %s212, 8
      %s214 = scalar_lea.vmem %s5, %s213
      %p215 = scmp.lt.s32.totalorder %s16, 1
      %s216 = scalar_select %p215, %s16, 1
      %s217 = smul.addr %s216, 2
      %s218 = smul.addr %s217, 8
      %s219 = scalar_lea.vmem %s0, %s218
      %p220 = scmp.lt.s32.totalorder %s16, 1
      %s221 = scalar_select %p220, %s16, 1
      %s222 = smul.addr %s221, 2
      %s223 = smul.addr %s222, 8
      %s224 = scalar_lea.vmem %s5, %s223
      %v225 = vld [vmem:[%s219] sm:$0xff]
      %v226 = vld [vmem:[%s219 + $0x8] sm:$0xff]
      %v227 = vld [vmem:[%s1] sm:$0xff]
      %v228 = vld [vmem:[%s1 + $0x8] sm:$0xff]
      %230 = vset.pattern.permute.xlu0 0
      %231 = vperm.xlu0 %230, %v227
      %v232 = vpop.permute.xlu0 %231
      %235 = vset.pattern.permute.xlu0 0
      %236 = vperm.xlu0 %235, %v228
      %v237 = vpop.permute.xlu0 %236
      %v239 = vmul.f32 %v225, %v232
      %v240 = vmul.f32 %v226, %v237
      %v241 = vld [vmem:[%s2] sm:$0xff]
      %v242 = vld [vmem:[%s2 + $0x8] sm:$0xff]
      %244 = vset.pattern.permute.xlu0 0
      %245 = vperm.xlu0 %244, %v241
      %v246 = vpop.permute.xlu0 %245
      %249 = vset.pattern.permute.xlu0 0
      %250 = vperm.xlu0 %249, %v242
      %v251 = vpop.permute.xlu0 %250
      %v253 = vadd.f32 %v239, %v246
      %v254 = vadd.f32 %v240, %v251
      %v255 = vmax.f32 %v253, 0.0
      %v256 = vmax.f32 %v254, 0.0
      %vm257 = vcmask 523264
      %v258 = vsel %vm257, %v255, 0.0
      %259 = vadd.xlane.f32.xlu0 %v258
      %v260 = vpop.xlane.xlu0 %259
      %v261 = vsel %vm257, %v256, 0.0
      %262 = vadd.xlane.f32.xlu0 %v261
      %v263 = vpop.xlane.xlu0 %262
      %v264 = vmul.f32 %v260, 0.015625
      %v265 = vmul.f32 %v263, 0.015625
      %v266 = vld [vmem:[%s3] sm:$0xff]
      %v267 = vld [vmem:[%s3 + $0x8] sm:$0xff]
      %v268 = vmul.f32 %v266, %v264
      %v269 = vmul.f32 %v267, %v265
      %vm270 = vcmask 15360
      %v271 = vsel %vm270, %v268, 0.0
      %v272 = vsel %vm270, %v269, 0.0
      %v273 = vadd.f32 %v271, %v272
      %v274 = vrot.slane %v273, 4
      %v275 = vadd.f32 %v273, %v274
      %v276 = vrot.slane %v275, 2
      %v277 = vadd.f32 %v275, %v276
      %v278 = vrot.slane %v277, 1
      %v279 = vadd.f32 %v277, %v278
      %v280 = vmax.f32 %v279, 0.0
      %v281 = vld [vmem:[%s4] sm:$0xff]
      %v282 = vld [vmem:[%s4 + $0x8] sm:$0xff]
      %v283 = vmul.f32 %v281, %v280
      %v284 = vmul.f32 %v282, %v280
      %v285 = vsel %vm270, %v283, 0.0
      %286 = vadd.xlane.f32.xlu0 %v285
      %v287 = vpop.xlane.xlu0 %286
      %v288 = vsel %vm270, %v284, 0.0
      %289 = vadd.xlane.f32.xlu0 %v288
      %v290 = vpop.xlane.xlu0 %289
      %v291 = vxor.u32 %v287, 2147483648
      %v292 = vxor.u32 %v290, 2147483648
      %v293 = vmul.f32 %v291, 1.442695
      %v294 = vpow.pop %v293
      %v295 = vmul.f32 %v292, 1.442695
      %v296 = vpow.pop %v295
      %v297 = vadd.f32 %v294, 1.0
      %v298 = vadd.f32 %v296, 1.0
      %v299 = vrcp.pop %v297
      %v300 = vmul.f32 %v297, %v299
      %v301 = vsub.f32 1.0, %v300
      %v302 = vmul.f32 %v299, %v301
      %v303 = vadd.f32 %v299, %v302
      %vm304 = vweird.f32 %v297
      %vm305 = vweird.f32 %v299
      %vm306 = vmor %vm304, %vm305
      %v307 = vsel %vm306, %v299, %v303
      %v308 = vand.u32 2147483647, %v297
      %vm309 = vcmp.eq.f32.partialorder %v308, 8.507059e+37
      %v310 = vand.u32 %v297, 2147483648
      %v311 = vor.u32 1.1754944e-38, %v310
      %v312 = vsel %vm309, %v311, %v307
      %v313 = vmul.f32 1.0, %v312
      %v314 = vrcp.pop %v298
      %v315 = vmul.f32 %v298, %v314
      %v316 = vsub.f32 1.0, %v315
      %v317 = vmul.f32 %v314, %v316
      %v318 = vadd.f32 %v314, %v317
      %vm319 = vweird.f32 %v298
      %vm320 = vweird.f32 %v314
      %vm321 = vmor %vm319, %vm320
      %v322 = vsel %vm321, %v314, %v318
      %v323 = vand.u32 2147483647, %v298
      %vm324 = vcmp.eq.f32.partialorder %v323, 8.507059e+37
      %v325 = vand.u32 %v298, 2147483648
      %v326 = vor.u32 1.1754944e-38, %v325
      %v327 = vsel %vm324, %v326, %v322
      %v328 = vmul.f32 1.0, %v327
      %v329 = vmul.f32 %v255, %v313
      %v330 = vmul.f32 %v256, %v328
      %331 = vst.msk [vmem:[%s224] sm:$0xff] %vm257, %v329
      %332 = vst.msk [vmem:[%s224 + $0x8] sm:$0xff] %vm257, %v330
      %p333 = scmp.lt.s32.totalorder %s16, 1
      %s334 = scalar_select %p333, %s16, 1
      %s335 = smul.addr %s334, 2
      %s336 = smul.addr %s335, 8
      %s337 = scalar_lea.vmem %s5, %s336
      // Predicated region
      $region41: #{nested_unet.34} parent=39 // pred_check
        %p338 = pneg %p144
      $region42: #{nested_unet.34} parent=39 // pred_check_branch
        %340 = sbr.rel (%p338) target = $region44
      $region43: #{nested_unet.34} parent=39 // pred_region
        _
      $region44: #{nested_unet.34} parent=39 // pred_fallthru
        _
    $region40: #{nested_unet.34} parent=5 // pred_fallthru
      _
    %p341 = scmp.le.s32.totalorder 2, %s11
    // Predicated region
    $region45: #{nested_unet.34} parent=5 // pred_check
      %p342 = pneg %p341
    $region46: #{nested_unet.34} parent=5 // pred_check_branch
      %344 = sbr.rel (%p342) target = $region48
    $region47: #{nested_unet.34} parent=5 // pred_region
      %s345 = ssub.s32 %s11, 2
      // Predicated region
      $region49: #{nested_unet.34} parent=47 // pred_check
        %p346 = pneg %p150
      $region50: #{nested_unet.34} parent=47 // pred_check_branch
        %348 = sbr.rel (%p346) target = $region52
      $region51: #{nested_unet.34} parent=47 // pred_region
        %p349 = scmp.lt.s32.totalorder %s17, 1
        %s350 = scalar_select %p349, %s17, 1
        %s351 = smul.addr %s350, 2
        %s352 = smul.addr %s351, 8
        %s353 = scalar_lea.vmem %s5, %s352
      $region52: #{nested_unet.34} parent=47 // pred_fallthru
        _
    $region48: #{nested_unet.34} parent=5 // pred_fallthru
      _
  $region6: #{nested_unet.34} parent=0 // loop_footer
    %s15 = sadd.s32 1, %s11
  $region7: #{nested_unet.34} parent=0 // loop_footer_branch
    %10 = sbr.rel target = $region3
  $region8: #{nested_unet.34} parent=0 // loop_exit
    _

// kernel: nested_unet.37
$region0: #{nested_unet.37}
  #allocation0 [shape = 'u32[]', space=smem, size = 0x4, offset = 0x4, fixed_abs, tag = 'smem constant byte address 0x4 - core index']
  #allocation1 [shape = 'u32[72,128]{1,0:T(1,128)}', space=vmem, size = 0x9000, scoped, tag = 'internal scratch']
  %s0 = inlined_call_operand.vmem [shape: f32[2,32,16], index: 0, kind: input, shape index: {}]
  %s1 = inlined_call_operand.vmem [shape: f32[32,1], index: 1, kind: input, shape index: {}]
  %s2 = inlined_call_operand.vmem [shape: f32[32,1], index: 2, kind: input, shape index: {}]
  %s3 = inlined_call_operand.vmem [shape: f32[2,32,16], index: 3, kind: output, shape index: {}]
  %s4 = sld [smem:[#allocation0]]
  $region45: #{nested_unet.37} parent=0
    _
  %s6 = ssub.s32 1, %s4
  %s7 = scalar_select 0, %s6, %s4
  loop: start=0, step=1, limit=4
  $region2: #{nested_unet.37} parent=0 // loop_pre_header
    _
  $region3: #{nested_unet.37} parent=0 // loop_header
    %s9 = sphi 0, %s13
    %p10 = scmp.ge.s32.totalorder %s9, 4
    %s19 = sphi 0, %s21
    %s22 = sphi 0, %s19
    %s23 = sphi 0, %s22
    %s39 = sphi 0, %s23
    %s43 = sphi 0, %s43
    %s45 = sphi 0, %s43
    %s46 = sphi 0, %s45
    %s60 = sphi 0, %s46
    %s64 = sphi 0, %s64
    %s66 = sphi 0, %s64
    %s67 = sphi 0, %s66
    %s81 = sphi 0, %s67
    %s87 = sphi 0, %s89
    %s90 = sphi 0, %s87
    %s91 = sphi 0, %s90
    %s107 = sphi 0, %s91
  $region4: #{nested_unet.37} parent=0 // loop_header_branch
    %12 = sbr.rel (%p10) target = $region8
  $region5: #{nested_unet.37} parent=0 // loop_body
    %s14 = ssub.s32 %s9, 1
    %s15 = ssub.s32 %s9, 2
    %s16 = sadd.s32 %s9, 1
    %s17 = ssub.s32 %s9, %s16
    %p18 = scmp.eq.s32.totalorder %s17, 0
    %s20 = sadd.s32 %s19, 1
    %s21 = scalar_select %p18, %s19, %s20
    %p24 = pneg %p18
    %p25 = scmp.eq.s32.totalorder %s9, 1
    %p26 = por %p24, %p25
    %p27 = scmp.ne.s32.totalorder %s19, %s22
    %p28 = scmp.eq.s32.totalorder %s9, 0
    %p29 = por %p27, %p28
    %p30 = scmp.ne.s32.totalorder %s19, %s22
    %p31 = scmp.eq.s32.totalorder %s14, 1
    %p32 = por %p30, %p31
    %p33 = scmp.ne.s32.totalorder %s22, %s23
    %p34 = scmp.eq.s32.totalorder %s14, 0
    %p35 = por %p33, %p34
    %p36 = scmp.ne.s32.totalorder %s22, %s23
    %p37 = scmp.eq.s32.totalorder %s15, 1
    %p38 = por %p36, %p37
    %p40 = scmp.ne.s32.totalorder %s23, %s39
    %p41 = scmp.eq.s32.totalorder %s15, 0
    %p42 = por %p40, %p41
    %s44 = sadd.s32 %s43, 1
    %p47 = scmp.eq.s32.totalorder %s9, 1
    %p48 = scmp.ne.s32.totalorder %s43, %s45
    %p49 = scmp.eq.s32.totalorder %s9, 0
    %p50 = por %p48, %p49
    %p51 = scmp.ne.s32.totalorder %s43, %s45
    %p52 = scmp.eq.s32.totalorder %s14, 1
    %p53 = por %p51, %p52
    %p54 = scmp.ne.s32.totalorder %s45, %s46
    %p55 = scmp.eq.s32.totalorder %s14, 0
    %p56 = por %p54, %p55
    %p57 = scmp.ne.s32.totalorder %s45, %s46
    %p58 = scmp.eq.s32.totalorder %s15, 1
    %p59 = por %p57, %p58
    %p61 = scmp.ne.s32.totalorder %s46, %s60
    %p62 = scmp.eq.s32.totalorder %s15, 0
    %p63 = por %p61, %p62
    %s65 = sadd.s32 %s64, 1
    %p68 = scmp.eq.s32.totalorder %s9, 1
    %p69 = scmp.ne.s32.totalorder %s64, %s66
    %p70 = scmp.eq.s32.totalorder %s9, 0
    %p71 = por %p69, %p70
    %p72 = scmp.ne.s32.totalorder %s64, %s66
    %p73 = scmp.eq.s32.totalorder %s14, 1
    %p74 = por %p72, %p73
    %p75 = scmp.ne.s32.totalorder %s66, %s67
    %p76 = scmp.eq.s32.totalorder %s14, 0
    %p77 = por %p75, %p76
    %p78 = scmp.ne.s32.totalorder %s66, %s67
    %p79 = scmp.eq.s32.totalorder %s15, 1
    %p80 = por %p78, %p79
    %p82 = scmp.ne.s32.totalorder %s67, %s81
    %p83 = scmp.eq.s32.totalorder %s15, 0
    %p84 = por %p82, %p83
    %s85 = ssub.s32 %s9, %s16
    %p86 = scmp.eq.s32.totalorder %s85, 0
    %s88 = sadd.s32 %s87, 1
    %s89 = scalar_select %p86, %s87, %s88
    %p92 = pneg %p86
    %p93 = scmp.eq.s32.totalorder %s9, 1
    %p94 = por %p92, %p93
    %p95 = scmp.ne.s32.totalorder %s87, %s90
    %p96 = scmp.eq.s32.totalorder %s9, 0
    %p97 = por %p95, %p96
    %p98 = scmp.ne.s32.totalorder %s87, %s90
    %p99 = scmp.eq.s32.totalorder %s14, 1
    %p100 = por %p98, %p99
    %p101 = scmp.ne.s32.totalorder %s90, %s91
    %p102 = scmp.eq.s32.totalorder %s14, 0
    %p103 = por %p101, %p102
    %p104 = scmp.ne.s32.totalorder %s90, %s91
    %p105 = scmp.eq.s32.totalorder %s15, 1
    %p106 = por %p104, %p105
    %p108 = scmp.ne.s32.totalorder %s91, %s107
    %p109 = scmp.eq.s32.totalorder %s15, 0
    %p110 = por %p108, %p109
    %p111 = scmp.le.s32.totalorder 1, %s9
    %p112 = scmp.lt.s32.totalorder %s9, 3
    %p113 = pnand %p111, %p112
    %p114 = pneg %p113
    // Predicated region
    $region9: #{nested_unet.37} parent=5 // pred_check
      _
    $region10: #{nested_unet.37} parent=5 // pred_check_branch
      %116 = sbr.rel (%p113) target = $region12
    $region11: #{nested_unet.37} parent=5 // pred_region
      %s117 = ssub.s32 %s9, 1
      // Predicated region
      $region13: #{nested_unet.37} parent=11 // pred_check
        %p118 = pneg %p56
      $region14: #{nested_unet.37} parent=11 // pred_check_branch
        %120 = sbr.rel (%p118) target = $region16
      $region15: #{nested_unet.37} parent=11 // pred_region
        _
      $region16: #{nested_unet.37} parent=11 // pred_fallthru
        _
      // Predicated region
      $region17: #{nested_unet.37} parent=11 // pred_check
        %p121 = pneg %p77
      $region18: #{nested_unet.37} parent=11 // pred_check_branch
        %123 = sbr.rel (%p121) target = $region20
      $region19: #{nested_unet.37} parent=11 // pred_region
        _
      $region20: #{nested_unet.37} parent=11 // pred_fallthru
        _
    $region12: #{nested_unet.37} parent=5 // pred_fallthru
      _
    %p124 = scmp.lt.s32.totalorder %s9, 2
    // Predicated region
    $region21: #{nested_unet.37} parent=5 // pred_check
      %p125 = pneg %p124
    $region22: #{nested_unet.37} parent=5 // pred_check_branch
      %127 = sbr.rel (%p125) target = $region24
    $region23: #{nested_unet.37} parent=5 // pred_region
      // Predicated region
      $region25: #{nested_unet.37} parent=23 // pred_check
        %p128 = pneg %p29
      $region26: #{nested_unet.37} parent=23 // pred_check_branch
        %130 = sbr.rel (%p128) target = $region28
      $region27: #{nested_unet.37} parent=23 // pred_region
        %p131 = scmp.lt.s32.totalorder %s9, 1
        %s132 = scalar_select %p131, %s9, 1
        %s133 = smul.addr %s132, 4
        %s134 = smul.addr %s133, 8
        %s135 = scalar_lea.vmem %s0, %s134
      $region28: #{nested_unet.37} parent=23 // pred_fallthru
        _
    $region24: #{nested_unet.37} parent=5 // pred_fallthru
      _
    %p136 = scmp.le.s32.totalorder 1, %s9
    %p137 = scmp.lt.s32.totalorder %s9, 3
    %p138 = pnand %p136, %p137
    %p139 = pneg %p138
    // Predicated region
    $region29: #{nested_unet.37} parent=5 // pred_check
      _
    $region30: #{nested_unet.37} parent=5 // pred_check_branch
      %141 = sbr.rel (%p138) target = $region32
    $region31: #{nested_unet.37} parent=5 // pred_region
      %s142 = ssub.s32 %s9, 1
      %p143 = scmp.lt.s32.totalorder %s14, 1
      %s144 = scalar_select %p143, %s14, 1
      %s145 = smul.addr %s144, 4
      %s146 = smul.addr %s145, 8
      %s147 = scalar_lea.vmem %s0, %s146
      %p148 = pneg %p35
      %p149 = pneg %p32
      %p150 = pneg %p56
      %p151 = pneg %p53
      %p152 = pneg %p77
      %p153 = pneg %p74
      %p154 = pneg %p103
      %p155 = pneg %p100
      %p156 = scmp.lt.s32.totalorder %s14, 1
      %s157 = scalar_select %p156, %s14, 1
      %s158 = smul.addr %s157, 4
      %s159 = smul.addr %s158, 8
      %s160 = scalar_lea.vmem %s3, %s159
      %p161 = scmp.lt.s32.totalorder %s14, 1
      %s162 = scalar_select %p161, %s14, 1
      %s163 = smul.addr %s162, 4
      %s164 = smul.addr %s163, 8
      %s165 = scalar_lea.vmem %s0, %s164
      %p166 = scmp.lt.s32.totalorder %s14, 1
      %s167 = scalar_select %p166, %s14, 1
      %s168 = smul.addr %s167, 4
      %s169 = smul.addr %s168, 8
      %s170 = scalar_lea.vmem %s3, %s169
      %v171 = vld [vmem:[%s165] sm:$0xff]
      %v172 = vld [vmem:[%s165 + $0x8] sm:$0xff]
      %v173 = vld [vmem:[%s165 + $0x10] sm:$0xff]
      %v174 = vld [vmem:[%s165 + $0x18] sm:$0xff]
      %v175 = vld [vmem:[%s1] sm:$0xff]
      %v176 = vld [vmem:[%s1 + $0x8] sm:$0xff]
      %v177 = vld [vmem:[%s1 + $0x10] sm:$0xff]
      %v178 = vld [vmem:[%s1 + $0x18] sm:$0xff]
      %180 = vset.pattern.permute.xlu0 0
      %181 = vperm.xlu0 %180, %v175
      %v182 = vpop.permute.xlu0 %181
      %185 = vset.pattern.permute.xlu0 0
      %186 = vperm.xlu0 %185, %v176
      %v187 = vpop.permute.xlu0 %186
      %190 = vset.pattern.permute.xlu0 0
      %191 = vperm.xlu0 %190, %v177
      %v192 = vpop.permute.xlu0 %191
      %195 = vset.pattern.permute.xlu0 0
      %196 = vperm.xlu0 %195, %v178
      %v197 = vpop.permute.xlu0 %196
      %v199 = vmul.f32 %v171, %v182
      %v200 = vmul.f32 %v172, %v187
      %v201 = vmul.f32 %v173, %v192
      %v202 = vmul.f32 %v174, %v197
      %v203 = vld [vmem:[%s2] sm:$0xff]
      %v204 = vld [vmem:[%s2 + $0x8] sm:$0xff]
      %v205 = vld [vmem:[%s2 + $0x10] sm:$0xff]
      %v206 = vld [vmem:[%s2 + $0x18] sm:$0xff]
      %208 = vset.pattern.permute.xlu0 0
      %209 = vperm.xlu0 %208, %v203
      %v210 = vpop.permute.xlu0 %209
      %213 = vset.pattern.permute.xlu0 0
      %214 = vperm.xlu0 %213, %v204
      %v215 = vpop.permute.xlu0 %214
      %218 = vset.pattern.permute.xlu0 0
      %219 = vperm.xlu0 %218, %v205
      %v220 = vpop.permute.xlu0 %219
      %223 = vset.pattern.permute.xlu0 0
      %224 = vperm.xlu0 %223, %v206
      %v225 = vpop.permute.xlu0 %224
      %v227 = vadd.f32 %v199, %v210
      %v228 = vadd.f32 %v200, %v215
      %v229 = vadd.f32 %v201, %v220
      %v230 = vadd.f32 %v202, %v225
      %v231 = vmax.f32 %v227, 0.0
      %v232 = vmax.f32 %v228, 0.0
      %v233 = vmax.f32 %v229, 0.0
      %v234 = vmax.f32 %v230, 0.0
      %vm235 = vcmask 130048
      %236 = vst.msk [vmem:[%s170] sm:$0xff] %vm235, %v231
      %237 = vst.msk [vmem:[%s170 + $0x8] sm:$0xff] %vm235, %v232
      %238 = vst.msk [vmem:[%s170 + $0x10] sm:$0xff] %vm235, %v233
      %239 = vst.msk [vmem:[%s170 + $0x18] sm:$0xff] %vm235, %v234
      %p240 = scmp.lt.s32.totalorder %s14, 1
      %s241 = scalar_select %p240, %s14, 1
      %s242 = smul.addr %s241, 4
      %s243 = smul.addr %s242, 8
      %s244 = scalar_lea.vmem %s3, %s243
      // Predicated region
      $region33: #{nested_unet.37} parent=31 // pred_check
        %p245 = pneg %p100
      $region34: #{nested_unet.37} parent=31 // pred_check_branch
        %247 = sbr.rel (%p245) target = $region36
      $region35: #{nested_unet.37} parent=31 // pred_region
        _
      $region36: #{nested_unet.37} parent=31 // pred_fallthru
        _
    $region32: #{nested_unet.37} parent=5 // pred_fallthru
      _
    %p248 = scmp.le.s32.totalorder 2, %s9
    // Predicated region
    $region37: #{nested_unet.37} parent=5 // pred_check
      %p249 = pneg %p248
    $region38: #{nested_unet.37} parent=5 // pred_check_branch
      %251 = sbr.rel (%p249) target = $region40
    $region39: #{nested_unet.37} parent=5 // pred_region
      %s252 = ssub.s32 %s9, 2
      // Predicated region
      $region41: #{nested_unet.37} parent=39 // pred_check
        %p253 = pneg %p106
      $region42: #{nested_unet.37} parent=39 // pred_check_branch
        %255 = sbr.rel (%p253) target = $region44
      $region43: #{nested_unet.37} parent=39 // pred_region
        %p256 = scmp.lt.s32.totalorder %s15, 1
        %s257 = scalar_select %p256, %s15, 1
        %s258 = smul.addr %s257, 4
        %s259 = smul.addr %s258, 8
        %s260 = scalar_lea.vmem %s3, %s259
      $region44: #{nested_unet.37} parent=39 // pred_fallthru
        _
    $region40: #{nested_unet.37} parent=5 // pred_fallthru
      _
  $region6: #{nested_unet.37} parent=0 // loop_footer
    %s13 = sadd.s32 1, %s9
  $region7: #{nested_unet.37} parent=0 // loop_footer_branch
    %8 = sbr.rel target = $region3
  $region8: #{nested_unet.37} parent=0 // loop_exit
    _

// kernel: reverse
$region0: #{reverse}
  #allocation0 [shape = 's32[1]{0}', space=sflag, size = 0x4, scoped, tag = 'scoped memory for reverse']
  %s0 = inlined_call_operand.vmem [shape: f32[32,32,3,3], index: 0, kind: input, shape index: {}]
  %s1 = inlined_call_operand.vmem [shape: bf16[32,32,3,3], index: 1, kind: output, shape index: {}]
  %s2 = scalar_lea.vmem %s0, 256
  %v3 = vld [vmem:[%s2] sm:$0xff]
  %v4 = vpack.c.bf16 0.0, %v3
  %5 = vst [vmem:[%s1] sm:$0xf] %v4
  %s6 = scalar_lea.vmem %s0, 160
  %v7 = vld [vmem:[%s6] sm:$0xff]
  %s8 = scalar_lea.vmem %s1, 48
  %v9 = vpack.c.bf16 0.0, %v7
  %10 = vst [vmem:[%s8] sm:$0xf] %v9
  %s11 = scalar_lea.vmem %s0, 64
  %v12 = vld [vmem:[%s11] sm:$0xff]
  %s13 = scalar_lea.vmem %s1, 96
  %v14 = vpack.c.bf16 0.0, %v12
  %15 = vst [vmem:[%s13] sm:$0xf] %v14
  %s16 = scalar_lea.vmem %s0, 224
  %v17 = vld [vmem:[%s16] sm:$0xff]
  %s18 = scalar_lea.vmem %s1, 16
  %v19 = vpack.c.bf16 0.0, %v17
  %20 = vst [vmem:[%s18] sm:$0xf] %v19
  %s21 = scalar_lea.vmem %s0, 128
  %v22 = vld [vmem:[%s21] sm:$0xff]
  %s23 = scalar_lea.vmem %s1, 64
  %v24 = vpack.c.bf16 0.0, %v22
  %25 = vst [vmem:[%s23] sm:$0xf] %v24
  %s26 = scalar_lea.vmem %s0, 32
  %v27 = vld [vmem:[%s26] sm:$0xff]
  %s28 = scalar_lea.vmem %s1, 112
  %v29 = vpack.c.bf16 0.0, %v27
  %30 = vst [vmem:[%s28] sm:$0xf] %v29
  %s31 = scalar_lea.vmem %s0, 192
  %v32 = vld [vmem:[%s31] sm:$0xff]
  %s33 = scalar_lea.vmem %s1, 32
  %v34 = vpack.c.bf16 0.0, %v32
  %35 = vst [vmem:[%s33] sm:$0xf] %v34
  %s36 = scalar_lea.vmem %s0, 96
  %v37 = vld [vmem:[%s36] sm:$0xff]
  %s38 = scalar_lea.vmem %s1, 80
  %v39 = vpack.c.bf16 0.0, %v37
  %40 = vst [vmem:[%s38] sm:$0xf] %v39
  %v41 = vld [vmem:[%s0] sm:$0xff]
  %s42 = scalar_lea.vmem %s1, 128
  %v43 = vpack.c.bf16 0.0, %v41
  %44 = vst [vmem:[%s42] sm:$0xf] %v43
  %s45 = scalar_lea.vmem %s0, 264
  %v46 = vld [vmem:[%s45] sm:$0xff]
  %s47 = scalar_lea.vmem %s1, 4
  %v48 = vpack.c.bf16 0.0, %v46
  %49 = vst [vmem:[%s47] sm:$0xf] %v48
  %s50 = scalar_lea.vmem %s0, 168
  %v51 = vld [vmem:[%s50] sm:$0xff]
  %s52 = scalar_lea.vmem %s1, 52
  %v53 = vpack.c.bf16 0.0, %v51
  %54 = vst [vmem:[%s52] sm:$0xf] %v53
  %s55 = scalar_lea.vmem %s0, 72
  %v56 = vld [vmem:[%s55] sm:$0xff]
  %s57 = scalar_lea.vmem %s1, 100
  %v58 = vpack.c.bf16 0.0, %v56
  %59 = vst [vmem:[%s57] sm:$0xf] %v58
  %s60 = scalar_lea.vmem %s0, 232
  %v61 = vld [vmem:[%s60] sm:$0xff]
  %s62 = scalar_lea.vmem %s1, 20
  %v63 = vpack.c.bf16 0.0, %v61
  %64 = vst [vmem:[%s62] sm:$0xf] %v63
  %s65 = scalar_lea.vmem %s0, 136
  %v66 = vld [vmem:[%s65] sm:$0xff]
  %s67 = scalar_lea.vmem %s1, 68
  %v68 = vpack.c.bf16 0.0, %v66
  %69 = vst [vmem:[%s67] sm:$0xf] %v68
  %s70 = scalar_lea.vmem %s0, 40
  %v71 = vld [vmem:[%s70] sm:$0xff]
  %s72 = scalar_lea.vmem %s1, 116
  %v73 = vpack.c.bf16 0.0, %v71
  %74 = vst [vmem:[%s72] sm:$0xf] %v73
  %s75 = scalar_lea.vmem %s0, 200
  %v76 = vld [vmem:[%s75] sm:$0xff]
  %s77 = scalar_lea.vmem %s1, 36
  %v78 = vpack.c.bf16 0.0, %v76
  %79 = vst [vmem:[%s77] sm:$0xf] %v78
  %s80 = scalar_lea.vmem %s0, 104
  %v81 = vld [vmem:[%s80] sm:$0xff]
  %s82 = scalar_lea.vmem %s1, 84
  %v83 = vpack.c.bf16 0.0, %v81
  %84 = vst [vmem:[%s82] sm:$0xf] %v83
  %s85 = scalar_lea.vmem %s0, 8
  %v86 = vld [vmem:[%s85] sm:$0xff]
  %s87 = scalar_lea.vmem %s1, 132
  %v88 = vpack.c.bf16 0.0, %v86
  %89 = vst [vmem:[%s87] sm:$0xf] %v88
  %s90 = scalar_lea.vmem %s0, 272
  %v91 = vld [vmem:[%s90] sm:$0xff]
  %s92 = scalar_lea.vmem %s1, 8
  %v93 = vpack.c.bf16 0.0, %v91
  %94 = vst [vmem:[%s92] sm:$0xf] %v93
  %s95 = scalar_lea.vmem %s0, 176
  %v96 = vld [vmem:[%s95] sm:$0xff]
  %s97 = scalar_lea.vmem %s1, 56
  %v98 = vpack.c.bf16 0.0, %v96
  %99 = vst [vmem:[%s97] sm:$0xf] %v98
  %s100 = scalar_lea.vmem %s0, 80
  %v101 = vld [vmem:[%s100] sm:$0xff]
  %s102 = scalar_lea.vmem %s1, 104
  %v103 = vpack.c.bf16 0.0, %v101
  %104 = vst [vmem:[%s102] sm:$0xf] %v103
  %s105 = scalar_lea.vmem %s0, 240
  %v106 = vld [vmem:[%s105] sm:$0xff]
  %s107 = scalar_lea.vmem %s1, 24
  %v108 = vpack.c.bf16 0.0, %v106
  %109 = vst [vmem:[%s107] sm:$0xf] %v108
  %s110 = scalar_lea.vmem %s0, 144
  %v111 = vld [vmem:[%s110] sm:$0xff]
  %s112 = scalar_lea.vmem %s1, 72
  %v113 = vpack.c.bf16 0.0, %v111
  %114 = vst [vmem:[%s112] sm:$0xf] %v113
  %s115 = scalar_lea.vmem %s0, 48
  %v116 = vld [vmem:[%s115] sm:$0xff]
  %s117 = scalar_lea.vmem %s1, 120
  %v118 = vpack.c.bf16 0.0, %v116
  %119 = vst [vmem:[%s117] sm:$0xf] %v118
  %s120 = scalar_lea.vmem %s0, 208
  %v121 = vld [vmem:[%s120] sm:$0xff]
  %s122 = scalar_lea.vmem %s1, 40
  %v123 = vpack.c.bf16 0.0, %v121
  %124 = vst [vmem:[%s122] sm:$0xf] %v123
  %s125 = scalar_lea.vmem %s0, 112
  %v126 = vld [vmem:[%s125] sm:$0xff]
  %s127 = scalar_lea.vmem %s1, 88
  %v128 = vpack.c.bf16 0.0, %v126
  %129 = vst [vmem:[%s127] sm:$0xf] %v128
  %s130 = scalar_lea.vmem %s0, 16
  %v131 = vld [vmem:[%s130] sm:$0xff]
  %s132 = scalar_lea.vmem %s1, 136
  %v133 = vpack.c.bf16 0.0, %v131
  %134 = vst [vmem:[%s132] sm:$0xf] %v133
  %s135 = scalar_lea.vmem %s0, 280
  %v136 = vld [vmem:[%s135] sm:$0xff]
  %s137 = scalar_lea.vmem %s1, 12
  %v138 = vpack.c.bf16 0.0, %v136
  %139 = vst [vmem:[%s137] sm:$0xf] %v138
  %s140 = scalar_lea.vmem %s0, 184
  %v141 = vld [vmem:[%s140] sm:$0xff]
  %s142 = scalar_lea.vmem %s1, 60
  %v143 = vpack.c.bf16 0.0, %v141
  %144 = vst [vmem:[%s142] sm:$0xf] %v143
  %s145 = scalar_lea.vmem %s0, 88
  %v146 = vld [vmem:[%s145] sm:$0xff]
  %s147 = scalar_lea.vmem %s1, 108
  %v148 = vpack.c.bf16 0.0, %v146
  %149 = vst [vmem:[%s147] sm:$0xf] %v148
  %s150 = scalar_lea.vmem %s0, 248
  %v151 = vld [vmem:[%s150] sm:$0xff]
  %s152 = scalar_lea.vmem %s1, 28
  %v153 = vpack.c.bf16 0.0, %v151
  %154 = vst [vmem:[%s152] sm:$0xf] %v153
  %s155 = scalar_lea.vmem %s0, 152
  %v156 = vld [vmem:[%s155] sm:$0xff]
  %s157 = scalar_lea.vmem %s1, 76
  %v158 = vpack.c.bf16 0.0, %v156
  %159 = vst [vmem:[%s157] sm:$0xf] %v158
  %s160 = scalar_lea.vmem %s0, 56
  %v161 = vld [vmem:[%s160] sm:$0xff]
  %s162 = scalar_lea.vmem %s1, 124
  %v163 = vpack.c.bf16 0.0, %v161
  %164 = vst [vmem:[%s162] sm:$0xf] %v163
  %s165 = scalar_lea.vmem %s0, 216
  %v166 = vld [vmem:[%s165] sm:$0xff]
  %s167 = scalar_lea.vmem %s1, 44
  %v168 = vpack.c.bf16 0.0, %v166
  %169 = vst [vmem:[%s167] sm:$0xf] %v168
  %s170 = scalar_lea.vmem %s0, 120
  %v171 = vld [vmem:[%s170] sm:$0xff]
  %s172 = scalar_lea.vmem %s1, 92
  %v173 = vpack.c.bf16 0.0, %v171
  %174 = vst [vmem:[%s172] sm:$0xf] %v173
  %s175 = scalar_lea.vmem %s0, 24
  %v176 = vld [vmem:[%s175] sm:$0xff]
  %s177 = scalar_lea.vmem %s1, 140
  %v178 = vpack.c.bf16 0.0, %v176
  %179 = vst [vmem:[%s177] sm:$0xf] %v178

// kernel: nested_unet.38
$region0: #{nested_unet.38}
  #allocation0 [shape = 'u32[]', space=smem, size = 0x4, offset = 0x4, fixed_abs, tag = 'smem constant byte address 0x4 - core index']
  #allocation1 [shape = 'u32[72,128]{1,0:T(1,128)}', space=vmem, size = 0x9000, scoped, tag = 'internal scratch']
  %s0 = inlined_call_operand.vmem [shape: f32[2,32,16], index: 0, kind: input, shape index: {}]
  %s1 = inlined_call_operand.vmem [shape: f32[32,1], index: 1, kind: input, shape index: {}]
  %s2 = inlined_call_operand.vmem [shape: f32[32,1], index: 2, kind: input, shape index: {}]
  %s3 = inlined_call_operand.vmem [shape: f32[32,4], index: 3, kind: input, shape index: {}]
  %s4 = inlined_call_operand.vmem [shape: f32[32,4], index: 4, kind: input, shape index: {}]
  %s5 = inlined_call_operand.vmem [shape: f32[2,32,16], index: 5, kind: output, shape index: {}]
  %s6 = sld [smem:[#allocation0]]
  $region53: #{nested_unet.38} parent=0
    _
  %s8 = ssub.s32 1, %s6
  %s9 = scalar_select 0, %s8, %s6
  loop: start=0, step=1, limit=4
  $region2: #{nested_unet.38} parent=0 // loop_pre_header
    _
  $region3: #{nested_unet.38} parent=0 // loop_header
    %s11 = sphi 0, %s15
    %p12 = scmp.ge.s32.totalorder %s11, 4
    %s21 = sphi 0, %s23
    %s24 = sphi 0, %s21
    %s25 = sphi 0, %s24
    %s41 = sphi 0, %s25
    %s45 = sphi 0, %s45
    %s47 = sphi 0, %s45
    %s48 = sphi 0, %s47
    %s62 = sphi 0, %s48
    %s66 = sphi 0, %s66
    %s68 = sphi 0, %s66
    %s69 = sphi 0, %s68
    %s83 = sphi 0, %s69
    %s87 = sphi 0, %s87
    %s89 = sphi 0, %s87
    %s90 = sphi 0, %s89
    %s104 = sphi 0, %s90
    %s108 = sphi 0, %s108
    %s110 = sphi 0, %s108
    %s111 = sphi 0, %s110
    %s125 = sphi 0, %s111
    %s131 = sphi 0, %s133
    %s134 = sphi 0, %s131
    %s135 = sphi 0, %s134
    %s151 = sphi 0, %s135
  $region4: #{nested_unet.38} parent=0 // loop_header_branch
    %14 = sbr.rel (%p12) target = $region8
  $region5: #{nested_unet.38} parent=0 // loop_body
    %s16 = ssub.s32 %s11, 1
    %s17 = ssub.s32 %s11, 2
    %s18 = sadd.s32 %s11, 1
    %s19 = ssub.s32 %s11, %s18
    %p20 = scmp.eq.s32.totalorder %s19, 0
    %s22 = sadd.s32 %s21, 1
    %s23 = scalar_select %p20, %s21, %s22
    %p26 = pneg %p20
    %p27 = scmp.eq.s32.totalorder %s11, 1
    %p28 = por %p26, %p27
    %p29 = scmp.ne.s32.totalorder %s21, %s24
    %p30 = scmp.eq.s32.totalorder %s11, 0
    %p31 = por %p29, %p30
    %p32 = scmp.ne.s32.totalorder %s21, %s24
    %p33 = scmp.eq.s32.totalorder %s16, 1
    %p34 = por %p32, %p33
    %p35 = scmp.ne.s32.totalorder %s24, %s25
    %p36 = scmp.eq.s32.totalorder %s16, 0
    %p37 = por %p35, %p36
    %p38 = scmp.ne.s32.totalorder %s24, %s25
    %p39 = scmp.eq.s32.totalorder %s17, 1
    %p40 = por %p38, %p39
    %p42 = scmp.ne.s32.totalorder %s25, %s41
    %p43 = scmp.eq.s32.totalorder %s17, 0
    %p44 = por %p42, %p43
    %s46 = sadd.s32 %s45, 1
    %p49 = scmp.eq.s32.totalorder %s11, 1
    %p50 = scmp.ne.s32.totalorder %s45, %s47
    %p51 = scmp.eq.s32.totalorder %s11, 0
    %p52 = por %p50, %p51
    %p53 = scmp.ne.s32.totalorder %s45, %s47
    %p54 = scmp.eq.s32.totalorder %s16, 1
    %p55 = por %p53, %p54
    %p56 = scmp.ne.s32.totalorder %s47, %s48
    %p57 = scmp.eq.s32.totalorder %s16, 0
    %p58 = por %p56, %p57
    %p59 = scmp.ne.s32.totalorder %s47, %s48
    %p60 = scmp.eq.s32.totalorder %s17, 1
    %p61 = por %p59, %p60
    %p63 = scmp.ne.s32.totalorder %s48, %s62
    %p64 = scmp.eq.s32.totalorder %s17, 0
    %p65 = por %p63, %p64
    %s67 = sadd.s32 %s66, 1
    %p70 = scmp.eq.s32.totalorder %s11, 1
    %p71 = scmp.ne.s32.totalorder %s66, %s68
    %p72 = scmp.eq.s32.totalorder %s11, 0
    %p73 = por %p71, %p72
    %p74 = scmp.ne.s32.totalorder %s66, %s68
    %p75 = scmp.eq.s32.totalorder %s16, 1
    %p76 = por %p74, %p75
    %p77 = scmp.ne.s32.totalorder %s68, %s69
    %p78 = scmp.eq.s32.totalorder %s16, 0
    %p79 = por %p77, %p78
    %p80 = scmp.ne.s32.totalorder %s68, %s69
    %p81 = scmp.eq.s32.totalorder %s17, 1
    %p82 = por %p80, %p81
    %p84 = scmp.ne.s32.totalorder %s69, %s83
    %p85 = scmp.eq.s32.totalorder %s17, 0
    %p86 = por %p84, %p85
    %s88 = sadd.s32 %s87, 1
    %p91 = scmp.eq.s32.totalorder %s11, 1
    %p92 = scmp.ne.s32.totalorder %s87, %s89
    %p93 = scmp.eq.s32.totalorder %s11, 0
    %p94 = por %p92, %p93
    %p95 = scmp.ne.s32.totalorder %s87, %s89
    %p96 = scmp.eq.s32.totalorder %s16, 1
    %p97 = por %p95, %p96
    %p98 = scmp.ne.s32.totalorder %s89, %s90
    %p99 = scmp.eq.s32.totalorder %s16, 0
    %p100 = por %p98, %p99
    %p101 = scmp.ne.s32.totalorder %s89, %s90
    %p102 = scmp.eq.s32.totalorder %s17, 1
    %p103 = por %p101, %p102
    %p105 = scmp.ne.s32.totalorder %s90, %s104
    %p106 = scmp.eq.s32.totalorder %s17, 0
    %p107 = por %p105, %p106
    %s109 = sadd.s32 %s108, 1
    %p112 = scmp.eq.s32.totalorder %s11, 1
    %p113 = scmp.ne.s32.totalorder %s108, %s110
    %p114 = scmp.eq.s32.totalorder %s11, 0
    %p115 = por %p113, %p114
    %p116 = scmp.ne.s32.totalorder %s108, %s110
    %p117 = scmp.eq.s32.totalorder %s16, 1
    %p118 = por %p116, %p117
    %p119 = scmp.ne.s32.totalorder %s110, %s111
    %p120 = scmp.eq.s32.totalorder %s16, 0
    %p121 = por %p119, %p120
    %p122 = scmp.ne.s32.totalorder %s110, %s111
    %p123 = scmp.eq.s32.totalorder %s17, 1
    %p124 = por %p122, %p123
    %p126 = scmp.ne.s32.totalorder %s111, %s125
    %p127 = scmp.eq.s32.totalorder %s17, 0
    %p128 = por %p126, %p127
    %s129 = ssub.s32 %s11, %s18
    %p130 = scmp.eq.s32.totalorder %s129, 0
    %s132 = sadd.s32 %s131, 1
    %s133 = scalar_select %p130, %s131, %s132
    %p136 = pneg %p130
    %p137 = scmp.eq.s32.totalorder %s11, 1
    %p138 = por %p136, %p137
    %p139 = scmp.ne.s32.totalorder %s131, %s134
    %p140 = scmp.eq.s32.totalorder %s11, 0
    %p141 = por %p139, %p140
    %p142 = scmp.ne.s32.totalorder %s131, %s134
    %p143 = scmp.eq.s32.totalorder %s16, 1
    %p144 = por %p142, %p143
    %p145 = scmp.ne.s32.totalorder %s134, %s135
    %p146 = scmp.eq.s32.totalorder %s16, 0
    %p147 = por %p145, %p146
    %p148 = scmp.ne.s32.totalorder %s134, %s135
    %p149 = scmp.eq.s32.totalorder %s17, 1
    %p150 = por %p148, %p149
    %p152 = scmp.ne.s32.totalorder %s135, %s151
    %p153 = scmp.eq.s32.totalorder %s17, 0
    %p154 = por %p152, %p153
    %p155 = scmp.le.s32.totalorder 1, %s11
    %p156 = scmp.lt.s32.totalorder %s11, 3
    %p157 = pnand %p155, %p156
    %p158 = pneg %p157
    // Predicated region
    $region9: #{nested_unet.38} parent=5 // pred_check
      _
    $region10: #{nested_unet.38} parent=5 // pred_check_branch
      %160 = sbr.rel (%p157) target = $region12
    $region11: #{nested_unet.38} parent=5 // pred_region
      %s161 = ssub.s32 %s11, 1
      // Predicated region
      $region13: #{nested_unet.38} parent=11 // pred_check
        %p162 = pneg %p58
      $region14: #{nested_unet.38} parent=11 // pred_check_branch
        %164 = sbr.rel (%p162) target = $region16
      $region15: #{nested_unet.38} parent=11 // pred_region
        _
      $region16: #{nested_unet.38} parent=11 // pred_fallthru
        _
      // Predicated region
      $region17: #{nested_unet.38} parent=11 // pred_check
        %p165 = pneg %p79
      $region18: #{nested_unet.38} parent=11 // pred_check_branch
        %167 = sbr.rel (%p165) target = $region20
      $region19: #{nested_unet.38} parent=11 // pred_region
        _
      $region20: #{nested_unet.38} parent=11 // pred_fallthru
        _
      // Predicated region
      $region21: #{nested_unet.38} parent=11 // pred_check
        %p168 = pneg %p100
      $region22: #{nested_unet.38} parent=11 // pred_check_branch
        %170 = sbr.rel (%p168) target = $region24
      $region23: #{nested_unet.38} parent=11 // pred_region
        _
      $region24: #{nested_unet.38} parent=11 // pred_fallthru
        _
      // Predicated region
      $region25: #{nested_unet.38} parent=11 // pred_check
        %p171 = pneg %p121
      $region26: #{nested_unet.38} parent=11 // pred_check_branch
        %173 = sbr.rel (%p171) target = $region28
      $region27: #{nested_unet.38} parent=11 // pred_region
        _
      $region28: #{nested_unet.38} parent=11 // pred_fallthru
        _
    $region12: #{nested_unet.38} parent=5 // pred_fallthru
      _
    %p174 = scmp.lt.s32.totalorder %s11, 2
    // Predicated region
    $region29: #{nested_unet.38} parent=5 // pred_check
      %p175 = pneg %p174
    $region30: #{nested_unet.38} parent=5 // pred_check_branch
      %177 = sbr.rel (%p175) target = $region32
    $region31: #{nested_unet.38} parent=5 // pred_region
      // Predicated region
      $region33: #{nested_unet.38} parent=31 // pred_check
        %p178 = pneg %p31
      $region34: #{nested_unet.38} parent=31 // pred_check_branch
        %180 = sbr.rel (%p178) target = $region36
      $region35: #{nested_unet.38} parent=31 // pred_region
        %p181 = scmp.lt.s32.totalorder %s11, 1
        %s182 = scalar_select %p181, %s11, 1
        %s183 = smul.addr %s182, 4
        %s184 = smul.addr %s183, 8
        %s185 = scalar_lea.vmem %s0, %s184
      $region36: #{nested_unet.38} parent=31 // pred_fallthru
        _
    $region32: #{nested_unet.38} parent=5 // pred_fallthru
      _
    %p186 = scmp.le.s32.totalorder 1, %s11
    %p187 = scmp.lt.s32.totalorder %s11, 3
    %p188 = pnand %p186, %p187
    %p189 = pneg %p188
    // Predicated region
    $region37: #{nested_unet.38} parent=5 // pred_check
      _
    $region38: #{nested_unet.38} parent=5 // pred_check_branch
      %191 = sbr.rel (%p188) target = $region40
    $region39: #{nested_unet.38} parent=5 // pred_region
      %s192 = ssub.s32 %s11, 1
      %p193 = scmp.lt.s32.totalorder %s16, 1
      %s194 = scalar_select %p193, %s16, 1
      %s195 = smul.addr %s194, 4
      %s196 = smul.addr %s195, 8
      %s197 = scalar_lea.vmem %s0, %s196
      %p198 = pneg %p37
      %p199 = pneg %p34
      %p200 = pneg %p58
      %p201 = pneg %p55
      %p202 = pneg %p79
      %p203 = pneg %p76
      %p204 = pneg %p100
      %p205 = pneg %p97
      %p206 = pneg %p121
      %p207 = pneg %p118
      %p208 = pneg %p147
      %p209 = pneg %p144
      %p210 = scmp.lt.s32.totalorder %s16, 1
      %s211 = scalar_select %p210, %s16, 1
      %s212 = smul.addr %s211, 4
      %s213 = smul.addr %s212, 8
      %s214 = scalar_lea.vmem %s5, %s213
      %p215 = scmp.lt.s32.totalorder %s16, 1
      %s216 = scalar_select %p215, %s16, 1
      %s217 = smul.addr %s216, 4
      %s218 = smul.addr %s217, 8
      %s219 = scalar_lea.vmem %s0, %s218
      %p220 = scmp.lt.s32.totalorder %s16, 1
      %s221 = scalar_select %p220, %s16, 1
      %s222 = smul.addr %s221, 4
      %s223 = smul.addr %s222, 8
      %s224 = scalar_lea.vmem %s5, %s223
      %v225 = vld [vmem:[%s219] sm:$0xff]
      %v226 = vld [vmem:[%s219 + $0x8] sm:$0xff]
      %v227 = vld [vmem:[%s219 + $0x10] sm:$0xff]
      %v228 = vld [vmem:[%s219 + $0x18] sm:$0xff]
      %v229 = vld [vmem:[%s1] sm:$0xff]
      %v230 = vld [vmem:[%s1 + $0x8] sm:$0xff]
      %v231 = vld [vmem:[%s1 + $0x10] sm:$0xff]
      %v232 = vld [vmem:[%s1 + $0x18] sm:$0xff]
      %234 = vset.pattern.permute.xlu0 0
      %235 = vperm.xlu0 %234, %v229
      %v236 = vpop.permute.xlu0 %235
      %239 = vset.pattern.permute.xlu0 0
      %240 = vperm.xlu0 %239, %v230
      %v241 = vpop.permute.xlu0 %240
      %244 = vset.pattern.permute.xlu0 0
      %245 = vperm.xlu0 %244, %v231
      %v246 = vpop.permute.xlu0 %245
      %249 = vset.pattern.permute.xlu0 0
      %250 = vperm.xlu0 %249, %v232
      %v251 = vpop.permute.xlu0 %250
      %v253 = vmul.f32 %v225, %v236
      %v254 = vmul.f32 %v226, %v241
      %v255 = vmul.f32 %v227, %v246
      %v256 = vmul.f32 %v228, %v251
      %v257 = vld [vmem:[%s2] sm:$0xff]
      %v258 = vld [vmem:[%s2 + $0x8] sm:$0xff]
      %v259 = vld [vmem:[%s2 + $0x10] sm:$0xff]
      %v260 = vld [vmem:[%s2 + $0x18] sm:$0xff]
      %262 = vset.pattern.permute.xlu0 0
      %263 = vperm.xlu0 %262, %v257
      %v264 = vpop.permute.xlu0 %263
      %267 = vset.pattern.permute.xlu0 0
      %268 = vperm.xlu0 %267, %v258
      %v269 = vpop.permute.xlu0 %268
      %272 = vset.pattern.permute.xlu0 0
      %273 = vperm.xlu0 %272, %v259
      %v274 = vpop.permute.xlu0 %273
      %277 = vset.pattern.permute.xlu0 0
      %278 = vperm.xlu0 %277, %v260
      %v279 = vpop.permute.xlu0 %278
      %v281 = vadd.f32 %v253, %v264
      %v282 = vadd.f32 %v254, %v269
      %v283 = vadd.f32 %v255, %v274
      %v284 = vadd.f32 %v256, %v279
      %v285 = vmax.f32 %v281, 0.0
      %v286 = vmax.f32 %v282, 0.0
      %v287 = vmax.f32 %v283, 0.0
      %v288 = vmax.f32 %v284, 0.0
      %vm289 = vcmask 130048
      %v290 = vsel %vm289, %v285, 0.0
      %291 = vadd.xlane.f32.xlu0 %v290
      %v292 = vpop.xlane.xlu0 %291
      %v293 = vsel %vm289, %v286, 0.0
      %294 = vadd.xlane.f32.xlu0 %v293
      %v295 = vpop.xlane.xlu0 %294
      %v296 = vsel %vm289, %v287, 0.0
      %297 = vadd.xlane.f32.xlu0 %v296
      %v298 = vpop.xlane.xlu0 %297
      %v299 = vsel %vm289, %v288, 0.0
      %300 = vadd.xlane.f32.xlu0 %v299
      %v301 = vpop.xlane.xlu0 %300
      %v302 = vmul.f32 %v292, 0.0625
      %v303 = vmul.f32 %v295, 0.0625
      %v304 = vmul.f32 %v298, 0.0625
      %v305 = vmul.f32 %v301, 0.0625
      %v306 = vld [vmem:[%s3] sm:$0xff]
      %v307 = vld [vmem:[%s3 + $0x8] sm:$0xff]
      %v308 = vld [vmem:[%s3 + $0x10] sm:$0xff]
      %v309 = vld [vmem:[%s3 + $0x18] sm:$0xff]
      %v310 = vmul.f32 %v306, %v302
      %v311 = vmul.f32 %v307, %v303
      %v312 = vmul.f32 %v308, %v304
      %v313 = vmul.f32 %v309, %v305
      %vm314 = vcmask 31744
      %v315 = vsel %vm314, %v310, 0.0
      %v316 = vsel %vm314, %v311, 0.0
      %v317 = vadd.f32 %v315, %v316
      %v318 = vsel %vm314, %v312, 0.0
      %v319 = vadd.f32 %v317, %v318
      %v320 = vsel %vm314, %v313, 0.0
      %v321 = vadd.f32 %v319, %v320
      %v322 = vrot.slane %v321, 4
      %v323 = vadd.f32 %v321, %v322
      %v324 = vrot.slane %v323, 2
      %v325 = vadd.f32 %v323, %v324
      %v326 = vrot.slane %v325, 1
      %v327 = vadd.f32 %v325, %v326
      %v328 = vmax.f32 %v327, 0.0
      %v329 = vld [vmem:[%s4] sm:$0xff]
      %v330 = vld [vmem:[%s4 + $0x8] sm:$0xff]
      %v331 = vld [vmem:[%s4 + $0x10] sm:$0xff]
      %v332 = vld [vmem:[%s4 + $0x18] sm:$0xff]
      %v333 = vmul.f32 %v329, %v328
      %v334 = vmul.f32 %v330, %v328
      %v335 = vmul.f32 %v331, %v328
      %v336 = vmul.f32 %v332, %v328
      %v337 = vsel %vm314, %v333, 0.0
      %338 = vadd.xlane.f32.xlu0 %v337
      %v339 = vpop.xlane.xlu0 %338
      %v340 = vsel %vm314, %v334, 0.0
      %341 = vadd.xlane.f32.xlu0 %v340
      %v342 = vpop.xlane.xlu0 %341
      %v343 = vsel %vm314, %v335, 0.0
      %344 = vadd.xlane.f32.xlu0 %v343
      %v345 = vpop.xlane.xlu0 %344
      %v346 = vsel %vm314, %v336, 0.0
      %347 = vadd.xlane.f32.xlu0 %v346
      %v348 = vpop.xlane.xlu0 %347
      %v349 = vxor.u32 %v339, 2147483648
      %v350 = vxor.u32 %v342, 2147483648
      %v351 = vxor.u32 %v345, 2147483648
      %v352 = vxor.u32 %v348, 2147483648
      %v353 = vmul.f32 %v349, 1.442695
      %v354 = vpow.pop %v353
      %v355 = vmul.f32 %v350, 1.442695
      %v356 = vpow.pop %v355
      %v357 = vmul.f32 %v351, 1.442695
      %v358 = vpow.pop %v357
      %v359 = vmul.f32 %v352, 1.442695
      %v360 = vpow.pop %v359
      %v361 = vadd.f32 %v354, 1.0
      %v362 = vadd.f32 %v356, 1.0
      %v363 = vadd.f32 %v358, 1.0
      %v364 = vadd.f32 %v360, 1.0
      %v365 = vrcp.pop %v361
      %v366 = vmul.f32 %v361, %v365
      %v367 = vsub.f32 1.0, %v366
      %v368 = vmul.f32 %v365, %v367
      %v369 = vadd.f32 %v365, %v368
      %vm370 = vweird.f32 %v361
      %vm371 = vweird.f32 %v365
      %vm372 = vmor %vm370, %vm371
      %v373 = vsel %vm372, %v365, %v369
      %v374 = vand.u32 2147483647, %v361
      %vm375 = vcmp.eq.f32.partialorder %v374, 8.507059e+37
      %v376 = vand.u32 %v361, 2147483648
      %v377 = vor.u32 1.1754944e-38, %v376
      %v378 = vsel %vm375, %v377, %v373
      %v379 = vmul.f32 1.0, %v378
      %v380 = vrcp.pop %v362
      %v381 = vmul.f32 %v362, %v380
      %v382 = vsub.f32 1.0, %v381
      %v383 = vmul.f32 %v380, %v382
      %v384 = vadd.f32 %v380, %v383
      %vm385 = vweird.f32 %v362
      %vm386 = vweird.f32 %v380
      %vm387 = vmor %vm385, %vm386
      %v388 = vsel %vm387, %v380, %v384
      %v389 = vand.u32 2147483647, %v362
      %vm390 = vcmp.eq.f32.partialorder %v389, 8.507059e+37
      %v391 = vand.u32 %v362, 2147483648
      %v392 = vor.u32 1.1754944e-38, %v391
      %v393 = vsel %vm390, %v392, %v388
      %v394 = vmul.f32 1.0, %v393
      %v395 = vrcp.pop %v363
      %v396 = vmul.f32 %v363, %v395
      %v397 = vsub.f32 1.0, %v396
      %v398 = vmul.f32 %v395, %v397
      %v399 = vadd.f32 %v395, %v398
      %vm400 = vweird.f32 %v363
      %vm401 = vweird.f32 %v395
      %vm402 = vmor %vm400, %vm401
      %v403 = vsel %vm402, %v395, %v399
      %v404 = vand.u32 2147483647, %v363
      %vm405 = vcmp.eq.f32.partialorder %v404, 8.507059e+37
      %v406 = vand.u32 %v363, 2147483648
      %v407 = vor.u32 1.1754944e-38, %v406
      %v408 = vsel %vm405, %v407, %v403
      %v409 = vmul.f32 1.0, %v408
      %v410 = vrcp.pop %v364
      %v411 = vmul.f32 %v364, %v410
      %v412 = vsub.f32 1.0, %v411
      %v413 = vmul.f32 %v410, %v412
      %v414 = vadd.f32 %v410, %v413
      %vm415 = vweird.f32 %v364
      %vm416 = vweird.f32 %v410
      %vm417 = vmor %vm415, %vm416
      %v418 = vsel %vm417, %v410, %v414
      %v419 = vand.u32 2147483647, %v364
      %vm420 = vcmp.eq.f32.partialorder %v419, 8.507059e+37
      %v421 = vand.u32 %v364, 2147483648
      %v422 = vor.u32 1.1754944e-38, %v421
      %v423 = vsel %vm420, %v422, %v418
      %v424 = vmul.f32 1.0, %v423
      %v425 = vmul.f32 %v285, %v379
      %v426 = vmul.f32 %v286, %v394
      %v427 = vmul.f32 %v287, %v409
      %v428 = vmul.f32 %v288, %v424
      %429 = vst.msk [vmem:[%s224] sm:$0xff] %vm289, %v425
      %430 = vst.msk [vmem:[%s224 + $0x8] sm:$0xff] %vm289, %v426
      %431 = vst.msk [vmem:[%s224 + $0x10] sm:$0xff] %vm289, %v427
      %432 = vst.msk [vmem:[%s224 + $0x18] sm:$0xff] %vm289, %v428
      %p433 = scmp.lt.s32.totalorder %s16, 1
      %s434 = scalar_select %p433, %s16, 1
      %s435 = smul.addr %s434, 4
      %s436 = smul.addr %s435, 8
      %s437 = scalar_lea.vmem %s5, %s436
      // Predicated region
      $region41: #{nested_unet.38} parent=39 // pred_check
        %p438 = pneg %p144
      $region42: #{nested_unet.38} parent=39 // pred_check_branch
        %440 = sbr.rel (%p438) target = $region44
      $region43: #{nested_unet.38} parent=39 // pred_region
        _
      $region44: #{nested_unet.38} parent=39 // pred_fallthru
        _
    $region40: #{nested_unet.38} parent=5 // pred_fallthru
      _
    %p441 = scmp.le.s32.totalorder 2, %s11
    // Predicated region
    $region45: #{nested_unet.38} parent=5 // pred_check
      %p442 = pneg %p441
    $region46: #{nested_unet.38} parent=5 // pred_check_branch
      %444 = sbr.rel (%p442) target = $region48
    $region47: #{nested_unet.38} parent=5 // pred_region
      %s445 = ssub.s32 %s11, 2
      // Predicated region
      $region49: #{nested_unet.38} parent=47 // pred_check
        %p446 = pneg %p150
      $region50: #{nested_unet.38} parent=47 // pred_check_branch
        %448 = sbr.rel (%p446) target = $region52
      $region51: #{nested_unet.38} parent=47 // pred_region
        %p449 = scmp.lt.s32.totalorder %s17, 1
        %s450 = scalar_select %p449, %s17, 1
        %s451 = smul.addr %s450, 4
        %s452 = smul.addr %s451, 8
        %s453 = scalar_lea.vmem %s5, %s452
      $region52: #{nested_unet.38} parent=47 // pred_fallthru
        _
    $region48: #{nested_unet.38} parent=5 // pred_fallthru
      _
  $region6: #{nested_unet.38} parent=0 // loop_footer
    %s15 = sadd.s32 1, %s11
  $region7: #{nested_unet.38} parent=0 // loop_footer_branch
    %10 = sbr.rel target = $region3
  $region8: #{nested_unet.38} parent=0 // loop_exit
    _

// kernel: nested_unet.43
$region0: #{nested_unet.43}
  #allocation0 [shape = 'u32[]', space=smem, size = 0x4, offset = 0x4, fixed_abs, tag = 'smem constant byte address 0x4 - core index']
  #allocation1 [shape = 'u32[72,128]{1,0:T(1,128)}', space=vmem, size = 0x9000, scoped, tag = 'internal scratch']
  %s0 = inlined_call_operand.vmem [shape: f32[2,32,4], index: 0, kind: input, shape index: {}]
  %s1 = inlined_call_operand.vmem [shape: f32[32,1], index: 1, kind: input, shape index: {}]
  %s2 = inlined_call_operand.vmem [shape: f32[32,1], index: 2, kind: input, shape index: {}]
  %s3 = inlined_call_operand.vmem [shape: f32[2,32,4], index: 3, kind: output, shape index: {}]
  %s4 = sld [smem:[#allocation0]]
  $region45: #{nested_unet.43} parent=0
    _
  %s6 = ssub.s32 1, %s4
  %s7 = scalar_select 0, %s6, %s4
  loop: start=0, step=1, limit=4
  $region2: #{nested_unet.43} parent=0 // loop_pre_header
    _
  $region3: #{nested_unet.43} parent=0 // loop_header
    %s9 = sphi 0, %s13
    %p10 = scmp.ge.s32.totalorder %s9, 4
    %s19 = sphi 0, %s21
    %s22 = sphi 0, %s19
    %s23 = sphi 0, %s22
    %s39 = sphi 0, %s23
    %s43 = sphi 0, %s43
    %s45 = sphi 0, %s43
    %s46 = sphi 0, %s45
    %s60 = sphi 0, %s46
    %s64 = sphi 0, %s64
    %s66 = sphi 0, %s64
    %s67 = sphi 0, %s66
    %s81 = sphi 0, %s67
    %s87 = sphi 0, %s89
    %s90 = sphi 0, %s87
    %s91 = sphi 0, %s90
    %s107 = sphi 0, %s91
  $region4: #{nested_unet.43} parent=0 // loop_header_branch
    %12 = sbr.rel (%p10) target = $region8
  $region5: #{nested_unet.43} parent=0 // loop_body
    %s14 = ssub.s32 %s9, 1
    %s15 = ssub.s32 %s9, 2
    %s16 = sadd.s32 %s9, 1
    %s17 = ssub.s32 %s9, %s16
    %p18 = scmp.eq.s32.totalorder %s17, 0
    %s20 = sadd.s32 %s19, 1
    %s21 = scalar_select %p18, %s19, %s20
    %p24 = pneg %p18
    %p25 = scmp.eq.s32.totalorder %s9, 1
    %p26 = por %p24, %p25
    %p27 = scmp.ne.s32.totalorder %s19, %s22
    %p28 = scmp.eq.s32.totalorder %s9, 0
    %p29 = por %p27, %p28
    %p30 = scmp.ne.s32.totalorder %s19, %s22
    %p31 = scmp.eq.s32.totalorder %s14, 1
    %p32 = por %p30, %p31
    %p33 = scmp.ne.s32.totalorder %s22, %s23
    %p34 = scmp.eq.s32.totalorder %s14, 0
    %p35 = por %p33, %p34
    %p36 = scmp.ne.s32.totalorder %s22, %s23
    %p37 = scmp.eq.s32.totalorder %s15, 1
    %p38 = por %p36, %p37
    %p40 = scmp.ne.s32.totalorder %s23, %s39
    %p41 = scmp.eq.s32.totalorder %s15, 0
    %p42 = por %p40, %p41
    %s44 = sadd.s32 %s43, 1
    %p47 = scmp.eq.s32.totalorder %s9, 1
    %p48 = scmp.ne.s32.totalorder %s43, %s45
    %p49 = scmp.eq.s32.totalorder %s9, 0
    %p50 = por %p48, %p49
    %p51 = scmp.ne.s32.totalorder %s43, %s45
    %p52 = scmp.eq.s32.totalorder %s14, 1
    %p53 = por %p51, %p52
    %p54 = scmp.ne.s32.totalorder %s45, %s46
    %p55 = scmp.eq.s32.totalorder %s14, 0
    %p56 = por %p54, %p55
    %p57 = scmp.ne.s32.totalorder %s45, %s46
    %p58 = scmp.eq.s32.totalorder %s15, 1
    %p59 = por %p57, %p58
    %p61 = scmp.ne.s32.totalorder %s46, %s60
    %p62 = scmp.eq.s32.totalorder %s15, 0
    %p63 = por %p61, %p62
    %s65 = sadd.s32 %s64, 1
    %p68 = scmp.eq.s32.totalorder %s9, 1
    %p69 = scmp.ne.s32.totalorder %s64, %s66
    %p70 = scmp.eq.s32.totalorder %s9, 0
    %p71 = por %p69, %p70
    %p72 = scmp.ne.s32.totalorder %s64, %s66
    %p73 = scmp.eq.s32.totalorder %s14, 1
    %p74 = por %p72, %p73
    %p75 = scmp.ne.s32.totalorder %s66, %s67
    %p76 = scmp.eq.s32.totalorder %s14, 0
    %p77 = por %p75, %p76
    %p78 = scmp.ne.s32.totalorder %s66, %s67
    %p79 = scmp.eq.s32.totalorder %s15, 1
    %p80 = por %p78, %p79
    %p82 = scmp.ne.s32.totalorder %s67, %s81
    %p83 = scmp.eq.s32.totalorder %s15, 0
    %p84 = por %p82, %p83
    %s85 = ssub.s32 %s9, %s16
    %p86 = scmp.eq.s32.totalorder %s85, 0
    %s88 = sadd.s32 %s87, 1
    %s89 = scalar_select %p86, %s87, %s88
    %p92 = pneg %p86
    %p93 = scmp.eq.s32.totalorder %s9, 1
    %p94 = por %p92, %p93
    %p95 = scmp.ne.s32.totalorder %s87, %s90
    %p96 = scmp.eq.s32.totalorder %s9, 0
    %p97 = por %p95, %p96
    %p98 = scmp.ne.s32.totalorder %s87, %s90
    %p99 = scmp.eq.s32.totalorder %s14, 1
    %p100 = por %p98, %p99
    %p101 = scmp.ne.s32.totalorder %s90, %s91
    %p102 = scmp.eq.s32.totalorder %s14, 0
    %p103 = por %p101, %p102
    %p104 = scmp.ne.s32.totalorder %s90, %s91
    %p105 = scmp.eq.s32.totalorder %s15, 1
    %p106 = por %p104, %p105
    %p108 = scmp.ne.s32.totalorder %s91, %s107
    %p109 = scmp.eq.s32.totalorder %s15, 0
    %p110 = por %p108, %p109
    %p111 = scmp.le.s32.totalorder 1, %s9
    %p112 = scmp.lt.s32.totalorder %s9, 3
    %p113 = pnand %p111, %p112
    %p114 = pneg %p113
    // Predicated region
    $region9: #{nested_unet.43} parent=5 // pred_check
      _
    $region10: #{nested_unet.43} parent=5 // pred_check_branch
      %116 = sbr.rel (%p113) target = $region12
    $region11: #{nested_unet.43} parent=5 // pred_region
      %s117 = ssub.s32 %s9, 1
      // Predicated region
      $region13: #{nested_unet.43} parent=11 // pred_check
        %p118 = pneg %p56
      $region14: #{nested_unet.43} parent=11 // pred_check_branch
        %120 = sbr.rel (%p118) target = $region16
      $region15: #{nested_unet.43} parent=11 // pred_region
        _
      $region16: #{nested_unet.43} parent=11 // pred_fallthru
        _
      // Predicated region
      $region17: #{nested_unet.43} parent=11 // pred_check
        %p121 = pneg %p77
      $region18: #{nested_unet.43} parent=11 // pred_check_branch
        %123 = sbr.rel (%p121) target = $region20
      $region19: #{nested_unet.43} parent=11 // pred_region
        _
      $region20: #{nested_unet.43} parent=11 // pred_fallthru
        _
    $region12: #{nested_unet.43} parent=5 // pred_fallthru
      _
    %p124 = scmp.lt.s32.totalorder %s9, 2
    // Predicated region
    $region21: #{nested_unet.43} parent=5 // pred_check
      %p125 = pneg %p124
    $region22: #{nested_unet.43} parent=5 // pred_check_branch
      %127 = sbr.rel (%p125) target = $region24
    $region23: #{nested_unet.43} parent=5 // pred_region
      // Predicated region
      $region25: #{nested_unet.43} parent=23 // pred_check
        %p128 = pneg %p29
      $region26: #{nested_unet.43} parent=23 // pred_check_branch
        %130 = sbr.rel (%p128) target = $region28
      $region27: #{nested_unet.43} parent=23 // pred_region
        %p131 = scmp.lt.s32.totalorder %s9, 1
        %s132 = scalar_select %p131, %s9, 1
        %s133 = smul.addr %s132, 4
        %s134 = smul.addr %s133, 8
        %s135 = scalar_lea.vmem %s0, %s134
      $region28: #{nested_unet.43} parent=23 // pred_fallthru
        _
    $region24: #{nested_unet.43} parent=5 // pred_fallthru
      _
    %p136 = scmp.le.s32.totalorder 1, %s9
    %p137 = scmp.lt.s32.totalorder %s9, 3
    %p138 = pnand %p136, %p137
    %p139 = pneg %p138
    // Predicated region
    $region29: #{nested_unet.43} parent=5 // pred_check
      _
    $region30: #{nested_unet.43} parent=5 // pred_check_branch
      %141 = sbr.rel (%p138) target = $region32
    $region31: #{nested_unet.43} parent=5 // pred_region
      %s142 = ssub.s32 %s9, 1
      %p143 = scmp.lt.s32.totalorder %s14, 1
      %s144 = scalar_select %p143, %s14, 1
      %s145 = smul.addr %s144, 4
      %s146 = smul.addr %s145, 8
      %s147 = scalar_lea.vmem %s0, %s146
      %p148 = pneg %p35
      %p149 = pneg %p32
      %p150 = pneg %p56
      %p151 = pneg %p53
      %p152 = pneg %p77
      %p153 = pneg %p74
      %p154 = pneg %p103
      %p155 = pneg %p100
      %p156 = scmp.lt.s32.totalorder %s14, 1
      %s157 = scalar_select %p156, %s14, 1
      %s158 = smul.addr %s157, 4
      %s159 = smul.addr %s158, 8
      %s160 = scalar_lea.vmem %s3, %s159
      %p161 = scmp.lt.s32.totalorder %s14, 1
      %s162 = scalar_select %p161, %s14, 1
      %s163 = smul.addr %s162, 4
      %s164 = smul.addr %s163, 8
      %s165 = scalar_lea.vmem %s0, %s164
      %p166 = scmp.lt.s32.totalorder %s14, 1
      %s167 = scalar_select %p166, %s14, 1
      %s168 = smul.addr %s167, 4
      %s169 = smul.addr %s168, 8
      %s170 = scalar_lea.vmem %s3, %s169
      %v171 = vld [vmem:[%s165] sm:$0xff]
      %v172 = vld [vmem:[%s165 + $0x8] sm:$0xff]
      %v173 = vld [vmem:[%s165 + $0x10] sm:$0xff]
      %v174 = vld [vmem:[%s165 + $0x18] sm:$0xff]
      %v175 = vld [vmem:[%s1] sm:$0xff]
      %v176 = vld [vmem:[%s1 + $0x8] sm:$0xff]
      %v177 = vld [vmem:[%s1 + $0x10] sm:$0xff]
      %v178 = vld [vmem:[%s1 + $0x18] sm:$0xff]
      %180 = vset.pattern.permute.xlu0 0
      %181 = vperm.xlu0 %180, %v175
      %v182 = vpop.permute.xlu0 %181
      %185 = vset.pattern.permute.xlu0 0
      %186 = vperm.xlu0 %185, %v176
      %v187 = vpop.permute.xlu0 %186
      %190 = vset.pattern.permute.xlu0 0
      %191 = vperm.xlu0 %190, %v177
      %v192 = vpop.permute.xlu0 %191
      %195 = vset.pattern.permute.xlu0 0
      %196 = vperm.xlu0 %195, %v178
      %v197 = vpop.permute.xlu0 %196
      %v199 = vmul.f32 %v171, %v182
      %v200 = vmul.f32 %v172, %v187
      %v201 = vmul.f32 %v173, %v192
      %v202 = vmul.f32 %v174, %v197
      %v203 = vld [vmem:[%s2] sm:$0xff]
      %v204 = vld [vmem:[%s2 + $0x8] sm:$0xff]
      %v205 = vld [vmem:[%s2 + $0x10] sm:$0xff]
      %v206 = vld [vmem:[%s2 + $0x18] sm:$0xff]
      %208 = vset.pattern.permute.xlu0 0
      %209 = vperm.xlu0 %208, %v203
      %v210 = vpop.permute.xlu0 %209
      %213 = vset.pattern.permute.xlu0 0
      %214 = vperm.xlu0 %213, %v204
      %v215 = vpop.permute.xlu0 %214
      %218 = vset.pattern.permute.xlu0 0
      %219 = vperm.xlu0 %218, %v205
      %v220 = vpop.permute.xlu0 %219
      %223 = vset.pattern.permute.xlu0 0
      %224 = vperm.xlu0 %223, %v206
      %v225 = vpop.permute.xlu0 %224
      %v227 = vadd.f32 %v199, %v210
      %v228 = vadd.f32 %v200, %v215
      %v229 = vadd.f32 %v201, %v220
      %v230 = vadd.f32 %v202, %v225
      %v231 = vmax.f32 %v227, 0.0
      %v232 = vmax.f32 %v228, 0.0
      %v233 = vmax.f32 %v229, 0.0
      %v234 = vmax.f32 %v230, 0.0
      %vm235 = vcmask 31744
      %236 = vst.msk [vmem:[%s170] sm:$0xff] %vm235, %v231
      %237 = vst.msk [vmem:[%s170 + $0x8] sm:$0xff] %vm235, %v232
      %238 = vst.msk [vmem:[%s170 + $0x10] sm:$0xff] %vm235, %v233
      %239 = vst.msk [vmem:[%s170 + $0x18] sm:$0xff] %vm235, %v234
      %p240 = scmp.lt.s32.totalorder %s14, 1
      %s241 = scalar_select %p240, %s14, 1
      %s242 = smul.addr %s241, 4
      %s243 = smul.addr %s242, 8
      %s244 = scalar_lea.vmem %s3, %s243
      // Predicated region
      $region33: #{nested_unet.43} parent=31 // pred_check
        %p245 = pneg %p100
      $region34: #{nested_unet.43} parent=31 // pred_check_branch
        %247 = sbr.rel (%p245) target = $region36
      $region35: #{nested_unet.43} parent=31 // pred_region
        _
      $region36: #{nested_unet.43} parent=31 // pred_fallthru
        _
    $region32: #{nested_unet.43} parent=5 // pred_fallthru
      _
    %p248 = scmp.le.s32.totalorder 2, %s9
    // Predicated region
    $region37: #{nested_unet.43} parent=5 // pred_check
      %p249 = pneg %p248
    $region38: #{nested_unet.43} parent=5 // pred_check_branch
      %251 = sbr.rel (%p249) target = $region40
    $region39: #{nested_unet.43} parent=5 // pred_region
      %s252 = ssub.s32 %s9, 2
      // Predicated region
      $region41: #{nested_unet.43} parent=39 // pred_check
        %p253 = pneg %p106
      $region42: #{nested_unet.43} parent=39 // pred_check_branch
        %255 = sbr.rel (%p253) target = $region44
      $region43: #{nested_unet.43} parent=39 // pred_region
        %p256 = scmp.lt.s32.totalorder %s15, 1
        %s257 = scalar_select %p256, %s15, 1
        %s258 = smul.addr %s257, 4
        %s259 = smul.addr %s258, 8
        %s260 = scalar_lea.vmem %s3, %s259
      $region44: #{nested_unet.43} parent=39 // pred_fallthru
        _
    $region40: #{nested_unet.43} parent=5 // pred_fallthru
      _
  $region6: #{nested_unet.43} parent=0 // loop_footer
    %s13 = sadd.s32 1, %s9
  $region7: #{nested_unet.43} parent=0 // loop_footer_branch
    %8 = sbr.rel target = $region3
  $region8: #{nested_unet.43} parent=0 // loop_exit
    _

// kernel: nested_unet.44
$region0: #{nested_unet.44}
  #allocation0 [shape = 'u32[]', space=smem, size = 0x4, offset = 0x4, fixed_abs, tag = 'smem constant byte address 0x4 - core index']
  #allocation1 [shape = 'u32[72,128]{1,0:T(1,128)}', space=vmem, size = 0x9000, scoped, tag = 'internal scratch']
  %s0 = inlined_call_operand.vmem [shape: f32[2,32,4], index: 0, kind: input, shape index: {}]
  %s1 = inlined_call_operand.vmem [shape: f32[32,1], index: 1, kind: input, shape index: {}]
  %s2 = inlined_call_operand.vmem [shape: f32[32,1], index: 2, kind: input, shape index: {}]
  %s3 = inlined_call_operand.vmem [shape: f32[32,4], index: 3, kind: input, shape index: {}]
  %s4 = inlined_call_operand.vmem [shape: f32[32,4], index: 4, kind: input, shape index: {}]
  %s5 = inlined_call_operand.vmem [shape: f32[2,32,4], index: 5, kind: output, shape index: {}]
  %s6 = sld [smem:[#allocation0]]
  $region53: #{nested_unet.44} parent=0
    _
  %s8 = ssub.s32 1, %s6
  %s9 = scalar_select 0, %s8, %s6
  loop: start=0, step=1, limit=4
  $region2: #{nested_unet.44} parent=0 // loop_pre_header
    _
  $region3: #{nested_unet.44} parent=0 // loop_header
    %s11 = sphi 0, %s15
    %p12 = scmp.ge.s32.totalorder %s11, 4
    %s21 = sphi 0, %s23
    %s24 = sphi 0, %s21
    %s25 = sphi 0, %s24
    %s41 = sphi 0, %s25
    %s45 = sphi 0, %s45
    %s47 = sphi 0, %s45
    %s48 = sphi 0, %s47
    %s62 = sphi 0, %s48
    %s66 = sphi 0, %s66
    %s68 = sphi 0, %s66
    %s69 = sphi 0, %s68
    %s83 = sphi 0, %s69
    %s87 = sphi 0, %s87
    %s89 = sphi 0, %s87
    %s90 = sphi 0, %s89
    %s104 = sphi 0, %s90
    %s108 = sphi 0, %s108
    %s110 = sphi 0, %s108
    %s111 = sphi 0, %s110
    %s125 = sphi 0, %s111
    %s131 = sphi 0, %s133
    %s134 = sphi 0, %s131
    %s135 = sphi 0, %s134
    %s151 = sphi 0, %s135
  $region4: #{nested_unet.44} parent=0 // loop_header_branch
    %14 = sbr.rel (%p12) target = $region8
  $region5: #{nested_unet.44} parent=0 // loop_body
    %s16 = ssub.s32 %s11, 1
    %s17 = ssub.s32 %s11, 2
    %s18 = sadd.s32 %s11, 1
    %s19 = ssub.s32 %s11, %s18
    %p20 = scmp.eq.s32.totalorder %s19, 0
    %s22 = sadd.s32 %s21, 1
    %s23 = scalar_select %p20, %s21, %s22
    %p26 = pneg %p20
    %p27 = scmp.eq.s32.totalorder %s11, 1
    %p28 = por %p26, %p27
    %p29 = scmp.ne.s32.totalorder %s21, %s24
    %p30 = scmp.eq.s32.totalorder %s11, 0
    %p31 = por %p29, %p30
    %p32 = scmp.ne.s32.totalorder %s21, %s24
    %p33 = scmp.eq.s32.totalorder %s16, 1
    %p34 = por %p32, %p33
    %p35 = scmp.ne.s32.totalorder %s24, %s25
    %p36 = scmp.eq.s32.totalorder %s16, 0
    %p37 = por %p35, %p36
    %p38 = scmp.ne.s32.totalorder %s24, %s25
    %p39 = scmp.eq.s32.totalorder %s17, 1
    %p40 = por %p38, %p39
    %p42 = scmp.ne.s32.totalorder %s25, %s41
    %p43 = scmp.eq.s32.totalorder %s17, 0
    %p44 = por %p42, %p43
    %s46 = sadd.s32 %s45, 1
    %p49 = scmp.eq.s32.totalorder %s11, 1
    %p50 = scmp.ne.s32.totalorder %s45, %s47
    %p51 = scmp.eq.s32.totalorder %s11, 0
    %p52 = por %p50, %p51
    %p53 = scmp.ne.s32.totalorder %s45, %s47
    %p54 = scmp.eq.s32.totalorder %s16, 1
    %p55 = por %p53, %p54
    %p56 = scmp.ne.s32.totalorder %s47, %s48
    %p57 = scmp.eq.s32.totalorder %s16, 0
    %p58 = por %p56, %p57
    %p59 = scmp.ne.s32.totalorder %s47, %s48
    %p60 = scmp.eq.s32.totalorder %s17, 1
    %p61 = por %p59, %p60
    %p63 = scmp.ne.s32.totalorder %s48, %s62
    %p64 = scmp.eq.s32.totalorder %s17, 0
    %p65 = por %p63, %p64
    %s67 = sadd.s32 %s66, 1
    %p70 = scmp.eq.s32.totalorder %s11, 1
    %p71 = scmp.ne.s32.totalorder %s66, %s68
    %p72 = scmp.eq.s32.totalorder %s11, 0
    %p73 = por %p71, %p72
    %p74 = scmp.ne.s32.totalorder %s66, %s68
    %p75 = scmp.eq.s32.totalorder %s16, 1
    %p76 = por %p74, %p75
    %p77 = scmp.ne.s32.totalorder %s68, %s69
    %p78 = scmp.eq.s32.totalorder %s16, 0
    %p79 = por %p77, %p78
    %p80 = scmp.ne.s32.totalorder %s68, %s69
    %p81 = scmp.eq.s32.totalorder %s17, 1
    %p82 = por %p80, %p81
    %p84 = scmp.ne.s32.totalorder %s69, %s83
    %p85 = scmp.eq.s32.totalorder %s17, 0
    %p86 = por %p84, %p85
    %s88 = sadd.s32 %s87, 1
    %p91 = scmp.eq.s32.totalorder %s11, 1
    %p92 = scmp.ne.s32.totalorder %s87, %s89
    %p93 = scmp.eq.s32.totalorder %s11, 0
    %p94 = por %p92, %p93
    %p95 = scmp.ne.s32.totalorder %s87, %s89
    %p96 = scmp.eq.s32.totalorder %s16, 1
    %p97 = por %p95, %p96
    %p98 = scmp.ne.s32.totalorder %s89, %s90
    %p99 = scmp.eq.s32.totalorder %s16, 0
    %p100 = por %p98, %p99
    %p101 = scmp.ne.s32.totalorder %s89, %s90
    %p102 = scmp.eq.s32.totalorder %s17, 1
    %p103 = por %p101, %p102
    %p105 = scmp.ne.s32.totalorder %s90, %s104
    %p106 = scmp.eq.s32.totalorder %s17, 0
    %p107 = por %p105, %p106
    %s109 = sadd.s32 %s108, 1
    %p112 = scmp.eq.s32.totalorder %s11, 1
    %p113 = scmp.ne.s32.totalorder %s108, %s110
    %p114 = scmp.eq.s32.totalorder %s11, 0
    %p115 = por %p113, %p114
    %p116 = scmp.ne.s32.totalorder %s108, %s110
    %p117 = scmp.eq.s32.totalorder %s16, 1
    %p118 = por %p116, %p117
    %p119 = scmp.ne.s32.totalorder %s110, %s111
    %p120 = scmp.eq.s32.totalorder %s16, 0
    %p121 = por %p119, %p120
    %p122 = scmp.ne.s32.totalorder %s110, %s111
    %p123 = scmp.eq.s32.totalorder %s17, 1
    %p124 = por %p122, %p123
    %p126 = scmp.ne.s32.totalorder %s111, %s125
    %p127 = scmp.eq.s32.totalorder %s17, 0
    %p128 = por %p126, %p127
    %s129 = ssub.s32 %s11, %s18
    %p130 = scmp.eq.s32.totalorder %s129, 0
    %s132 = sadd.s32 %s131, 1
    %s133 = scalar_select %p130, %s131, %s132
    %p136 = pneg %p130
    %p137 = scmp.eq.s32.totalorder %s11, 1
    %p138 = por %p136, %p137
    %p139 = scmp.ne.s32.totalorder %s131, %s134
    %p140 = scmp.eq.s32.totalorder %s11, 0
    %p141 = por %p139, %p140
    %p142 = scmp.ne.s32.totalorder %s131, %s134
    %p143 = scmp.eq.s32.totalorder %s16, 1
    %p144 = por %p142, %p143
    %p145 = scmp.ne.s32.totalorder %s134, %s135
    %p146 = scmp.eq.s32.totalorder %s16, 0
    %p147 = por %p145, %p146
    %p148 = scmp.ne.s32.totalorder %s134, %s135
    %p149 = scmp.eq.s32.totalorder %s17, 1
    %p150 = por %p148, %p149
    %p152 = scmp.ne.s32.totalorder %s135, %s151
    %p153 = scmp.eq.s32.totalorder %s17, 0
    %p154 = por %p152, %p153
    %p155 = scmp.le.s32.totalorder 1, %s11
    %p156 = scmp.lt.s32.totalorder %s11, 3
    %p157 = pnand %p155, %p156
    %p158 = pneg %p157
    // Predicated region
    $region9: #{nested_unet.44} parent=5 // pred_check
      _
    $region10: #{nested_unet.44} parent=5 // pred_check_branch
      %160 = sbr.rel (%p157) target = $region12
    $region11: #{nested_unet.44} parent=5 // pred_region
      %s161 = ssub.s32 %s11, 1
      // Predicated region
      $region13: #{nested_unet.44} parent=11 // pred_check
        %p162 = pneg %p58
      $region14: #{nested_unet.44} parent=11 // pred_check_branch
        %164 = sbr.rel (%p162) target = $region16
      $region15: #{nested_unet.44} parent=11 // pred_region
        _
      $region16: #{nested_unet.44} parent=11 // pred_fallthru
        _
      // Predicated region
      $region17: #{nested_unet.44} parent=11 // pred_check
        %p165 = pneg %p79
      $region18: #{nested_unet.44} parent=11 // pred_check_branch
        %167 = sbr.rel (%p165) target = $region20
      $region19: #{nested_unet.44} parent=11 // pred_region
        _
      $region20: #{nested_unet.44} parent=11 // pred_fallthru
        _
      // Predicated region
      $region21: #{nested_unet.44} parent=11 // pred_check
        %p168 = pneg %p100
      $region22: #{nested_unet.44} parent=11 // pred_check_branch
        %170 = sbr.rel (%p168) target = $region24
      $region23: #{nested_unet.44} parent=11 // pred_region
        _
      $region24: #{nested_unet.44} parent=11 // pred_fallthru
        _
      // Predicated region
      $region25: #{nested_unet.44} parent=11 // pred_check
        %p171 = pneg %p121
      $region26: #{nested_unet.44} parent=11 // pred_check_branch
        %173 = sbr.rel (%p171) target = $region28
      $region27: #{nested_unet.44} parent=11 // pred_region
        _
      $region28: #{nested_unet.44} parent=11 // pred_fallthru
        _
    $region12: #{nested_unet.44} parent=5 // pred_fallthru
      _
    %p174 = scmp.lt.s32.totalorder %s11, 2
    // Predicated region
    $region29: #{nested_unet.44} parent=5 // pred_check
      %p175 = pneg %p174
    $region30: #{nested_unet.44} parent=5 // pred_check_branch
      %177 = sbr.rel (%p175) target = $region32
    $region31: #{nested_unet.44} parent=5 // pred_region
      // Predicated region
      $region33: #{nested_unet.44} parent=31 // pred_check
        %p178 = pneg %p31
      $region34: #{nested_unet.44} parent=31 // pred_check_branch
        %180 = sbr.rel (%p178) target = $region36
      $region35: #{nested_unet.44} parent=31 // pred_region
        %p181 = scmp.lt.s32.totalorder %s11, 1
        %s182 = scalar_select %p181, %s11, 1
        %s183 = smul.addr %s182, 4
        %s184 = smul.addr %s183, 8
        %s185 = scalar_lea.vmem %s0, %s184
      $region36: #{nested_unet.44} parent=31 // pred_fallthru
        _
    $region32: #{nested_unet.44} parent=5 // pred_fallthru
      _
    %p186 = scmp.le.s32.totalorder 1, %s11
    %p187 = scmp.lt.s32.totalorder %s11, 3
    %p188 = pnand %p186, %p187
    %p189 = pneg %p188
    // Predicated region
    $region37: #{nested_unet.44} parent=5 // pred_check
      _
    $region38: #{nested_unet.44} parent=5 // pred_check_branch
      %191 = sbr.rel (%p188) target = $region40
    $region39: #{nested_unet.44} parent=5 // pred_region
      %s192 = ssub.s32 %s11, 1
      %p193 = scmp.lt.s32.totalorder %s16, 1
      %s194 = scalar_select %p193, %s16, 1
      %s195 = smul.addr %s194, 4
      %s196 = smul.addr %s195, 8
      %s197 = scalar_lea.vmem %s0, %s196
      %p198 = pneg %p37
      %p199 = pneg %p34
      %p200 = pneg %p58
      %p201 = pneg %p55
      %p202 = pneg %p79
      %p203 = pneg %p76
      %p204 = pneg %p100
      %p205 = pneg %p97
      %p206 = pneg %p121
      %p207 = pneg %p118
      %p208 = pneg %p147
      %p209 = pneg %p144
      %p210 = scmp.lt.s32.totalorder %s16, 1
      %s211 = scalar_select %p210, %s16, 1
      %s212 = smul.addr %s211, 4
      %s213 = smul.addr %s212, 8
      %s214 = scalar_lea.vmem %s5, %s213
      %p215 = scmp.lt.s32.totalorder %s16, 1
      %s216 = scalar_select %p215, %s16, 1
      %s217 = smul.addr %s216, 4
      %s218 = smul.addr %s217, 8
      %s219 = scalar_lea.vmem %s0, %s218
      %p220 = scmp.lt.s32.totalorder %s16, 1
      %s221 = scalar_select %p220, %s16, 1
      %s222 = smul.addr %s221, 4
      %s223 = smul.addr %s222, 8
      %s224 = scalar_lea.vmem %s5, %s223
      %v225 = vld [vmem:[%s219] sm:$0xff]
      %v226 = vld [vmem:[%s219 + $0x8] sm:$0xff]
      %v227 = vld [vmem:[%s219 + $0x10] sm:$0xff]
      %v228 = vld [vmem:[%s219 + $0x18] sm:$0xff]
      %v229 = vld [vmem:[%s1] sm:$0xff]
      %v230 = vld [vmem:[%s1 + $0x8] sm:$0xff]
      %v231 = vld [vmem:[%s1 + $0x10] sm:$0xff]
      %v232 = vld [vmem:[%s1 + $0x18] sm:$0xff]
      %234 = vset.pattern.permute.xlu0 0
      %235 = vperm.xlu0 %234, %v229
      %v236 = vpop.permute.xlu0 %235
      %239 = vset.pattern.permute.xlu0 0
      %240 = vperm.xlu0 %239, %v230
      %v241 = vpop.permute.xlu0 %240
      %244 = vset.pattern.permute.xlu0 0
      %245 = vperm.xlu0 %244, %v231
      %v246 = vpop.permute.xlu0 %245
      %249 = vset.pattern.permute.xlu0 0
      %250 = vperm.xlu0 %249, %v232
      %v251 = vpop.permute.xlu0 %250
      %v253 = vmul.f32 %v225, %v236
      %v254 = vmul.f32 %v226, %v241
      %v255 = vmul.f32 %v227, %v246
      %v256 = vmul.f32 %v228, %v251
      %v257 = vld [vmem:[%s2] sm:$0xff]
      %v258 = vld [vmem:[%s2 + $0x8] sm:$0xff]
      %v259 = vld [vmem:[%s2 + $0x10] sm:$0xff]
      %v260 = vld [vmem:[%s2 + $0x18] sm:$0xff]
      %262 = vset.pattern.permute.xlu0 0
      %263 = vperm.xlu0 %262, %v257
      %v264 = vpop.permute.xlu0 %263
      %267 = vset.pattern.permute.xlu0 0
      %268 = vperm.xlu0 %267, %v258
      %v269 = vpop.permute.xlu0 %268
      %272 = vset.pattern.permute.xlu0 0
      %273 = vperm.xlu0 %272, %v259
      %v274 = vpop.permute.xlu0 %273
      %277 = vset.pattern.permute.xlu0 0
      %278 = vperm.xlu0 %277, %v260
      %v279 = vpop.permute.xlu0 %278
      %v281 = vadd.f32 %v253, %v264
      %v282 = vadd.f32 %v254, %v269
      %v283 = vadd.f32 %v255, %v274
      %v284 = vadd.f32 %v256, %v279
      %v285 = vmax.f32 %v281, 0.0
      %v286 = vmax.f32 %v282, 0.0
      %v287 = vmax.f32 %v283, 0.0
      %v288 = vmax.f32 %v284, 0.0
      %vm289 = vcmask 31744
      %v290 = vsel %vm289, %v285, 0.0
      %291 = vadd.xlane.f32.xlu0 %v290
      %v292 = vpop.xlane.xlu0 %291
      %v293 = vsel %vm289, %v286, 0.0
      %294 = vadd.xlane.f32.xlu0 %v293
      %v295 = vpop.xlane.xlu0 %294
      %v296 = vsel %vm289, %v287, 0.0
      %297 = vadd.xlane.f32.xlu0 %v296
      %v298 = vpop.xlane.xlu0 %297
      %v299 = vsel %vm289, %v288, 0.0
      %300 = vadd.xlane.f32.xlu0 %v299
      %v301 = vpop.xlane.xlu0 %300
      %v302 = vmul.f32 %v292, 0.25
      %v303 = vmul.f32 %v295, 0.25
      %v304 = vmul.f32 %v298, 0.25
      %v305 = vmul.f32 %v301, 0.25
      %v306 = vld [vmem:[%s3] sm:$0xff]
      %v307 = vld [vmem:[%s3 + $0x8] sm:$0xff]
      %v308 = vld [vmem:[%s3 + $0x10] sm:$0xff]
      %v309 = vld [vmem:[%s3 + $0x18] sm:$0xff]
      %v310 = vmul.f32 %v306, %v302
      %v311 = vmul.f32 %v307, %v303
      %v312 = vmul.f32 %v308, %v304
      %v313 = vmul.f32 %v309, %v305
      %v314 = vsel %vm289, %v310, 0.0
      %v315 = vsel %vm289, %v311, 0.0
      %v316 = vadd.f32 %v314, %v315
      %v317 = vsel %vm289, %v312, 0.0
      %v318 = vadd.f32 %v316, %v317
      %v319 = vsel %vm289, %v313, 0.0
      %v320 = vadd.f32 %v318, %v319
      %v321 = vrot.slane %v320, 4
      %v322 = vadd.f32 %v320, %v321
      %v323 = vrot.slane %v322, 2
      %v324 = vadd.f32 %v322, %v323
      %v325 = vrot.slane %v324, 1
      %v326 = vadd.f32 %v324, %v325
      %v327 = vmax.f32 %v326, 0.0
      %v328 = vld [vmem:[%s4] sm:$0xff]
      %v329 = vld [vmem:[%s4 + $0x8] sm:$0xff]
      %v330 = vld [vmem:[%s4 + $0x10] sm:$0xff]
      %v331 = vld [vmem:[%s4 + $0x18] sm:$0xff]
      %v332 = vmul.f32 %v328, %v327
      %v333 = vmul.f32 %v329, %v327
      %v334 = vmul.f32 %v330, %v327
      %v335 = vmul.f32 %v331, %v327
      %v336 = vsel %vm289, %v332, 0.0
      %337 = vadd.xlane.f32.xlu0 %v336
      %v338 = vpop.xlane.xlu0 %337
      %v339 = vsel %vm289, %v333, 0.0
      %340 = vadd.xlane.f32.xlu0 %v339
      %v341 = vpop.xlane.xlu0 %340
      %v342 = vsel %vm289, %v334, 0.0
      %343 = vadd.xlane.f32.xlu0 %v342
      %v344 = vpop.xlane.xlu0 %343
      %v345 = vsel %vm289, %v335, 0.0
      %346 = vadd.xlane.f32.xlu0 %v345
      %v347 = vpop.xlane.xlu0 %346
      %v348 = vxor.u32 %v338, 2147483648
      %v349 = vxor.u32 %v341, 2147483648
      %v350 = vxor.u32 %v344, 2147483648
      %v351 = vxor.u32 %v347, 2147483648
      %v352 = vmul.f32 %v348, 1.442695
      %v353 = vpow.pop %v352
      %v354 = vmul.f32 %v349, 1.442695
      %v355 = vpow.pop %v354
      %v356 = vmul.f32 %v350, 1.442695
      %v357 = vpow.pop %v356
      %v358 = vmul.f32 %v351, 1.442695
      %v359 = vpow.pop %v358
      %v360 = vadd.f32 %v353, 1.0
      %v361 = vadd.f32 %v355, 1.0
      %v362 = vadd.f32 %v357, 1.0
      %v363 = vadd.f32 %v359, 1.0
      %v364 = vrcp.pop %v360
      %v365 = vmul.f32 %v360, %v364
      %v366 = vsub.f32 1.0, %v365
      %v367 = vmul.f32 %v364, %v366
      %v368 = vadd.f32 %v364, %v367
      %vm369 = vweird.f32 %v360
      %vm370 = vweird.f32 %v364
      %vm371 = vmor %vm369, %vm370
      %v372 = vsel %vm371, %v364, %v368
      %v373 = vand.u32 2147483647, %v360
      %vm374 = vcmp.eq.f32.partialorder %v373, 8.507059e+37
      %v375 = vand.u32 %v360, 2147483648
      %v376 = vor.u32 1.1754944e-38, %v375
      %v377 = vsel %vm374, %v376, %v372
      %v378 = vmul.f32 1.0, %v377
      %v379 = vrcp.pop %v361
      %v380 = vmul.f32 %v361, %v379
      %v381 = vsub.f32 1.0, %v380
      %v382 = vmul.f32 %v379, %v381
      %v383 = vadd.f32 %v379, %v382
      %vm384 = vweird.f32 %v361
      %vm385 = vweird.f32 %v379
      %vm386 = vmor %vm384, %vm385
      %v387 = vsel %vm386, %v379, %v383
      %v388 = vand.u32 2147483647, %v361
      %vm389 = vcmp.eq.f32.partialorder %v388, 8.507059e+37
      %v390 = vand.u32 %v361, 2147483648
      %v391 = vor.u32 1.1754944e-38, %v390
      %v392 = vsel %vm389, %v391, %v387
      %v393 = vmul.f32 1.0, %v392
      %v394 = vrcp.pop %v362
      %v395 = vmul.f32 %v362, %v394
      %v396 = vsub.f32 1.0, %v395
      %v397 = vmul.f32 %v394, %v396
      %v398 = vadd.f32 %v394, %v397
      %vm399 = vweird.f32 %v362
      %vm400 = vweird.f32 %v394
      %vm401 = vmor %vm399, %vm400
      %v402 = vsel %vm401, %v394, %v398
      %v403 = vand.u32 2147483647, %v362
      %vm404 = vcmp.eq.f32.partialorder %v403, 8.507059e+37
      %v405 = vand.u32 %v362, 2147483648
      %v406 = vor.u32 1.1754944e-38, %v405
      %v407 = vsel %vm404, %v406, %v402
      %v408 = vmul.f32 1.0, %v407
      %v409 = vrcp.pop %v363
      %v410 = vmul.f32 %v363, %v409
      %v411 = vsub.f32 1.0, %v410
      %v412 = vmul.f32 %v409, %v411
      %v413 = vadd.f32 %v409, %v412
      %vm414 = vweird.f32 %v363
      %vm415 = vweird.f32 %v409
      %vm416 = vmor %vm414, %vm415
      %v417 = vsel %vm416, %v409, %v413
      %v418 = vand.u32 2147483647, %v363
      %vm419 = vcmp.eq.f32.partialorder %v418, 8.507059e+37
      %v420 = vand.u32 %v363, 2147483648
      %v421 = vor.u32 1.1754944e-38, %v420
      %v422 = vsel %vm419, %v421, %v417
      %v423 = vmul.f32 1.0, %v422
      %v424 = vmul.f32 %v285, %v378
      %v425 = vmul.f32 %v286, %v393
      %v426 = vmul.f32 %v287, %v408
      %v427 = vmul.f32 %v288, %v423
      %428 = vst.msk [vmem:[%s224] sm:$0xff] %vm289, %v424
      %429 = vst.msk [vmem:[%s224 + $0x8] sm:$0xff] %vm289, %v425
      %430 = vst.msk [vmem:[%s224 + $0x10] sm:$0xff] %vm289, %v426
      %431 = vst.msk [vmem:[%s224 + $0x18] sm:$0xff] %vm289, %v427
      %p432 = scmp.lt.s32.totalorder %s16, 1
      %s433 = scalar_select %p432, %s16, 1
      %s434 = smul.addr %s433, 4
      %s435 = smul.addr %s434, 8
      %s436 = scalar_lea.vmem %s5, %s435
      // Predicated region
      $region41: #{nested_unet.44} parent=39 // pred_check
        %p437 = pneg %p144
      $region42: #{nested_unet.44} parent=39 // pred_check_branch
        %439 = sbr.rel (%p437) target = $region44
      $region43: #{nested_unet.44} parent=39 // pred_region
        _
      $region44: #{nested_unet.44} parent=39 // pred_fallthru
        _
    $region40: #{nested_unet.44} parent=5 // pred_fallthru
      _
    %p440 = scmp.le.s32.totalorder 2, %s11
    // Predicated region
    $region45: #{nested_unet.44} parent=5 // pred_check
      %p441 = pneg %p440
    $region46: #{nested_unet.44} parent=5 // pred_check_branch
      %443 = sbr.rel (%p441) target = $region48
    $region47: #{nested_unet.44} parent=5 // pred_region
      %s444 = ssub.s32 %s11, 2
      // Predicated region
      $region49: #{nested_unet.44} parent=47 // pred_check
        %p445 = pneg %p150
      $region50: #{nested_unet.44} parent=47 // pred_check_branch
        %447 = sbr.rel (%p445) target = $region52
      $region51: #{nested_unet.44} parent=47 // pred_region
        %p448 = scmp.lt.s32.totalorder %s17, 1
        %s449 = scalar_select %p448, %s17, 1
        %s450 = smul.addr %s449, 4
        %s451 = smul.addr %s450, 8
        %s452 = scalar_lea.vmem %s5, %s451
      $region52: #{nested_unet.44} parent=47 // pred_fallthru
        _
    $region48: #{nested_unet.44} parent=5 // pred_fallthru
      _
  $region6: #{nested_unet.44} parent=0 // loop_footer
    %s15 = sadd.s32 1, %s11
  $region7: #{nested_unet.44} parent=0 // loop_footer_branch
    %10 = sbr.rel target = $region3
  $region8: #{nested_unet.44} parent=0 // loop_exit
    _

// kernel: reverse.4
$region0: #{reverse.4}
  #allocation0 [shape = 's32[1]{0}', space=sflag, size = 0x4, scoped, tag = 'scoped memory for reverse.4']
  %s0 = inlined_call_operand.vmem [shape: f32[32,64,3,3], index: 0, kind: input, shape index: {}]
  %s1 = inlined_call_operand.vmem [shape: bf16[32,64,3,3], index: 1, kind: output, shape index: {}]
  %s2 = scalar_lea.vmem %s0, 256
  %v3 = vld [vmem:[%s2] sm:$0xff]
  %v4 = vpack.c.bf16 0.0, %v3
  %5 = vst [vmem:[%s1] sm:$0xf] %v4
  %s6 = scalar_lea.vmem %s0, 160
  %v7 = vld [vmem:[%s6] sm:$0xff]
  %s8 = scalar_lea.vmem %s1, 48
  %v9 = vpack.c.bf16 0.0, %v7
  %10 = vst [vmem:[%s8] sm:$0xf] %v9
  %s11 = scalar_lea.vmem %s0, 64
  %v12 = vld [vmem:[%s11] sm:$0xff]
  %s13 = scalar_lea.vmem %s1, 96
  %v14 = vpack.c.bf16 0.0, %v12
  %15 = vst [vmem:[%s13] sm:$0xf] %v14
  %s16 = scalar_lea.vmem %s0, 224
  %v17 = vld [vmem:[%s16] sm:$0xff]
  %s18 = scalar_lea.vmem %s1, 16
  %v19 = vpack.c.bf16 0.0, %v17
  %20 = vst [vmem:[%s18] sm:$0xf] %v19
  %s21 = scalar_lea.vmem %s0, 128
  %v22 = vld [vmem:[%s21] sm:$0xff]
  %s23 = scalar_lea.vmem %s1, 64
  %v24 = vpack.c.bf16 0.0, %v22
  %25 = vst [vmem:[%s23] sm:$0xf] %v24
  %s26 = scalar_lea.vmem %s0, 32
  %v27 = vld [vmem:[%s26] sm:$0xff]
  %s28 = scalar_lea.vmem %s1, 112
  %v29 = vpack.c.bf16 0.0, %v27
  %30 = vst [vmem:[%s28] sm:$0xf] %v29
  %s31 = scalar_lea.vmem %s0, 192
  %v32 = vld [vmem:[%s31] sm:$0xff]
  %s33 = scalar_lea.vmem %s1, 32
  %v34 = vpack.c.bf16 0.0, %v32
  %35 = vst [vmem:[%s33] sm:$0xf] %v34
  %s36 = scalar_lea.vmem %s0, 96
  %v37 = vld [vmem:[%s36] sm:$0xff]
  %s38 = scalar_lea.vmem %s1, 80
  %v39 = vpack.c.bf16 0.0, %v37
  %40 = vst [vmem:[%s38] sm:$0xf] %v39
  %v41 = vld [vmem:[%s0] sm:$0xff]
  %s42 = scalar_lea.vmem %s1, 128
  %v43 = vpack.c.bf16 0.0, %v41
  %44 = vst [vmem:[%s42] sm:$0xf] %v43
  %s45 = scalar_lea.vmem %s0, 264
  %v46 = vld [vmem:[%s45] sm:$0xff]
  %s47 = scalar_lea.vmem %s1, 4
  %v48 = vpack.c.bf16 0.0, %v46
  %49 = vst [vmem:[%s47] sm:$0xf] %v48
  %s50 = scalar_lea.vmem %s0, 168
  %v51 = vld [vmem:[%s50] sm:$0xff]
  %s52 = scalar_lea.vmem %s1, 52
  %v53 = vpack.c.bf16 0.0, %v51
  %54 = vst [vmem:[%s52] sm:$0xf] %v53
  %s55 = scalar_lea.vmem %s0, 72
  %v56 = vld [vmem:[%s55] sm:$0xff]
  %s57 = scalar_lea.vmem %s1, 100
  %v58 = vpack.c.bf16 0.0, %v56
  %59 = vst [vmem:[%s57] sm:$0xf] %v58
  %s60 = scalar_lea.vmem %s0, 232
  %v61 = vld [vmem:[%s60] sm:$0xff]
  %s62 = scalar_lea.vmem %s1, 20
  %v63 = vpack.c.bf16 0.0, %v61
  %64 = vst [vmem:[%s62] sm:$0xf] %v63
  %s65 = scalar_lea.vmem %s0, 136
  %v66 = vld [vmem:[%s65] sm:$0xff]
  %s67 = scalar_lea.vmem %s1, 68
  %v68 = vpack.c.bf16 0.0, %v66
  %69 = vst [vmem:[%s67] sm:$0xf] %v68
  %s70 = scalar_lea.vmem %s0, 40
  %v71 = vld [vmem:[%s70] sm:$0xff]
  %s72 = scalar_lea.vmem %s1, 116
  %v73 = vpack.c.bf16 0.0, %v71
  %74 = vst [vmem:[%s72] sm:$0xf] %v73
  %s75 = scalar_lea.vmem %s0, 200
  %v76 = vld [vmem:[%s75] sm:$0xff]
  %s77 = scalar_lea.vmem %s1, 36
  %v78 = vpack.c.bf16 0.0, %v76
  %79 = vst [vmem:[%s77] sm:$0xf] %v78
  %s80 = scalar_lea.vmem %s0, 104
  %v81 = vld [vmem:[%s80] sm:$0xff]
  %s82 = scalar_lea.vmem %s1, 84
  %v83 = vpack.c.bf16 0.0, %v81
  %84 = vst [vmem:[%s82] sm:$0xf] %v83
  %s85 = scalar_lea.vmem %s0, 8
  %v86 = vld [vmem:[%s85] sm:$0xff]
  %s87 = scalar_lea.vmem %s1, 132
  %v88 = vpack.c.bf16 0.0, %v86
  %89 = vst [vmem:[%s87] sm:$0xf] %v88
  %s90 = scalar_lea.vmem %s0, 272
  %v91 = vld [vmem:[%s90] sm:$0xff]
  %s92 = scalar_lea.vmem %s1, 8
  %v93 = vpack.c.bf16 0.0, %v91
  %94 = vst [vmem:[%s92] sm:$0xf] %v93
  %s95 = scalar_lea.vmem %s0, 176
  %v96 = vld [vmem:[%s95] sm:$0xff]
  %s97 = scalar_lea.vmem %s1, 56
  %v98 = vpack.c.bf16 0.0, %v96
  %99 = vst [vmem:[%s97] sm:$0xf] %v98
  %s100 = scalar_lea.vmem %s0, 80
  %v101 = vld [vmem:[%s100] sm:$0xff]
  %s102 = scalar_lea.vmem %s1, 104
  %v103 = vpack.c.bf16 0.0, %v101
  %104 = vst [vmem:[%s102] sm:$0xf] %v103
  %s105 = scalar_lea.vmem %s0, 240
  %v106 = vld [vmem:[%s105] sm:$0xff]
  %s107 = scalar_lea.vmem %s1, 24
  %v108 = vpack.c.bf16 0.0, %v106
  %109 = vst [vmem:[%s107] sm:$0xf] %v108
  %s110 = scalar_lea.vmem %s0, 144
  %v111 = vld [vmem:[%s110] sm:$0xff]
  %s112 = scalar_lea.vmem %s1, 72
  %v113 = vpack.c.bf16 0.0, %v111
  %114 = vst [vmem:[%s112] sm:$0xf] %v113
  %s115 = scalar_lea.vmem %s0, 48
  %v116 = vld [vmem:[%s115] sm:$0xff]
  %s117 = scalar_lea.vmem %s1, 120
  %v118 = vpack.c.bf16 0.0, %v116
  %119 = vst [vmem:[%s117] sm:$0xf] %v118
  %s120 = scalar_lea.vmem %s0, 208
  %v121 = vld [vmem:[%s120] sm:$0xff]
  %s122 = scalar_lea.vmem %s1, 40
  %v123 = vpack.c.bf16 0.0, %v121
  %124 = vst [vmem:[%s122] sm:$0xf] %v123
  %s125 = scalar_lea.vmem %s0, 112
  %v126 = vld [vmem:[%s125] sm:$0xff]
  %s127 = scalar_lea.vmem %s1, 88
  %v128 = vpack.c.bf16 0.0, %v126
  %129 = vst [vmem:[%s127] sm:$0xf] %v128
  %s130 = scalar_lea.vmem %s0, 16
  %v131 = vld [vmem:[%s130] sm:$0xff]
  %s132 = scalar_lea.vmem %s1, 136
  %v133 = vpack.c.bf16 0.0, %v131
  %134 = vst [vmem:[%s132] sm:$0xf] %v133
  %s135 = scalar_lea.vmem %s0, 280
  %v136 = vld [vmem:[%s135] sm:$0xff]
  %s137 = scalar_lea.vmem %s1, 12
  %v138 = vpack.c.bf16 0.0, %v136
  %139 = vst [vmem:[%s137] sm:$0xf] %v138
  %s140 = scalar_lea.vmem %s0, 184
  %v141 = vld [vmem:[%s140] sm:$0xff]
  %s142 = scalar_lea.vmem %s1, 60
  %v143 = vpack.c.bf16 0.0, %v141
  %144 = vst [vmem:[%s142] sm:$0xf] %v143
  %s145 = scalar_lea.vmem %s0, 88
  %v146 = vld [vmem:[%s145] sm:$0xff]
  %s147 = scalar_lea.vmem %s1, 108
  %v148 = vpack.c.bf16 0.0, %v146
  %149 = vst [vmem:[%s147] sm:$0xf] %v148
  %s150 = scalar_lea.vmem %s0, 248
  %v151 = vld [vmem:[%s150] sm:$0xff]
  %s152 = scalar_lea.vmem %s1, 28
  %v153 = vpack.c.bf16 0.0, %v151
  %154 = vst [vmem:[%s152] sm:$0xf] %v153
  %s155 = scalar_lea.vmem %s0, 152
  %v156 = vld [vmem:[%s155] sm:$0xff]
  %s157 = scalar_lea.vmem %s1, 76
  %v158 = vpack.c.bf16 0.0, %v156
  %159 = vst [vmem:[%s157] sm:$0xf] %v158
  %s160 = scalar_lea.vmem %s0, 56
  %v161 = vld [vmem:[%s160] sm:$0xff]
  %s162 = scalar_lea.vmem %s1, 124
  %v163 = vpack.c.bf16 0.0, %v161
  %164 = vst [vmem:[%s162] sm:$0xf] %v163
  %s165 = scalar_lea.vmem %s0, 216
  %v166 = vld [vmem:[%s165] sm:$0xff]
  %s167 = scalar_lea.vmem %s1, 44
  %v168 = vpack.c.bf16 0.0, %v166
  %169 = vst [vmem:[%s167] sm:$0xf] %v168
  %s170 = scalar_lea.vmem %s0, 120
  %v171 = vld [vmem:[%s170] sm:$0xff]
  %s172 = scalar_lea.vmem %s1, 92
  %v173 = vpack.c.bf16 0.0, %v171
  %174 = vst [vmem:[%s172] sm:$0xf] %v173
  %s175 = scalar_lea.vmem %s0, 24
  %v176 = vld [vmem:[%s175] sm:$0xff]
  %s177 = scalar_lea.vmem %s1, 140
  %v178 = vpack.c.bf16 0.0, %v176
  %179 = vst [vmem:[%s177] sm:$0xf] %v178

// kernel: nested_unet.51
$region0: #{nested_unet.51}
  #allocation0 [shape = 'u32[]', space=smem, size = 0x4, offset = 0x4, fixed_abs, tag = 'smem constant byte address 0x4 - core index']
  #allocation1 [shape = 'u32[72,128]{1,0:T(1,128)}', space=vmem, size = 0x9000, scoped, tag = 'internal scratch']
  %s0 = inlined_call_operand.vmem [shape: f32[2,32,1], index: 0, kind: input, shape index: {}]
  %s1 = inlined_call_operand.vmem [shape: f32[32,1], index: 1, kind: input, shape index: {}]
  %s2 = inlined_call_operand.vmem [shape: f32[32,1], index: 2, kind: input, shape index: {}]
  %s3 = inlined_call_operand.vmem [shape: f32[2,32,1], index: 3, kind: output, shape index: {}]
  %s4 = sld [smem:[#allocation0]]
  $region45: #{nested_unet.51} parent=0
    _
  %s6 = ssub.s32 1, %s4
  %s7 = scalar_select 0, %s6, %s4
  loop: start=0, step=1, limit=4
  $region2: #{nested_unet.51} parent=0 // loop_pre_header
    _
  $region3: #{nested_unet.51} parent=0 // loop_header
    %s9 = sphi 0, %s13
    %p10 = scmp.ge.s32.totalorder %s9, 4
    %s19 = sphi 0, %s21
    %s22 = sphi 0, %s19
    %s23 = sphi 0, %s22
    %s39 = sphi 0, %s23
    %s43 = sphi 0, %s43
    %s45 = sphi 0, %s43
    %s46 = sphi 0, %s45
    %s60 = sphi 0, %s46
    %s64 = sphi 0, %s64
    %s66 = sphi 0, %s64
    %s67 = sphi 0, %s66
    %s81 = sphi 0, %s67
    %s87 = sphi 0, %s89
    %s90 = sphi 0, %s87
    %s91 = sphi 0, %s90
    %s107 = sphi 0, %s91
  $region4: #{nested_unet.51} parent=0 // loop_header_branch
    %12 = sbr.rel (%p10) target = $region8
  $region5: #{nested_unet.51} parent=0 // loop_body
    %s14 = ssub.s32 %s9, 1
    %s15 = ssub.s32 %s9, 2
    %s16 = sadd.s32 %s9, 1
    %s17 = ssub.s32 %s9, %s16
    %p18 = scmp.eq.s32.totalorder %s17, 0
    %s20 = sadd.s32 %s19, 1
    %s21 = scalar_select %p18, %s19, %s20
    %p24 = pneg %p18
    %p25 = scmp.eq.s32.totalorder %s9, 1
    %p26 = por %p24, %p25
    %p27 = scmp.ne.s32.totalorder %s19, %s22
    %p28 = scmp.eq.s32.totalorder %s9, 0
    %p29 = por %p27, %p28
    %p30 = scmp.ne.s32.totalorder %s19, %s22
    %p31 = scmp.eq.s32.totalorder %s14, 1
    %p32 = por %p30, %p31
    %p33 = scmp.ne.s32.totalorder %s22, %s23
    %p34 = scmp.eq.s32.totalorder %s14, 0
    %p35 = por %p33, %p34
    %p36 = scmp.ne.s32.totalorder %s22, %s23
    %p37 = scmp.eq.s32.totalorder %s15, 1
    %p38 = por %p36, %p37
    %p40 = scmp.ne.s32.totalorder %s23, %s39
    %p41 = scmp.eq.s32.totalorder %s15, 0
    %p42 = por %p40, %p41
    %s44 = sadd.s32 %s43, 1
    %p47 = scmp.eq.s32.totalorder %s9, 1
    %p48 = scmp.ne.s32.totalorder %s43, %s45
    %p49 = scmp.eq.s32.totalorder %s9, 0
    %p50 = por %p48, %p49
    %p51 = scmp.ne.s32.totalorder %s43, %s45
    %p52 = scmp.eq.s32.totalorder %s14, 1
    %p53 = por %p51, %p52
    %p54 = scmp.ne.s32.totalorder %s45, %s46
    %p55 = scmp.eq.s32.totalorder %s14, 0
    %p56 = por %p54, %p55
    %p57 = scmp.ne.s32.totalorder %s45, %s46
    %p58 = scmp.eq.s32.totalorder %s15, 1
    %p59 = por %p57, %p58
    %p61 = scmp.ne.s32.totalorder %s46, %s60
    %p62 = scmp.eq.s32.totalorder %s15, 0
    %p63 = por %p61, %p62
    %s65 = sadd.s32 %s64, 1
    %p68 = scmp.eq.s32.totalorder %s9, 1
    %p69 = scmp.ne.s32.totalorder %s64, %s66
    %p70 = scmp.eq.s32.totalorder %s9, 0
    %p71 = por %p69, %p70
    %p72 = scmp.ne.s32.totalorder %s64, %s66
    %p73 = scmp.eq.s32.totalorder %s14, 1
    %p74 = por %p72, %p73
    %p75 = scmp.ne.s32.totalorder %s66, %s67
    %p76 = scmp.eq.s32.totalorder %s14, 0
    %p77 = por %p75, %p76
    %p78 = scmp.ne.s32.totalorder %s66, %s67
    %p79 = scmp.eq.s32.totalorder %s15, 1
    %p80 = por %p78, %p79
    %p82 = scmp.ne.s32.totalorder %s67, %s81
    %p83 = scmp.eq.s32.totalorder %s15, 0
    %p84 = por %p82, %p83
    %s85 = ssub.s32 %s9, %s16
    %p86 = scmp.eq.s32.totalorder %s85, 0
    %s88 = sadd.s32 %s87, 1
    %s89 = scalar_select %p86, %s87, %s88
    %p92 = pneg %p86
    %p93 = scmp.eq.s32.totalorder %s9, 1
    %p94 = por %p92, %p93
    %p95 = scmp.ne.s32.totalorder %s87, %s90
    %p96 = scmp.eq.s32.totalorder %s9, 0
    %p97 = por %p95, %p96
    %p98 = scmp.ne.s32.totalorder %s87, %s90
    %p99 = scmp.eq.s32.totalorder %s14, 1
    %p100 = por %p98, %p99
    %p101 = scmp.ne.s32.totalorder %s90, %s91
    %p102 = scmp.eq.s32.totalorder %s14, 0
    %p103 = por %p101, %p102
    %p104 = scmp.ne.s32.totalorder %s90, %s91
    %p105 = scmp.eq.s32.totalorder %s15, 1
    %p106 = por %p104, %p105
    %p108 = scmp.ne.s32.totalorder %s91, %s107
    %p109 = scmp.eq.s32.totalorder %s15, 0
    %p110 = por %p108, %p109
    %p111 = scmp.le.s32.totalorder 1, %s9
    %p112 = scmp.lt.s32.totalorder %s9, 3
    %p113 = pnand %p111, %p112
    %p114 = pneg %p113
    // Predicated region
    $region9: #{nested_unet.51} parent=5 // pred_check
      _
    $region10: #{nested_unet.51} parent=5 // pred_check_branch
      %116 = sbr.rel (%p113) target = $region12
    $region11: #{nested_unet.51} parent=5 // pred_region
      %s117 = ssub.s32 %s9, 1
      // Predicated region
      $region13: #{nested_unet.51} parent=11 // pred_check
        %p118 = pneg %p56
      $region14: #{nested_unet.51} parent=11 // pred_check_branch
        %120 = sbr.rel (%p118) target = $region16
      $region15: #{nested_unet.51} parent=11 // pred_region
        _
      $region16: #{nested_unet.51} parent=11 // pred_fallthru
        _
      // Predicated region
      $region17: #{nested_unet.51} parent=11 // pred_check
        %p121 = pneg %p77
      $region18: #{nested_unet.51} parent=11 // pred_check_branch
        %123 = sbr.rel (%p121) target = $region20
      $region19: #{nested_unet.51} parent=11 // pred_region
        _
      $region20: #{nested_unet.51} parent=11 // pred_fallthru
        _
    $region12: #{nested_unet.51} parent=5 // pred_fallthru
      _
    %p124 = scmp.lt.s32.totalorder %s9, 2
    // Predicated region
    $region21: #{nested_unet.51} parent=5 // pred_check
      %p125 = pneg %p124
    $region22: #{nested_unet.51} parent=5 // pred_check_branch
      %127 = sbr.rel (%p125) target = $region24
    $region23: #{nested_unet.51} parent=5 // pred_region
      // Predicated region
      $region25: #{nested_unet.51} parent=23 // pred_check
        %p128 = pneg %p29
      $region26: #{nested_unet.51} parent=23 // pred_check_branch
        %130 = sbr.rel (%p128) target = $region28
      $region27: #{nested_unet.51} parent=23 // pred_region
        %p131 = scmp.lt.s32.totalorder %s9, 1
        %s132 = scalar_select %p131, %s9, 1
        %s133 = smul.addr %s132, 4
        %s134 = smul.addr %s133, 8
        %s135 = scalar_lea.vmem %s0, %s134
      $region28: #{nested_unet.51} parent=23 // pred_fallthru
        _
    $region24: #{nested_unet.51} parent=5 // pred_fallthru
      _
    %p136 = scmp.le.s32.totalorder 1, %s9
    %p137 = scmp.lt.s32.totalorder %s9, 3
    %p138 = pnand %p136, %p137
    %p139 = pneg %p138
    // Predicated region
    $region29: #{nested_unet.51} parent=5 // pred_check
      _
    $region30: #{nested_unet.51} parent=5 // pred_check_branch
      %141 = sbr.rel (%p138) target = $region32
    $region31: #{nested_unet.51} parent=5 // pred_region
      %s142 = ssub.s32 %s9, 1
      %p143 = scmp.lt.s32.totalorder %s14, 1
      %s144 = scalar_select %p143, %s14, 1
      %s145 = smul.addr %s144, 4
      %s146 = smul.addr %s145, 8
      %s147 = scalar_lea.vmem %s0, %s146
      %p148 = pneg %p35
      %p149 = pneg %p32
      %p150 = pneg %p56
      %p151 = pneg %p53
      %p152 = pneg %p77
      %p153 = pneg %p74
      %p154 = pneg %p103
      %p155 = pneg %p100
      %p156 = scmp.lt.s32.totalorder %s14, 1
      %s157 = scalar_select %p156, %s14, 1
      %s158 = smul.addr %s157, 4
      %s159 = smul.addr %s158, 8
      %s160 = scalar_lea.vmem %s3, %s159
      %p161 = scmp.lt.s32.totalorder %s14, 1
      %s162 = scalar_select %p161, %s14, 1
      %s163 = smul.addr %s162, 4
      %s164 = smul.addr %s163, 8
      %s165 = scalar_lea.vmem %s0, %s164
      %p166 = scmp.lt.s32.totalorder %s14, 1
      %s167 = scalar_select %p166, %s14, 1
      %s168 = smul.addr %s167, 4
      %s169 = smul.addr %s168, 8
      %s170 = scalar_lea.vmem %s3, %s169
      %v171 = vld [vmem:[%s165] sm:$0xff]
      %v172 = vld [vmem:[%s165 + $0x8] sm:$0xff]
      %v173 = vld [vmem:[%s165 + $0x10] sm:$0xff]
      %v174 = vld [vmem:[%s165 + $0x18] sm:$0xff]
      %v175 = vld [vmem:[%s1] sm:$0xff]
      %v176 = vld [vmem:[%s1 + $0x8] sm:$0xff]
      %v177 = vld [vmem:[%s1 + $0x10] sm:$0xff]
      %v178 = vld [vmem:[%s1 + $0x18] sm:$0xff]
      %v179 = vmul.f32 %v171, %v175
      %v180 = vmul.f32 %v172, %v176
      %v181 = vmul.f32 %v173, %v177
      %v182 = vmul.f32 %v174, %v178
      %v183 = vld [vmem:[%s2] sm:$0xff]
      %v184 = vld [vmem:[%s2 + $0x8] sm:$0xff]
      %v185 = vld [vmem:[%s2 + $0x10] sm:$0xff]
      %v186 = vld [vmem:[%s2 + $0x18] sm:$0xff]
      %v187 = vadd.f32 %v179, %v183
      %v188 = vadd.f32 %v180, %v184
      %v189 = vadd.f32 %v181, %v185
      %v190 = vadd.f32 %v182, %v186
      %v191 = vmax.f32 %v187, 0.0
      %v192 = vmax.f32 %v188, 0.0
      %v193 = vmax.f32 %v189, 0.0
      %v194 = vmax.f32 %v190, 0.0
      %vm195 = vcmask 7168
      %196 = vst.msk [vmem:[%s170] sm:$0xff] %vm195, %v191
      %197 = vst.msk [vmem:[%s170 + $0x8] sm:$0xff] %vm195, %v192
      %198 = vst.msk [vmem:[%s170 + $0x10] sm:$0xff] %vm195, %v193
      %199 = vst.msk [vmem:[%s170 + $0x18] sm:$0xff] %vm195, %v194
      %p200 = scmp.lt.s32.totalorder %s14, 1
      %s201 = scalar_select %p200, %s14, 1
      %s202 = smul.addr %s201, 4
      %s203 = smul.addr %s202, 8
      %s204 = scalar_lea.vmem %s3, %s203
      // Predicated region
      $region33: #{nested_unet.51} parent=31 // pred_check
        %p205 = pneg %p100
      $region34: #{nested_unet.51} parent=31 // pred_check_branch
        %207 = sbr.rel (%p205) target = $region36
      $region35: #{nested_unet.51} parent=31 // pred_region
        _
      $region36: #{nested_unet.51} parent=31 // pred_fallthru
        _
    $region32: #{nested_unet.51} parent=5 // pred_fallthru
      _
    %p208 = scmp.le.s32.totalorder 2, %s9
    // Predicated region
    $region37: #{nested_unet.51} parent=5 // pred_check
      %p209 = pneg %p208
    $region38: #{nested_unet.51} parent=5 // pred_check_branch
      %211 = sbr.rel (%p209) target = $region40
    $region39: #{nested_unet.51} parent=5 // pred_region
      %s212 = ssub.s32 %s9, 2
      // Predicated region
      $region41: #{nested_unet.51} parent=39 // pred_check
        %p213 = pneg %p106
      $region42: #{nested_unet.51} parent=39 // pred_check_branch
        %215 = sbr.rel (%p213) target = $region44
      $region43: #{nested_unet.51} parent=39 // pred_region
        %p216 = scmp.lt.s32.totalorder %s15, 1
        %s217 = scalar_select %p216, %s15, 1
        %s218 = smul.addr %s217, 4
        %s219 = smul.addr %s218, 8
        %s220 = scalar_lea.vmem %s3, %s219
      $region44: #{nested_unet.51} parent=39 // pred_fallthru
        _
    $region40: #{nested_unet.51} parent=5 // pred_fallthru
      _
  $region6: #{nested_unet.51} parent=0 // loop_footer
    %s13 = sadd.s32 1, %s9
  $region7: #{nested_unet.51} parent=0 // loop_footer_branch
    %8 = sbr.rel target = $region3
  $region8: #{nested_unet.51} parent=0 // loop_exit
    _

// kernel: nested_unet.52
$region0: #{nested_unet.52}
  #allocation0 [shape = 'u32[]', space=smem, size = 0x4, offset = 0x4, fixed_abs, tag = 'smem constant byte address 0x4 - core index']
  #allocation1 [shape = 'u32[72,128]{1,0:T(1,128)}', space=vmem, size = 0x9000, scoped, tag = 'internal scratch']
  %s0 = inlined_call_operand.vmem [shape: f32[2,32,1], index: 0, kind: input, shape index: {}]
  %s1 = inlined_call_operand.vmem [shape: f32[32,1], index: 1, kind: input, shape index: {}]
  %s2 = inlined_call_operand.vmem [shape: f32[32,1], index: 2, kind: input, shape index: {}]
  %s3 = inlined_call_operand.vmem [shape: f32[32,4], index: 3, kind: input, shape index: {}]
  %s4 = inlined_call_operand.vmem [shape: f32[32,4], index: 4, kind: input, shape index: {}]
  %s5 = inlined_call_operand.vmem [shape: f32[2,32,1], index: 5, kind: output, shape index: {}]
  %s6 = sld [smem:[#allocation0]]
  $region53: #{nested_unet.52} parent=0
    _
  %s8 = ssub.s32 1, %s6
  %s9 = scalar_select 0, %s8, %s6
  loop: start=0, step=1, limit=4
  $region2: #{nested_unet.52} parent=0 // loop_pre_header
    _
  $region3: #{nested_unet.52} parent=0 // loop_header
    %s11 = sphi 0, %s15
    %p12 = scmp.ge.s32.totalorder %s11, 4
    %s21 = sphi 0, %s23
    %s24 = sphi 0, %s21
    %s25 = sphi 0, %s24
    %s41 = sphi 0, %s25
    %s45 = sphi 0, %s45
    %s47 = sphi 0, %s45
    %s48 = sphi 0, %s47
    %s62 = sphi 0, %s48
    %s66 = sphi 0, %s66
    %s68 = sphi 0, %s66
    %s69 = sphi 0, %s68
    %s83 = sphi 0, %s69
    %s87 = sphi 0, %s87
    %s89 = sphi 0, %s87
    %s90 = sphi 0, %s89
    %s104 = sphi 0, %s90
    %s108 = sphi 0, %s108
    %s110 = sphi 0, %s108
    %s111 = sphi 0, %s110
    %s125 = sphi 0, %s111
    %s131 = sphi 0, %s133
    %s134 = sphi 0, %s131
    %s135 = sphi 0, %s134
    %s151 = sphi 0, %s135
  $region4: #{nested_unet.52} parent=0 // loop_header_branch
    %14 = sbr.rel (%p12) target = $region8
  $region5: #{nested_unet.52} parent=0 // loop_body
    %s16 = ssub.s32 %s11, 1
    %s17 = ssub.s32 %s11, 2
    %s18 = sadd.s32 %s11, 1
    %s19 = ssub.s32 %s11, %s18
    %p20 = scmp.eq.s32.totalorder %s19, 0
    %s22 = sadd.s32 %s21, 1
    %s23 = scalar_select %p20, %s21, %s22
    %p26 = pneg %p20
    %p27 = scmp.eq.s32.totalorder %s11, 1
    %p28 = por %p26, %p27
    %p29 = scmp.ne.s32.totalorder %s21, %s24
    %p30 = scmp.eq.s32.totalorder %s11, 0
    %p31 = por %p29, %p30
    %p32 = scmp.ne.s32.totalorder %s21, %s24
    %p33 = scmp.eq.s32.totalorder %s16, 1
    %p34 = por %p32, %p33
    %p35 = scmp.ne.s32.totalorder %s24, %s25
    %p36 = scmp.eq.s32.totalorder %s16, 0
    %p37 = por %p35, %p36
    %p38 = scmp.ne.s32.totalorder %s24, %s25
    %p39 = scmp.eq.s32.totalorder %s17, 1
    %p40 = por %p38, %p39
    %p42 = scmp.ne.s32.totalorder %s25, %s41
    %p43 = scmp.eq.s32.totalorder %s17, 0
    %p44 = por %p42, %p43
    %s46 = sadd.s32 %s45, 1
    %p49 = scmp.eq.s32.totalorder %s11, 1
    %p50 = scmp.ne.s32.totalorder %s45, %s47
    %p51 = scmp.eq.s32.totalorder %s11, 0
    %p52 = por %p50, %p51
    %p53 = scmp.ne.s32.totalorder %s45, %s47
    %p54 = scmp.eq.s32.totalorder %s16, 1
    %p55 = por %p53, %p54
    %p56 = scmp.ne.s32.totalorder %s47, %s48
    %p57 = scmp.eq.s32.totalorder %s16, 0
    %p58 = por %p56, %p57
    %p59 = scmp.ne.s32.totalorder %s47, %s48
    %p60 = scmp.eq.s32.totalorder %s17, 1
    %p61 = por %p59, %p60
    %p63 = scmp.ne.s32.totalorder %s48, %s62
    %p64 = scmp.eq.s32.totalorder %s17, 0
    %p65 = por %p63, %p64
    %s67 = sadd.s32 %s66, 1
    %p70 = scmp.eq.s32.totalorder %s11, 1
    %p71 = scmp.ne.s32.totalorder %s66, %s68
    %p72 = scmp.eq.s32.totalorder %s11, 0
    %p73 = por %p71, %p72
    %p74 = scmp.ne.s32.totalorder %s66, %s68
    %p75 = scmp.eq.s32.totalorder %s16, 1
    %p76 = por %p74, %p75
    %p77 = scmp.ne.s32.totalorder %s68, %s69
    %p78 = scmp.eq.s32.totalorder %s16, 0
    %p79 = por %p77, %p78
    %p80 = scmp.ne.s32.totalorder %s68, %s69
    %p81 = scmp.eq.s32.totalorder %s17, 1
    %p82 = por %p80, %p81
    %p84 = scmp.ne.s32.totalorder %s69, %s83
    %p85 = scmp.eq.s32.totalorder %s17, 0
    %p86 = por %p84, %p85
    %s88 = sadd.s32 %s87, 1
    %p91 = scmp.eq.s32.totalorder %s11, 1
    %p92 = scmp.ne.s32.totalorder %s87, %s89
    %p93 = scmp.eq.s32.totalorder %s11, 0
    %p94 = por %p92, %p93
    %p95 = scmp.ne.s32.totalorder %s87, %s89
    %p96 = scmp.eq.s32.totalorder %s16, 1
    %p97 = por %p95, %p96
    %p98 = scmp.ne.s32.totalorder %s89, %s90
    %p99 = scmp.eq.s32.totalorder %s16, 0
    %p100 = por %p98, %p99
    %p101 = scmp.ne.s32.totalorder %s89, %s90
    %p102 = scmp.eq.s32.totalorder %s17, 1
    %p103 = por %p101, %p102
    %p105 = scmp.ne.s32.totalorder %s90, %s104
    %p106 = scmp.eq.s32.totalorder %s17, 0
    %p107 = por %p105, %p106
    %s109 = sadd.s32 %s108, 1
    %p112 = scmp.eq.s32.totalorder %s11, 1
    %p113 = scmp.ne.s32.totalorder %s108, %s110
    %p114 = scmp.eq.s32.totalorder %s11, 0
    %p115 = por %p113, %p114
    %p116 = scmp.ne.s32.totalorder %s108, %s110
    %p117 = scmp.eq.s32.totalorder %s16, 1
    %p118 = por %p116, %p117
    %p119 = scmp.ne.s32.totalorder %s110, %s111
    %p120 = scmp.eq.s32.totalorder %s16, 0
    %p121 = por %p119, %p120
    %p122 = scmp.ne.s32.totalorder %s110, %s111
    %p123 = scmp.eq.s32.totalorder %s17, 1
    %p124 = por %p122, %p123
    %p126 = scmp.ne.s32.totalorder %s111, %s125
    %p127 = scmp.eq.s32.totalorder %s17, 0
    %p128 = por %p126, %p127
    %s129 = ssub.s32 %s11, %s18
    %p130 = scmp.eq.s32.totalorder %s129, 0
    %s132 = sadd.s32 %s131, 1
    %s133 = scalar_select %p130, %s131, %s132
    %p136 = pneg %p130
    %p137 = scmp.eq.s32.totalorder %s11, 1
    %p138 = por %p136, %p137
    %p139 = scmp.ne.s32.totalorder %s131, %s134
    %p140 = scmp.eq.s32.totalorder %s11, 0
    %p141 = por %p139, %p140
    %p142 = scmp.ne.s32.totalorder %s131, %s134
    %p143 = scmp.eq.s32.totalorder %s16, 1
    %p144 = por %p142, %p143
    %p145 = scmp.ne.s32.totalorder %s134, %s135
    %p146 = scmp.eq.s32.totalorder %s16, 0
    %p147 = por %p145, %p146
    %p148 = scmp.ne.s32.totalorder %s134, %s135
    %p149 = scmp.eq.s32.totalorder %s17, 1
    %p150 = por %p148, %p149
    %p152 = scmp.ne.s32.totalorder %s135, %s151
    %p153 = scmp.eq.s32.totalorder %s17, 0
    %p154 = por %p152, %p153
    %p155 = scmp.le.s32.totalorder 1, %s11
    %p156 = scmp.lt.s32.totalorder %s11, 3
    %p157 = pnand %p155, %p156
    %p158 = pneg %p157
    // Predicated region
    $region9: #{nested_unet.52} parent=5 // pred_check
      _
    $region10: #{nested_unet.52} parent=5 // pred_check_branch
      %160 = sbr.rel (%p157) target = $region12
    $region11: #{nested_unet.52} parent=5 // pred_region
      %s161 = ssub.s32 %s11, 1
      // Predicated region
      $region13: #{nested_unet.52} parent=11 // pred_check
        %p162 = pneg %p58
      $region14: #{nested_unet.52} parent=11 // pred_check_branch
        %164 = sbr.rel (%p162) target = $region16
      $region15: #{nested_unet.52} parent=11 // pred_region
        _
      $region16: #{nested_unet.52} parent=11 // pred_fallthru
        _
      // Predicated region
      $region17: #{nested_unet.52} parent=11 // pred_check
        %p165 = pneg %p79
      $region18: #{nested_unet.52} parent=11 // pred_check_branch
        %167 = sbr.rel (%p165) target = $region20
      $region19: #{nested_unet.52} parent=11 // pred_region
        _
      $region20: #{nested_unet.52} parent=11 // pred_fallthru
        _
      // Predicated region
      $region21: #{nested_unet.52} parent=11 // pred_check
        %p168 = pneg %p100
      $region22: #{nested_unet.52} parent=11 // pred_check_branch
        %170 = sbr.rel (%p168) target = $region24
      $region23: #{nested_unet.52} parent=11 // pred_region
        _
      $region24: #{nested_unet.52} parent=11 // pred_fallthru
        _
      // Predicated region
      $region25: #{nested_unet.52} parent=11 // pred_check
        %p171 = pneg %p121
      $region26: #{nested_unet.52} parent=11 // pred_check_branch
        %173 = sbr.rel (%p171) target = $region28
      $region27: #{nested_unet.52} parent=11 // pred_region
        _
      $region28: #{nested_unet.52} parent=11 // pred_fallthru
        _
    $region12: #{nested_unet.52} parent=5 // pred_fallthru
      _
    %p174 = scmp.lt.s32.totalorder %s11, 2
    // Predicated region
    $region29: #{nested_unet.52} parent=5 // pred_check
      %p175 = pneg %p174
    $region30: #{nested_unet.52} parent=5 // pred_check_branch
      %177 = sbr.rel (%p175) target = $region32
    $region31: #{nested_unet.52} parent=5 // pred_region
      // Predicated region
      $region33: #{nested_unet.52} parent=31 // pred_check
        %p178 = pneg %p31
      $region34: #{nested_unet.52} parent=31 // pred_check_branch
        %180 = sbr.rel (%p178) target = $region36
      $region35: #{nested_unet.52} parent=31 // pred_region
        %p181 = scmp.lt.s32.totalorder %s11, 1
        %s182 = scalar_select %p181, %s11, 1
        %s183 = smul.addr %s182, 4
        %s184 = smul.addr %s183, 8
        %s185 = scalar_lea.vmem %s0, %s184
      $region36: #{nested_unet.52} parent=31 // pred_fallthru
        _
    $region32: #{nested_unet.52} parent=5 // pred_fallthru
      _
    %p186 = scmp.le.s32.totalorder 1, %s11
    %p187 = scmp.lt.s32.totalorder %s11, 3
    %p188 = pnand %p186, %p187
    %p189 = pneg %p188
    // Predicated region
    $region37: #{nested_unet.52} parent=5 // pred_check
      _
    $region38: #{nested_unet.52} parent=5 // pred_check_branch
      %191 = sbr.rel (%p188) target = $region40
    $region39: #{nested_unet.52} parent=5 // pred_region
      %s192 = ssub.s32 %s11, 1
      %p193 = scmp.lt.s32.totalorder %s16, 1
      %s194 = scalar_select %p193, %s16, 1
      %s195 = smul.addr %s194, 4
      %s196 = smul.addr %s195, 8
      %s197 = scalar_lea.vmem %s0, %s196
      %p198 = pneg %p37
      %p199 = pneg %p34
      %p200 = pneg %p58
      %p201 = pneg %p55
      %p202 = pneg %p79
      %p203 = pneg %p76
      %p204 = pneg %p100
      %p205 = pneg %p97
      %p206 = pneg %p121
      %p207 = pneg %p118
      %p208 = pneg %p147
      %p209 = pneg %p144
      %p210 = scmp.lt.s32.totalorder %s16, 1
      %s211 = scalar_select %p210, %s16, 1
      %s212 = smul.addr %s211, 4
      %s213 = smul.addr %s212, 8
      %s214 = scalar_lea.vmem %s5, %s213
      %p215 = scmp.lt.s32.totalorder %s16, 1
      %s216 = scalar_select %p215, %s16, 1
      %s217 = smul.addr %s216, 4
      %s218 = smul.addr %s217, 8
      %s219 = scalar_lea.vmem %s0, %s218
      %p220 = scmp.lt.s32.totalorder %s16, 1
      %s221 = scalar_select %p220, %s16, 1
      %s222 = smul.addr %s221, 4
      %s223 = smul.addr %s222, 8
      %s224 = scalar_lea.vmem %s5, %s223
      %v225 = vld [vmem:[%s219] sm:$0xff]
      %v226 = vld [vmem:[%s219 + $0x8] sm:$0xff]
      %v227 = vld [vmem:[%s219 + $0x10] sm:$0xff]
      %v228 = vld [vmem:[%s219 + $0x18] sm:$0xff]
      %v229 = vld [vmem:[%s1] sm:$0xff]
      %v230 = vld [vmem:[%s1 + $0x8] sm:$0xff]
      %v231 = vld [vmem:[%s1 + $0x10] sm:$0xff]
      %v232 = vld [vmem:[%s1 + $0x18] sm:$0xff]
      %v233 = vmul.f32 %v225, %v229
      %v234 = vmul.f32 %v226, %v230
      %v235 = vmul.f32 %v227, %v231
      %v236 = vmul.f32 %v228, %v232
      %v237 = vld [vmem:[%s2] sm:$0xff]
      %v238 = vld [vmem:[%s2 + $0x8] sm:$0xff]
      %v239 = vld [vmem:[%s2 + $0x10] sm:$0xff]
      %v240 = vld [vmem:[%s2 + $0x18] sm:$0xff]
      %v241 = vadd.f32 %v233, %v237
      %v242 = vadd.f32 %v234, %v238
      %v243 = vadd.f32 %v235, %v239
      %v244 = vadd.f32 %v236, %v240
      %v245 = vmax.f32 %v241, 0.0
      %v246 = vmax.f32 %v242, 0.0
      %v247 = vmax.f32 %v243, 0.0
      %v248 = vmax.f32 %v244, 0.0
      %v249 = vadd.f32 %v245, 0.0
      %v250 = vadd.f32 %v246, 0.0
      %v251 = vadd.f32 %v247, 0.0
      %v252 = vadd.f32 %v248, 0.0
      %v253 = vld [vmem:[%s3] sm:$0xff]
      %v254 = vld [vmem:[%s3 + $0x8] sm:$0xff]
      %v255 = vld [vmem:[%s3 + $0x10] sm:$0xff]
      %v256 = vld [vmem:[%s3 + $0x18] sm:$0xff]
      %258 = vset.pattern.permute.xlu0 0
      %259 = vperm.xlu0 %258, %v249
      %v260 = vpop.permute.xlu0 %259
      %263 = vset.pattern.permute.xlu0 0
      %264 = vperm.xlu0 %263, %v250
      %v265 = vpop.permute.xlu0 %264
      %268 = vset.pattern.permute.xlu0 0
      %269 = vperm.xlu0 %268, %v251
      %v270 = vpop.permute.xlu0 %269
      %273 = vset.pattern.permute.xlu0 0
      %274 = vperm.xlu0 %273, %v252
      %v275 = vpop.permute.xlu0 %274
      %v277 = vmul.f32 %v253, %v260
      %v278 = vmul.f32 %v254, %v265
      %v279 = vmul.f32 %v255, %v270
      %v280 = vmul.f32 %v256, %v275
      %vm281 = vcmask 31744
      %v282 = vsel %vm281, %v277, 0.0
      %v283 = vsel %vm281, %v278, 0.0
      %v284 = vadd.f32 %v282, %v283
      %v285 = vsel %vm281, %v279, 0.0
      %v286 = vadd.f32 %v284, %v285
      %v287 = vsel %vm281, %v280, 0.0
      %v288 = vadd.f32 %v286, %v287
      %v289 = vrot.slane %v288, 4
      %v290 = vadd.f32 %v288, %v289
      %v291 = vrot.slane %v290, 2
      %v292 = vadd.f32 %v290, %v291
      %v293 = vrot.slane %v292, 1
      %v294 = vadd.f32 %v292, %v293
      %v295 = vmax.f32 %v294, 0.0
      %v296 = vld [vmem:[%s4] sm:$0xff]
      %v297 = vld [vmem:[%s4 + $0x8] sm:$0xff]
      %v298 = vld [vmem:[%s4 + $0x10] sm:$0xff]
      %v299 = vld [vmem:[%s4 + $0x18] sm:$0xff]
      %v300 = vmul.f32 %v296, %v295
      %v301 = vmul.f32 %v297, %v295
      %v302 = vmul.f32 %v298, %v295
      %v303 = vmul.f32 %v299, %v295
      %v304 = vsel %vm281, %v300, 0.0
      %305 = vadd.xlane.f32.xlu0 %v304
      %v306 = vpop.xlane.xlu0 %305
      %v307 = vsel %vm281, %v301, 0.0
      %308 = vadd.xlane.f32.xlu0 %v307
      %v309 = vpop.xlane.xlu0 %308
      %v310 = vsel %vm281, %v302, 0.0
      %311 = vadd.xlane.f32.xlu0 %v310
      %v312 = vpop.xlane.xlu0 %311
      %v313 = vsel %vm281, %v303, 0.0
      %314 = vadd.xlane.f32.xlu0 %v313
      %v315 = vpop.xlane.xlu0 %314
      %v316 = vxor.u32 %v306, 2147483648
      %v317 = vxor.u32 %v309, 2147483648
      %v318 = vxor.u32 %v312, 2147483648
      %v319 = vxor.u32 %v315, 2147483648
      %v320 = vmul.f32 %v316, 1.442695
      %v321 = vpow.pop %v320
      %v322 = vmul.f32 %v317, 1.442695
      %v323 = vpow.pop %v322
      %v324 = vmul.f32 %v318, 1.442695
      %v325 = vpow.pop %v324
      %v326 = vmul.f32 %v319, 1.442695
      %v327 = vpow.pop %v326
      %v328 = vadd.f32 %v321, 1.0
      %v329 = vadd.f32 %v323, 1.0
      %v330 = vadd.f32 %v325, 1.0
      %v331 = vadd.f32 %v327, 1.0
      %v332 = vrcp.pop %v328
      %v333 = vmul.f32 %v328, %v332
      %v334 = vsub.f32 1.0, %v333
      %v335 = vmul.f32 %v332, %v334
      %v336 = vadd.f32 %v332, %v335
      %vm337 = vweird.f32 %v328
      %vm338 = vweird.f32 %v332
      %vm339 = vmor %vm337, %vm338
      %v340 = vsel %vm339, %v332, %v336
      %v341 = vand.u32 2147483647, %v328
      %vm342 = vcmp.eq.f32.partialorder %v341, 8.507059e+37
      %v343 = vand.u32 %v328, 2147483648
      %v344 = vor.u32 1.1754944e-38, %v343
      %v345 = vsel %vm342, %v344, %v340
      %v346 = vmul.f32 1.0, %v345
      %v347 = vrcp.pop %v329
      %v348 = vmul.f32 %v329, %v347
      %v349 = vsub.f32 1.0, %v348
      %v350 = vmul.f32 %v347, %v349
      %v351 = vadd.f32 %v347, %v350
      %vm352 = vweird.f32 %v329
      %vm353 = vweird.f32 %v347
      %vm354 = vmor %vm352, %vm353
      %v355 = vsel %vm354, %v347, %v351
      %v356 = vand.u32 2147483647, %v329
      %vm357 = vcmp.eq.f32.partialorder %v356, 8.507059e+37
      %v358 = vand.u32 %v329, 2147483648
      %v359 = vor.u32 1.1754944e-38, %v358
      %v360 = vsel %vm357, %v359, %v355
      %v361 = vmul.f32 1.0, %v360
      %v362 = vrcp.pop %v330
      %v363 = vmul.f32 %v330, %v362
      %v364 = vsub.f32 1.0, %v363
      %v365 = vmul.f32 %v362, %v364
      %v366 = vadd.f32 %v362, %v365
      %vm367 = vweird.f32 %v330
      %vm368 = vweird.f32 %v362
      %vm369 = vmor %vm367, %vm368
      %v370 = vsel %vm369, %v362, %v366
      %v371 = vand.u32 2147483647, %v330
      %vm372 = vcmp.eq.f32.partialorder %v371, 8.507059e+37
      %v373 = vand.u32 %v330, 2147483648
      %v374 = vor.u32 1.1754944e-38, %v373
      %v375 = vsel %vm372, %v374, %v370
      %v376 = vmul.f32 1.0, %v375
      %v377 = vrcp.pop %v331
      %v378 = vmul.f32 %v331, %v377
      %v379 = vsub.f32 1.0, %v378
      %v380 = vmul.f32 %v377, %v379
      %v381 = vadd.f32 %v377, %v380
      %vm382 = vweird.f32 %v331
      %vm383 = vweird.f32 %v377
      %vm384 = vmor %vm382, %vm383
      %v385 = vsel %vm384, %v377, %v381
      %v386 = vand.u32 2147483647, %v331
      %vm387 = vcmp.eq.f32.partialorder %v386, 8.507059e+37
      %v388 = vand.u32 %v331, 2147483648
      %v389 = vor.u32 1.1754944e-38, %v388
      %v390 = vsel %vm387, %v389, %v385
      %v391 = vmul.f32 1.0, %v390
      %v392 = vmul.f32 %v245, %v346
      %v393 = vmul.f32 %v246, %v361
      %v394 = vmul.f32 %v247, %v376
      %v395 = vmul.f32 %v248, %v391
      %vm396 = vcmask 7168
      %397 = vst.msk [vmem:[%s224] sm:$0xff] %vm396, %v392
      %398 = vst.msk [vmem:[%s224 + $0x8] sm:$0xff] %vm396, %v393
      %399 = vst.msk [vmem:[%s224 + $0x10] sm:$0xff] %vm396, %v394
      %400 = vst.msk [vmem:[%s224 + $0x18] sm:$0xff] %vm396, %v395
      %p401 = scmp.lt.s32.totalorder %s16, 1
      %s402 = scalar_select %p401, %s16, 1
      %s403 = smul.addr %s402, 4
      %s404 = smul.addr %s403, 8
      %s405 = scalar_lea.vmem %s5, %s404
      // Predicated region
      $region41: #{nested_unet.52} parent=39 // pred_check
        %p406 = pneg %p144
      $region42: #{nested_unet.52} parent=39 // pred_check_branch
        %408 = sbr.rel (%p406) target = $region44
      $region43: #{nested_unet.52} parent=39 // pred_region
        _
      $region44: #{nested_unet.52} parent=39 // pred_fallthru
        _
    $region40: #{nested_unet.52} parent=5 // pred_fallthru
      _
    %p409 = scmp.le.s32.totalorder 2, %s11
    // Predicated region
    $region45: #{nested_unet.52} parent=5 // pred_check
      %p410 = pneg %p409
    $region46: #{nested_unet.52} parent=5 // pred_check_branch
      %412 = sbr.rel (%p410) target = $region48
    $region47: #{nested_unet.52} parent=5 // pred_region
      %s413 = ssub.s32 %s11, 2
      // Predicated region
      $region49: #{nested_unet.52} parent=47 // pred_check
        %p414 = pneg %p150
      $region50: #{nested_unet.52} parent=47 // pred_check_branch
        %416 = sbr.rel (%p414) target = $region52
      $region51: #{nested_unet.52} parent=47 // pred_region
        %p417 = scmp.lt.s32.totalorder %s17, 1
        %s418 = scalar_select %p417, %s17, 1
        %s419 = smul.addr %s418, 4
        %s420 = smul.addr %s419, 8
        %s421 = scalar_lea.vmem %s5, %s420
      $region52: #{nested_unet.52} parent=47 // pred_fallthru
        _
    $region48: #{nested_unet.52} parent=5 // pred_fallthru
      _
  $region6: #{nested_unet.52} parent=0 // loop_footer
    %s15 = sadd.s32 1, %s11
  $region7: #{nested_unet.52} parent=0 // loop_footer_branch
    %10 = sbr.rel target = $region3
  $region8: #{nested_unet.52} parent=0 // loop_exit
    _

// kernel: nested_unet.61
$region0: #{nested_unet.61}
  #allocation0 [shape = 'u32[]', space=smem, size = 0x4, offset = 0x4, fixed_abs, tag = 'smem constant byte address 0x4 - core index']
  #allocation1 [shape = 'u32[72,128]{1,0:T(1,128)}', space=vmem, size = 0x9000, scoped, tag = 'internal scratch']
  %s0 = inlined_call_operand.vmem [shape: f32[2,8,256], index: 0, kind: input, shape index: {}]
  %s1 = inlined_call_operand.vmem [shape: f32[2,8], index: 1, kind: input, shape index: {}]
  %s2 = inlined_call_operand.vmem [shape: f32[2], index: 2, kind: input, shape index: {}]
  %s3 = inlined_call_operand.vmem [shape: f32[2,2,256], index: 3, kind: output, shape index: {}]
  %s4 = sld [smem:[#allocation0]]
  $region53: #{nested_unet.61} parent=0
    _
  %s6 = ssub.s32 1, %s4
  %s7 = scalar_select 0, %s6, %s4
  $region1: #{nested_unet.61} parent=0
    #allocation2 [shape = 'u8[1024]{0}', space=smem, size = 0x400, scoped, tag = 'input window, operand 1, single buffered']
    #allocation3 [shape = 's32[2]{0}', space=sflag, size = 0x8, scoped, tag = 'scoped memory for nested_unet.61']
    #allocation4 [shape = 'u8[512]{0}', space=smem, size = 0x200, scoped, tag = 'input window, operand 2, single buffered']
    #allocation5 [shape = 's32[1]{0}', space=sflag, size = 0x4, scoped, tag = 'scoped memory for nested_unet.61']
    %8 = vsyncpa [#allocation3], 0
    %9 = vsyncpa [#allocation5], 0
    loop: start=0, step=1, limit=4
    $region2: #{nested_unet.61} parent=1 // loop_pre_header
      _
    $region3: #{nested_unet.61} parent=1 // loop_header
      %s11 = sphi 0, %s15
      %p12 = scmp.ge.s32.totalorder %s11, 4
      %s21 = sphi 0, %s23
      %s24 = sphi 0, %s21
      %s25 = sphi 0, %s24
      %s41 = sphi 0, %s25
      %s45 = sphi 0, %s45
      %s47 = sphi 0, %s45
      %s48 = sphi 0, %s47
      %s62 = sphi 0, %s48
      %s66 = sphi 0, %s66
      %s68 = sphi 0, %s66
      %s69 = sphi 0, %s68
      %s83 = sphi 0, %s69
      %s89 = sphi 0, %s91
      %s92 = sphi 0, %s89
      %s93 = sphi 0, %s92
      %s109 = sphi 0, %s93
    $region4: #{nested_unet.61} parent=1 // loop_header_branch
      %14 = sbr.rel (%p12) target = $region8
    $region5: #{nested_unet.61} parent=1 // loop_body
      %s16 = ssub.s32 %s11, 1
      %s17 = ssub.s32 %s11, 2
      %s18 = sadd.s32 %s11, 1
      %s19 = ssub.s32 %s11, %s18
      %p20 = scmp.eq.s32.totalorder %s19, 0
      %s22 = sadd.s32 %s21, 1
      %s23 = scalar_select %p20, %s21, %s22
      %p26 = pneg %p20
      %p27 = scmp.eq.s32.totalorder %s11, 1
      %p28 = por %p26, %p27
      %p29 = scmp.ne.s32.totalorder %s21, %s24
      %p30 = scmp.eq.s32.totalorder %s11, 0
      %p31 = por %p29, %p30
      %p32 = scmp.ne.s32.totalorder %s21, %s24
      %p33 = scmp.eq.s32.totalorder %s16, 1
      %p34 = por %p32, %p33
      %p35 = scmp.ne.s32.totalorder %s24, %s25
      %p36 = scmp.eq.s32.totalorder %s16, 0
      %p37 = por %p35, %p36
      %p38 = scmp.ne.s32.totalorder %s24, %s25
      %p39 = scmp.eq.s32.totalorder %s17, 1
      %p40 = por %p38, %p39
      %p42 = scmp.ne.s32.totalorder %s25, %s41
      %p43 = scmp.eq.s32.totalorder %s17, 0
      %p44 = por %p42, %p43
      %s46 = sadd.s32 %s45, 1
      %p49 = scmp.eq.s32.totalorder %s11, 1
      %p50 = scmp.ne.s32.totalorder %s45, %s47
      %p51 = scmp.eq.s32.totalorder %s11, 0
      %p52 = por %p50, %p51
      %p53 = scmp.ne.s32.totalorder %s45, %s47
      %p54 = scmp.eq.s32.totalorder %s16, 1
      %p55 = por %p53, %p54
      %p56 = scmp.ne.s32.totalorder %s47, %s48
      %p57 = scmp.eq.s32.totalorder %s16, 0
      %p58 = por %p56, %p57
      %p59 = scmp.ne.s32.totalorder %s47, %s48
      %p60 = scmp.eq.s32.totalorder %s17, 1
      %p61 = por %p59, %p60
      %p63 = scmp.ne.s32.totalorder %s48, %s62
      %p64 = scmp.eq.s32.totalorder %s17, 0
      %p65 = por %p63, %p64
      %s67 = sadd.s32 %s66, 1
      %p70 = scmp.eq.s32.totalorder %s11, 1
      %p71 = scmp.ne.s32.totalorder %s66, %s68
      %p72 = scmp.eq.s32.totalorder %s11, 0
      %p73 = por %p71, %p72
      %p74 = scmp.ne.s32.totalorder %s66, %s68
      %p75 = scmp.eq.s32.totalorder %s16, 1
      %p76 = por %p74, %p75
      %p77 = scmp.ne.s32.totalorder %s68, %s69
      %p78 = scmp.eq.s32.totalorder %s16, 0
      %p79 = por %p77, %p78
      %p80 = scmp.ne.s32.totalorder %s68, %s69
      %p81 = scmp.eq.s32.totalorder %s17, 1
      %p82 = por %p80, %p81
      %p84 = scmp.ne.s32.totalorder %s69, %s83
      %p85 = scmp.eq.s32.totalorder %s17, 0
      %p86 = por %p84, %p85
      %s87 = ssub.s32 %s11, %s18
      %p88 = scmp.eq.s32.totalorder %s87, 0
      %s90 = sadd.s32 %s89, 1
      %s91 = scalar_select %p88, %s89, %s90
      %p94 = pneg %p88
      %p95 = scmp.eq.s32.totalorder %s11, 1
      %p96 = por %p94, %p95
      %p97 = scmp.ne.s32.totalorder %s89, %s92
      %p98 = scmp.eq.s32.totalorder %s11, 0
      %p99 = por %p97, %p98
      %p100 = scmp.ne.s32.totalorder %s89, %s92
      %p101 = scmp.eq.s32.totalorder %s16, 1
      %p102 = por %p100, %p101
      %p103 = scmp.ne.s32.totalorder %s92, %s93
      %p104 = scmp.eq.s32.totalorder %s16, 0
      %p105 = por %p103, %p104
      %p106 = scmp.ne.s32.totalorder %s92, %s93
      %p107 = scmp.eq.s32.totalorder %s17, 1
      %p108 = por %p106, %p107
      %p110 = scmp.ne.s32.totalorder %s93, %s109
      %p111 = scmp.eq.s32.totalorder %s17, 0
      %p112 = por %p110, %p111
      %p113 = scmp.le.s32.totalorder 1, %s11
      %p114 = scmp.lt.s32.totalorder %s11, 3
      %p115 = pnand %p113, %p114
      %p116 = pneg %p115
      // Predicated region
      $region9: #{nested_unet.61} parent=5 // pred_check
        _
      $region10: #{nested_unet.61} parent=5 // pred_check_branch
        %118 = sbr.rel (%p115) target = $region12
      $region11: #{nested_unet.61} parent=5 // pred_region
        %s119 = ssub.s32 %s11, 1
        // Predicated region
        $region13: #{nested_unet.61} parent=11 // pred_check
          %p120 = pneg %p58
        $region14: #{nested_unet.61} parent=11 // pred_check_branch
          %122 = sbr.rel (%p120) target = $region16
        $region15: #{nested_unet.61} parent=11 // pred_region
          %124 = vsyncadd [#allocation3], 0
          %s126 = sshll.u32 %s1, 4
          %s127 = int_to_ptr.vmem [resolvable:$true] %s126
          %129 = dma.vmem_to_smem %s127, 32, [#allocation2], [#allocation3]
        $region16: #{nested_unet.61} parent=11 // pred_fallthru
          _
        // Predicated region
        $region17: #{nested_unet.61} parent=11 // pred_check
          %p130 = pneg %p79
        $region18: #{nested_unet.61} parent=11 // pred_check_branch
          %132 = sbr.rel (%p130) target = $region20
        $region19: #{nested_unet.61} parent=11 // pred_region
          %134 = vsyncadd [#allocation5], 0
          %s136 = sshll.u32 %s2, 4
          %s137 = int_to_ptr.vmem [resolvable:$true] %s136
          %139 = dma.vmem_to_smem %s137, 16, [#allocation4], [#allocation5]
        $region20: #{nested_unet.61} parent=11 // pred_fallthru
          _
      $region12: #{nested_unet.61} parent=5 // pred_fallthru
        _
      %p140 = scmp.lt.s32.totalorder %s11, 2
      // Predicated region
      $region21: #{nested_unet.61} parent=5 // pred_check
        %p141 = pneg %p140
      $region22: #{nested_unet.61} parent=5 // pred_check_branch
        %143 = sbr.rel (%p141) target = $region24
      $region23: #{nested_unet.61} parent=5 // pred_region
        // Predicated region
        $region25: #{nested_unet.61} parent=23 // pred_check
          %p144 = pneg %p31
        $region26: #{nested_unet.61} parent=23 // pred_check_branch
          %146 = sbr.rel (%p144) target = $region28
        $region27: #{nested_unet.61} parent=23 // pred_region
          %p147 = scmp.lt.s32.totalorder %s11, 1
          %s148 = scalar_select %p147, %s11, 1
          %s149 = smul.addr %s148, 2
          %s150 = smul.addr %s149, 8
          %s151 = scalar_lea.vmem %s0, %s150
        $region28: #{nested_unet.61} parent=23 // pred_fallthru
          _
      $region24: #{nested_unet.61} parent=5 // pred_fallthru
        _
      %p152 = scmp.le.s32.totalorder 1, %s11
      %p153 = scmp.lt.s32.totalorder %s11, 3
      %p154 = pnand %p152, %p153
      %p155 = pneg %p154
      // Predicated region
      $region29: #{nested_unet.61} parent=5 // pred_check
        _
      $region30: #{nested_unet.61} parent=5 // pred_check_branch
        %157 = sbr.rel (%p154) target = $region32
      $region31: #{nested_unet.61} parent=5 // pred_region
        %s158 = ssub.s32 %s11, 1
        // Predicated region
        $region33: #{nested_unet.61} parent=31 // pred_check
          %p159 = pneg %p58
        $region34: #{nested_unet.61} parent=31 // pred_check_branch
          %161 = sbr.rel (%p159) target = $region36
        $region35: #{nested_unet.61} parent=31 // pred_region
          %163 = dma.done [#allocation3], 32
        $region36: #{nested_unet.61} parent=31 // pred_fallthru
          _
        // Predicated region
        $region37: #{nested_unet.61} parent=31 // pred_check
          %p164 = pneg %p79
        $region38: #{nested_unet.61} parent=31 // pred_check_branch
          %166 = sbr.rel (%p164) target = $region40
        $region39: #{nested_unet.61} parent=31 // pred_region
          %168 = dma.done [#allocation5], 16
        $region40: #{nested_unet.61} parent=31 // pred_fallthru
          _
        %169 = sfence
        %p170 = scmp.lt.s32.totalorder %s16, 1
        %s171 = scalar_select %p170, %s16, 1
        %s172 = smul.addr %s171, 2
        %s173 = smul.addr %s172, 8
        %s174 = scalar_lea.vmem %s0, %s173
        %p175 = pneg %p37
        %p176 = pneg %p34
        %p177 = pneg %p58
        %p178 = pneg %p55
        %p179 = pneg %p79
        %p180 = pneg %p76
        %p181 = pneg %p105
        %p182 = pneg %p102
        %p183 = scmp.lt.s32.totalorder %s16, 1
        %s184 = scalar_select %p183, %s16, 1
        %s185 = smul.addr %s184, 2
        %s186 = smul.addr %s185, 2
        %s187 = scalar_lea.vmem %s3, %s186
        %p188 = scmp.lt.s32.totalorder %s16, 1
        %s189 = scalar_select %p188, %s16, 1
        %s190 = smul.addr %s189, 2
        %s191 = smul.addr %s190, 8
        %s192 = scalar_lea.vmem %s0, %s191
        %p193 = scmp.lt.s32.totalorder %s16, 1
        %s194 = scalar_select %p193, %s16, 1
        %s195 = smul.addr %s194, 2
        %s196 = smul.addr %s195, 2
        %s197 = scalar_lea.vmem %s3, %s196
        %v198 = vld [vmem:[%s192] sm:$0xff]
        %v199 = vld [vmem:[%s192 + $0x8] sm:$0xff]
        %s200 = sld [smem:[#allocation2]]
        %v201 = vstv %s200
        %v202 = vmul.f32 %v201, %v198
        %v203 = vmul.f32 %v201, %v199
        %v204 = vadd.f32 %v202, 0.0
        %v205 = vadd.f32 %v203, 0.0
        %s206 = sld [smem:[#allocation2 + $0x1]]
        %v207 = vstv %s206
        %v208 = vmul.f32 %v207, %v198
        %v209 = vmul.f32 %v207, %v199
        %v212 = vrot.slane %v208, 1
        %v213 = vrot.slane %v209, 1
        %v216 = vadd.f32 %v204, %v212
        %v217 = vadd.f32 %v205, %v213
        %s218 = sld [smem:[#allocation2 + $0x2]]
        %v219 = vstv %s218
        %v220 = vmul.f32 %v219, %v198
        %v221 = vmul.f32 %v219, %v199
        %v224 = vrot.slane %v220, 2
        %v225 = vrot.slane %v221, 2
        %v228 = vadd.f32 %v216, %v224
        %v229 = vadd.f32 %v217, %v225
        %s230 = sld [smem:[#allocation2 + $0x3]]
        %v231 = vstv %s230
        %v232 = vmul.f32 %v231, %v198
        %v233 = vmul.f32 %v231, %v199
        %v236 = vrot.slane %v232, 3
        %v237 = vrot.slane %v233, 3
        %v240 = vadd.f32 %v228, %v236
        %v241 = vadd.f32 %v229, %v237
        %s242 = sld [smem:[#allocation2 + $0x4]]
        %v243 = vstv %s242
        %v244 = vmul.f32 %v243, %v198
        %v245 = vmul.f32 %v243, %v199
        %v248 = vrot.slane %v244, 4
        %v249 = vrot.slane %v245, 4
        %v252 = vadd.f32 %v240, %v248
        %v253 = vadd.f32 %v241, %v249
        %s254 = sld [smem:[#allocation2 + $0x5]]
        %v255 = vstv %s254
        %v256 = vmul.f32 %v255, %v198
        %v257 = vmul.f32 %v255, %v199
        %v260 = vrot.slane %v256, 5
        %v261 = vrot.slane %v257, 5
        %v264 = vadd.f32 %v252, %v260
        %v265 = vadd.f32 %v253, %v261
        %s266 = sld [smem:[#allocation2 + $0x6]]
        %v267 = vstv %s266
        %v268 = vmul.f32 %v267, %v198
        %v269 = vmul.f32 %v267, %v199
        %v272 = vrot.slane %v268, 6
        %v273 = vrot.slane %v269, 6
        %v276 = vadd.f32 %v264, %v272
        %v277 = vadd.f32 %v265, %v273
        %s278 = sld [smem:[#allocation2 + $0x7]]
        %v279 = vstv %s278
        %v280 = vmul.f32 %v279, %v198
        %v281 = vmul.f32 %v279, %v199
        %v284 = vrot.slane %v280, 7
        %v285 = vrot.slane %v281, 7
        %v288 = vadd.f32 %v276, %v284
        %v289 = vadd.f32 %v277, %v285
        %s290 = sld [smem:[#allocation4]]
        %v291 = vstv %s290
        %v292 = vadd.f32 %v288, %v291
        %v293 = vadd.f32 %v289, %v291
        %s294 = sld [smem:[#allocation2 + $0x80]]
        %v295 = vstv %s294
        %v296 = vmul.f32 %v295, %v198
        %v297 = vmul.f32 %v295, %v199
        %v298 = vadd.f32 %v296, 0.0
        %v299 = vadd.f32 %v297, 0.0
        %s300 = sld [smem:[#allocation2 + $0x81]]
        %v301 = vstv %s300
        %v302 = vmul.f32 %v301, %v198
        %v303 = vmul.f32 %v301, %v199
        %v306 = vrot.slane %v302, 1
        %v307 = vrot.slane %v303, 1
        %v310 = vadd.f32 %v298, %v306
        %v311 = vadd.f32 %v299, %v307
        %s312 = sld [smem:[#allocation2 + $0x82]]
        %v313 = vstv %s312
        %v314 = vmul.f32 %v313, %v198
        %v315 = vmul.f32 %v313, %v199
        %v318 = vrot.slane %v314, 2
        %v319 = vrot.slane %v315, 2
        %v322 = vadd.f32 %v310, %v318
        %v323 = vadd.f32 %v311, %v319
        %s324 = sld [smem:[#allocation2 + $0x83]]
        %v325 = vstv %s324
        %v326 = vmul.f32 %v325, %v198
        %v327 = vmul.f32 %v325, %v199
        %v330 = vrot.slane %v326, 3
        %v331 = vrot.slane %v327, 3
        %v334 = vadd.f32 %v322, %v330
        %v335 = vadd.f32 %v323, %v331
        %s336 = sld [smem:[#allocation2 + $0x84]]
        %v337 = vstv %s336
        %v338 = vmul.f32 %v337, %v198
        %v339 = vmul.f32 %v337, %v199
        %v342 = vrot.slane %v338, 4
        %v343 = vrot.slane %v339, 4
        %v346 = vadd.f32 %v334, %v342
        %v347 = vadd.f32 %v335, %v343
        %s348 = sld [smem:[#allocation2 + $0x85]]
        %v349 = vstv %s348
        %v350 = vmul.f32 %v349, %v198
        %v351 = vmul.f32 %v349, %v199
        %v354 = vrot.slane %v350, 5
        %v355 = vrot.slane %v351, 5
        %v358 = vadd.f32 %v346, %v354
        %v359 = vadd.f32 %v347, %v355
        %s360 = sld [smem:[#allocation2 + $0x86]]
        %v361 = vstv %s360
        %v362 = vmul.f32 %v361, %v198
        %v363 = vmul.f32 %v361, %v199
        %v366 = vrot.slane %v362, 6
        %v367 = vrot.slane %v363, 6
        %v370 = vadd.f32 %v358, %v366
        %v371 = vadd.f32 %v359, %v367
        %s372 = sld [smem:[#allocation2 + $0x87]]
        %v373 = vstv %s372
        %v374 = vmul.f32 %v373, %v198
        %v375 = vmul.f32 %v373, %v199
        %v378 = vrot.slane %v374, 7
        %v379 = vrot.slane %v375, 7
        %v382 = vadd.f32 %v370, %v378
        %v383 = vadd.f32 %v371, %v379
        %s384 = sld [smem:[#allocation4 + $0x1]]
        %v385 = vstv %s384
        %v386 = vadd.f32 %v382, %v385
        %v387 = vadd.f32 %v383, %v385
        %v390 = vrot.slane %v386, 7
        %v391 = vrot.slane %v387, 7
        %vm394 = vcmask 1040384
        %v395 = vsel %vm394, %v292, %v390
        %v396 = vsel %vm394, %v293, %v391
        %v399 = vrot.slane %v396, 6
        %vm400 = vcmask 1041408
        %v401 = vsel %vm400, %v395, %v399
        %403 = vst [vmem:[%s197] sm:$0xf] %v401
        %p404 = scmp.lt.s32.totalorder %s16, 1
        %s405 = scalar_select %p404, %s16, 1
        %s406 = smul.addr %s405, 2
        %s407 = smul.addr %s406, 2
        %s408 = scalar_lea.vmem %s3, %s407
        // Predicated region
        $region41: #{nested_unet.61} parent=31 // pred_check
          %p409 = pneg %p102
        $region42: #{nested_unet.61} parent=31 // pred_check_branch
          %411 = sbr.rel (%p409) target = $region44
        $region43: #{nested_unet.61} parent=31 // pred_region
          _
        $region44: #{nested_unet.61} parent=31 // pred_fallthru
          _
      $region32: #{nested_unet.61} parent=5 // pred_fallthru
        _
      %p412 = scmp.le.s32.totalorder 2, %s11
      // Predicated region
      $region45: #{nested_unet.61} parent=5 // pred_check
        %p413 = pneg %p412
      $region46: #{nested_unet.61} parent=5 // pred_check_branch
        %415 = sbr.rel (%p413) target = $region48
      $region47: #{nested_unet.61} parent=5 // pred_region
        %s416 = ssub.s32 %s11, 2
        // Predicated region
        $region49: #{nested_unet.61} parent=47 // pred_check
          %p417 = pneg %p108
        $region50: #{nested_unet.61} parent=47 // pred_check_branch
          %419 = sbr.rel (%p417) target = $region52
        $region51: #{nested_unet.61} parent=47 // pred_region
          %p420 = scmp.lt.s32.totalorder %s17, 1
          %s421 = scalar_select %p420, %s17, 1
          %s422 = smul.addr %s421, 2
          %s423 = smul.addr %s422, 2
          %s424 = scalar_lea.vmem %s3, %s423
        $region52: #{nested_unet.61} parent=47 // pred_fallthru
          _
      $region48: #{nested_unet.61} parent=5 // pred_fallthru
        _
    $region6: #{nested_unet.61} parent=1 // loop_footer
      %s15 = sadd.s32 1, %s11
    $region7: #{nested_unet.61} parent=1 // loop_footer_branch
      %10 = sbr.rel target = $region3
    $region8: #{nested_unet.61} parent=1 // loop_exit
      _
    %425 = vsyncpa [#allocation3], 1
    %s426 = scalar_lea.sflag [#allocation3], 1
    %427 = vsyncpa %s426, 1
    %428 = vsyncpa [#allocation5], 1

</llo_original>
